<compile_context>
chip_gen: v6e
topology: v6e:2x2x1
jax: 0.10.0
libtpu: 0.0.40
codegen_flags: <defaults>
</compile_context>

<pallas_src>
import functools

import jax
import jax.numpy as jnp
from jax.experimental import pallas as pl
from jax.experimental.pallas import tpu as pltpu

# ---------------------------------------------------------------------------
# Model hyper-parameters (from the PyTorch module)
# ---------------------------------------------------------------------------
CVT_CLASS_COUNT = 2
CVT_EMBEDDING_DIM = 32
CVT_HEAD_COUNT = 8
CVT_HIDDEN_DIM = 128
CVT_INPUT_CHANNELS = 3
CVT_TRANSFORMER_BLOCK_COUNT = 4
CONV_KERNEL = 7
CONV_STRIDE = 4
CONV_PAD = 2
LN_EPS = 1e-5
BN_EPS = 1e-5
CONV_K_PAD = 256          # C*K*K = 147 (+1 ones-column for the folded bias) padded to 256 lanes


# ---------------------------------------------------------------------------
# In-kernel math helpers (pure jnp, used inside the Pallas kernel)
# ---------------------------------------------------------------------------
def _erf_f32(x):
    # Rational float32 erf approximation (Eigen / XLA generic_fast_erf_float).
    x = jnp.clip(x, -4.0, 4.0)
    x2 = x * x
    p = x2 * (-2.72614225801306e-10) + 2.77068142495902e-08
    p = x2 * p + (-2.10102402082508e-06)
    p = x2 * p + (-5.69250639462346e-05)
    p = x2 * p + (-7.34990630326855e-04)
    p = x2 * p + (-2.95459980854025e-03)
    p = x2 * p + (-1.60960333262415e-02)
    p = x * p
    q = x2 * (-1.45660718464996e-05) + (-2.13374055278905e-04)
    q = x2 * q + (-1.68282697438203e-03)
    q = x2 * q + (-7.37332916720468e-03)
    q = x2 * q + (-1.42647390514189e-02)
    return p / q


def _gelu_exact(x):
    return 0.5 * x * (1.0 + _erf_f32(x * 0.7071067811865476))


def _layernorm(x, gamma, beta, eps=LN_EPS):
    mu = jnp.mean(x, axis=-1, keepdims=True)
    var = jnp.mean(jnp.square(x - mu), axis=-1, keepdims=True)
    return (x - mu) * jax.lax.rsqrt(var + eps) * gamma + beta


# ---------------------------------------------------------------------------
# The fused Pallas kernel: conv-embed matmul + 4 transformer blocks + head
# ---------------------------------------------------------------------------
def cvt_fused_kernel(patches_ref, convw_ref, wa_ref, wb_ref, vec_ref, head_ref, o_ref,
                     *, batch, seq, seq_pad, nblk):
    f32 = jnp.float32
    E, NH = CVT_EMBEDDING_DIM, CVT_HEAD_COUNT
    MLP, NCLS = CVT_HIDDEN_DIM, CVT_CLASS_COUNT
    DH = E // NH
    B, S, Sp = batch, seq, seq_pad
    BS = B * Sp

    # ---- constant helper matrices built in-register (no HBM operands / DMAs) ----
    def fiota(shape, dim):
        return jax.lax.broadcasted_iota(jnp.int32, shape, dim).astype(f32)

    r = fiota((B * E, B * NH), 0)
    c = fiota((B * E, B * NH), 1)
    # block-diagonal head-sum matrix: g_red[b*E+e, b*NH+h] = 1 iff e//DH == h
    g_red = jnp.where((r >= c * DH) & (r < c * DH + DH), 1.0, 0.0)
    r = fiota((B * NH, B * E), 0)
    c = fiota((B * NH, B * E), 1)
    # block-diagonal head-broadcast matrix (transpose of g_red)
    g_bc = jnp.where((c >= r * DH) & (c < r * DH + DH), 1.0, 0.0)
    r = fiota((B, BS), 0)
    c = fiota((B, BS), 1)
    # masked token-mean pooling over the S *real* tokens of each image
    pool = jnp.where((c >= r * Sp) & (c < r * Sp + S), 1.0 / S, 0.0)

    # ---- conv embedding: im2col patches @ (BN + bias folded) conv weights ----
    x = jnp.dot(patches_ref[...], convw_ref[...], preferred_element_type=f32)   # (BS, E)

    # ---- transformer blocks (statically unrolled) ----
    for i in range(nblk):
        wa = wa_ref[i]          # (2E, 128): rows [0:E] = Wqkv (96/128 lanes), [E:2E] = W1
        wb = wb_ref[i]          # (MLP+E, E): rows [0:MLP] = W2, [MLP:MLP+E] = Wo
        vec = vec_ref[i]        # (8, 128): packed biases / LN vectors

        # One fused QKV matmul (attention scale pre-folded into the q columns).
        qkv = jnp.dot(x, wa[0:E, :], preferred_element_type=f32) + vec[0:1, :]
        q = qkv[:, 0:E]
        k = qkv[:, E:2 * E]
        v = qkv[:, 2 * E:3 * E]

        # Attention mixes across the image-batch axis (seq-first MHA quirk), per
        # (spatial token, head).  Fully fused over (b1, b2): lay k/v out as (Sp, B*E)
        # slabs, tile over the query batch, and use ONE score matmul + ONE head-broadcast
        # matmul against the block-diagonal 0/1 constants on the MXU.
        k_slab = jnp.concatenate([k[b * Sp:(b + 1) * Sp, :] for b in range(B)], axis=1)
        v_slab = jnp.concatenate([v[b * Sp:(b + 1) * Sp, :] for b in range(B)], axis=1)
        k_t = jnp.concatenate([k_slab] * B, axis=0)            # (BS, B*E)
        v_t = jnp.concatenate([v_slab] * B, axis=0)            # (BS, B*E)
        q_t = jnp.concatenate([q] * B, axis=1)                 # (BS, B*E)

        sc = jnp.dot(q_t * k_t, g_red, preferred_element_type=f32)   # (BS, B*NH)
        parts = [sc[:, b * NH:(b + 1) * NH] for b in range(B)]
        m = parts[0]
        for p in parts[1:]:
            m = jnp.maximum(m, p)
        es = [jnp.exp(p - m) for p in parts]
        den = es[0]
        for e2 in es[1:]:
            den = den + e2
        inv = pl.reciprocal(den, approx=True)                   # EUP vrcp, ~2^-14 rel err
        attn = jnp.concatenate([e2 * inv for e2 in es], axis=1)  # (BS, B*NH)

        av = jnp.dot(attn, g_bc, preferred_element_type=f32) * v_t   # (BS, B*E)
        a = av[:, 0:E]
        for b in range(1, B):
            a = a + av[:, b * E:(b + 1) * E]                     # (BS, E)

        # out-proj + residual + LN1, then MLP (lane-dense 128 hidden) + residual + LN2
        y = jnp.dot(a, wb[MLP:MLP + E, :], preferred_element_type=f32) + vec[2:3, 0:E]
        x = _layernorm(x + y, vec[3:4, 0:E], vec[4:5, 0:E])
        h = _gelu_exact(jnp.dot(x, wa[E:2 * E, :], preferred_element_type=f32) + vec[1:2, :])
        y2 = jnp.dot(h, wb[0:MLP, :], preferred_element_type=f32) + vec[7:8, 0:E]
        x = _layernorm(x + y2, vec[5:6, 0:E], vec[6:7, 0:E])

    # ---- classification head: token mean (pooling matmul) + LN + Linear ----
    hd = head_ref[...]                                           # (E+8, E)
    xm = jnp.dot(pool, x, preferred_element_type=f32)            # (B, E)
    xm = _layernorm(xm, hd[E + 1:E + 2, :], hd[E + 2:E + 3, :])
    o_ref[...] = (jnp.dot(xm, hd[0:E, 0:NCLS], preferred_element_type=f32)
                  + hd[E:E + 1, 0:NCLS])


# ---------------------------------------------------------------------------
# Parameter initialization (deterministic, synthetic, PyTorch layouts)
# ---------------------------------------------------------------------------
def init_params(key):
    E, NH, MLP, NCLS = CVT_EMBEDDING_DIM, CVT_HEAD_COUNT, CVT_HIDDEN_DIM, CVT_CLASS_COUNT
    C, K, NBLK = CVT_INPUT_CHANNELS, CONV_KERNEL, CVT_TRANSFORMER_BLOCK_COUNT

    keys = iter(jax.random.split(key, 128))

    def nrm(shape, scale=0.05):
        return scale * jax.random.normal(next(keys), shape, dtype=jnp.float32)

    params = {
        "conv_w": nrm((E, C, K, K)),          # Conv2d weight (PyTorch OIHW)
        "conv_b": nrm((E,)),
        "bn_gamma": 1.0 + nrm((E,)),
        "bn_beta": nrm((E,)),
        "bn_mean": nrm((E,)),
        "bn_var": 0.5 + jax.random.uniform(next(keys), (E,), dtype=jnp.float32),
        "blocks": [],
        "head_ln_g": 1.0 + nrm((E,)),
        "head_ln_b": nrm((E,)),
        "head_fc_w": nrm((NCLS, E)),          # PyTorch Linear (out, in)
        "head_fc_b": nrm((NCLS,)),
    }
    for _ in range(NBLK):
        params["blocks"].append(
            {
                "in_proj_w": nrm((3 * E, E)),
                "in_proj_b": nrm((3 * E,)),
                "out_proj_w": nrm((E, E)),
                "out_proj_b": nrm((E,)),
                "ln1_g": 1.0 + nrm((E,)),
                "ln1_b": nrm((E,)),
                "fc1_w": nrm((MLP, E)),
                "fc1_b": nrm((MLP,)),
                "fc2_w": nrm((E, MLP)),
                "fc2_b": nrm((E,)),
                "ln2_g": 1.0 + nrm((E,)),
                "ln2_b": nrm((E,)),
            }
        )
    return params


# ---------------------------------------------------------------------------
# One-time parameter prep: transpose / pack / fold so the kernel sees 6 matmul-ready
# slabs (no per-forward XLA layout ops, few DMA descriptors).
# ---------------------------------------------------------------------------
def prepare_params(params):
    E, NH, MLP, NCLS = CVT_EMBEDDING_DIM, CVT_HEAD_COUNT, CVT_HIDDEN_DIM, CVT_CLASS_COUNT
    DH = E // NH
    CKK = CVT_INPUT_CHANNELS * CONV_KERNEL * CONV_KERNEL
    attn_scale = 1.0 / float(DH) ** 0.5

    # Fold BatchNorm (eval) into the conv weights; the (conv+BN) bias is folded into the
    # matmul via the ones-column at patch column CKK.  Padded rows stay exactly zero.
    bn_scale = params["bn_gamma"] / jnp.sqrt(params["bn_var"] + BN_EPS)
    bn_shift = params["bn_beta"] - params["bn_mean"] * bn_scale
    wc = params["conv_w"].reshape(E, CKK).T * bn_scale[None, :]          # (CKK, E)
    cb = params["conv_b"] * bn_scale + bn_shift                          # (E,)
    conv_w = (jnp.zeros((CONV_K_PAD, E), jnp.float32)
              .at[:CKK].set(wc)
              .at[CKK].set(cb))

    wa_list, wb_list, vec_list = [], [], []
    for blk in params["blocks"]:
        # Fused QKV weight (E, 3E) -> padded to 128 lanes; fold 1/sqrt(dh) into q columns.
        wqkv = blk["in_proj_w"].T
        wqkv = wqkv.at[:, :E].multiply(attn_scale)
        wqkv = jnp.pad(wqkv, ((0, 0), (0, 128 - 3 * E)))                 # (E, 128)
        bqkv = blk["in_proj_b"].at[:E].multiply(attn_scale)              # (3E,)

        wa_list.append(jnp.concatenate([wqkv, blk["fc1_w"].T], axis=0))              # (2E, 128)
        wb_list.append(jnp.concatenate([blk["fc2_w"].T, blk["out_proj_w"].T], axis=0))  # (MLP+E, E)

        vec = jnp.zeros((8, 128), jnp.float32)
        vec = vec.at[0, :3 * E].set(bqkv)          # QKV bias
        vec = vec.at[1, :MLP].set(blk["fc1_b"])    # MLP hidden bias
        vec = vec.at[2, :E].set(blk["out_proj_b"])
        vec = vec.at[3, :E].set(blk["ln1_g"])
        vec = vec.at[4, :E].set(blk["ln1_b"])
        vec = vec.at[5, :E].set(blk["ln2_g"])
        vec = vec.at[6, :E].set(blk["ln2_b"])
        vec = vec.at[7, :E].set(blk["fc2_b"])
        vec_list.append(vec)

    head = jnp.zeros((E + 8, E), jnp.float32)
    head = head.at[:E, :NCLS].set(params["head_fc_w"].T)   # matmul-ready (E, NCLS)
    head = head.at[E, :NCLS].set(params["head_fc_b"])
    head = head.at[E + 1, :].set(params["head_ln_g"])
    head = head.at[E + 2, :].set(params["head_ln_b"])

    return {
        "conv_w": conv_w,                       # (256, E)
        "wa": jnp.stack(wa_list, axis=0),       # (NBLK, 2E, 128)
        "wb": jnp.stack(wb_list, axis=0),       # (NBLK, MLP+E, E)
        "vec": jnp.stack(vec_list, axis=0),     # (NBLK, 8, 128)
        "head": head,                           # (E+8, E)
    }


# ---------------------------------------------------------------------------
# Forward pass: im2col glue + ONE fused pallas_call (6 operands)
# ---------------------------------------------------------------------------
@jax.jit
def cvt_forward(x, prep):
    B, C, Hin, Win = x.shape
    K, ST, P = CONV_KERNEL, CONV_STRIDE, CONV_PAD
    NCLS = CVT_CLASS_COUNT
    NBLK = CVT_TRANSFORMER_BLOCK_COUNT
    CKK = C * K * K

    # im2col (indices are compile-time static; XLA fuses pad+gather+transpose).
    # TODO(synk): fold the im2col into the kernel with static slices on a VMEM copy of the
    # padded image to remove the last patches HBM round-trip.
    xp = jnp.pad(x, ((0, 0), (0, 0), (P, P), (P, P)))
    OH = (Hin + 2 * P - K) // ST + 1
    OW = (Win + 2 * P - K) // ST + 1
    ih = (jnp.arange(OH) * ST)[:, None] + jnp.arange(K)[None, :]
    iw = (jnp.arange(OW) * ST)[:, None] + jnp.arange(K)[None, :]
    patches = xp[:, :, ih[:, None, :, None], iw[None, :, None, :]]       # (B,C,OH,OW,K,K)
    patches = patches.transpose(0, 2, 3, 1, 4, 5).reshape(B, OH * OW, CKK)
    S = OH * OW
    Sp = -(-S // 8) * 8          # pad S to a sublane-tile multiple (keeps per-batch slices aligned)
    patches = jnp.pad(patches, ((0, 0), (0, Sp - S), (0, CONV_K_PAD - CKK)))
    patches = patches.at[:, :, CKK].set(1.0)     # ones-column: folds the conv+BN bias into the matmul
    patches = patches.reshape(B * Sp, CONV_K_PAD)
    # TODO(synk): optionally cast patches/conv_w to bfloat16 for the embed matmul (v5e MXU rate).

    kernel = functools.partial(cvt_fused_kernel, batch=B, seq=S, seq_pad=Sp, nblk=NBLK)
    # TODO(synk): for v7x dual-TC, shard over spatial tokens or heads (NOT the image batch --
    # attention mixes across it) once per-core work exceeds the ~0.35us grid-step overhead.
    # TODO(synk): for v6e/v7x, pack 4 tokens per 128-lane row (block-diagonal weight replicas,
    # segmented-sum LayerNorm) to raise VPU/MXU lane occupancy from 25% to 100%.
    return pl.pallas_call(
        kernel,
        out_shape=jax.ShapeDtypeStruct((B, NCLS), jnp.float32),
        in_specs=[pl.BlockSpec(memory_space=pltpu.MemorySpace.VMEM)] * 6,
        out_specs=pl.BlockSpec(memory_space=pltpu.MemorySpace.VMEM),
    )(patches, prep["conv_w"], prep["wa"], prep["wb"], prep["vec"], prep["head"])


# ---------------------------------------------------------------------------
# Main
# ---------------------------------------------------------------------------
if __name__ == "__main__":
    key = jax.random.PRNGKey(0)
    pkey, xkey = jax.random.split(key)
    params = init_params(pkey)
    prep = prepare_params(params)

    # Input: batch=2, channels=3, 16x16 image (NCHW, as in PyTorch).
    x = jax.random.normal(xkey, (2, CVT_INPUT_CHANNELS, 16, 16), dtype=jnp.float32)

    out = cvt_forward(x, prep)
    out = jax.block_until_ready(out)

    assert out.shape == (2, CVT_CLASS_COUNT), out.shape
    assert bool(jnp.all(jnp.isfinite(out)))
    print("KERNEL_OK")
</pallas_src>

<mosaic_0001>
module attributes {stable_mosaic.version = 11 : i64} {
  func.func @cvt_fused_kernel(%arg0: memref<32x256xf32, #tpu.memory_space<vmem>>, %arg1: memref<256x32xf32, #tpu.memory_space<vmem>>, %arg2: memref<4x64x128xf32, #tpu.memory_space<vmem>>, %arg3: memref<4x160x32xf32, #tpu.memory_space<vmem>>, %arg4: memref<4x8x128xf32, #tpu.memory_space<vmem>>, %arg5: memref<40x32xf32, #tpu.memory_space<vmem>>, %arg6: memref<2x2xf32, #tpu.memory_space<vmem>>) attributes {dimension_semantics = [], scalar_prefetch = 0 : i64, scratch_operands = 0 : i64, tpu.core_type = #tpu.core_type<tc>} {
    %0 = tpu.iota {dimensions = array<i32: 0>} : vector<64x16xi32>
    %1 = arith.sitofp %0 : vector<64x16xi32> to vector<64x16xf32>
    %2 = tpu.iota {dimensions = array<i32: 1>} : vector<64x16xi32>
    %3 = arith.sitofp %2 : vector<64x16xi32> to vector<64x16xf32>
    %cst = arith.constant 4.000000e+00 : f32
    %4 = vector.broadcast %cst : f32 to vector<64x16xf32>
    %5 = arith.mulf %3, %4 : vector<64x16xf32>
    %6 = arith.cmpf oge, %1, %5 : vector<64x16xf32>
    %cst_0 = arith.constant 4.000000e+00 : f32
    %7 = vector.broadcast %cst_0 : f32 to vector<64x16xf32>
    %8 = arith.mulf %3, %7 : vector<64x16xf32>
    %cst_1 = arith.constant 4.000000e+00 : f32
    %9 = vector.broadcast %cst_1 : f32 to vector<64x16xf32>
    %10 = arith.addf %8, %9 : vector<64x16xf32>
    %11 = arith.cmpf olt, %1, %10 : vector<64x16xf32>
    %12 = arith.andi %6, %11 : vector<64x16xi1>
    %cst_2 = arith.constant 1.000000e+00 : f32
    %cst_3 = arith.constant 0.000000e+00 : f32
    %13 = vector.broadcast %cst_2 : f32 to vector<64x16xf32>
    %14 = vector.broadcast %cst_3 : f32 to vector<64x16xf32>
    %15 = arith.select %12, %13, %14 : vector<64x16xi1>, vector<64x16xf32>
    %16 = tpu.iota {dimensions = array<i32: 0>} : vector<16x64xi32>
    %17 = arith.sitofp %16 : vector<16x64xi32> to vector<16x64xf32>
    %18 = tpu.iota {dimensions = array<i32: 1>} : vector<16x64xi32>
    %19 = arith.sitofp %18 : vector<16x64xi32> to vector<16x64xf32>
    %cst_4 = arith.constant 4.000000e+00 : f32
    %20 = vector.broadcast %cst_4 : f32 to vector<16x64xf32>
    %21 = arith.mulf %17, %20 : vector<16x64xf32>
    %22 = arith.cmpf oge, %19, %21 : vector<16x64xf32>
    %cst_5 = arith.constant 4.000000e+00 : f32
    %23 = vector.broadcast %cst_5 : f32 to vector<16x64xf32>
    %24 = arith.mulf %17, %23 : vector<16x64xf32>
    %cst_6 = arith.constant 4.000000e+00 : f32
    %25 = vector.broadcast %cst_6 : f32 to vector<16x64xf32>
    %26 = arith.addf %24, %25 : vector<16x64xf32>
    %27 = arith.cmpf olt, %19, %26 : vector<16x64xf32>
    %28 = arith.andi %22, %27 : vector<16x64xi1>
    %cst_7 = arith.constant 1.000000e+00 : f32
    %cst_8 = arith.constant 0.000000e+00 : f32
    %29 = vector.broadcast %cst_7 : f32 to vector<16x64xf32>
    %30 = vector.broadcast %cst_8 : f32 to vector<16x64xf32>
    %31 = arith.select %28, %29, %30 : vector<16x64xi1>, vector<16x64xf32>
    %32 = tpu.iota {dimensions = array<i32: 0>} : vector<2x32xi32>
    %33 = arith.sitofp %32 : vector<2x32xi32> to vector<2x32xf32>
    %34 = tpu.iota {dimensions = array<i32: 1>} : vector<2x32xi32>
    %35 = arith.sitofp %34 : vector<2x32xi32> to vector<2x32xf32>
    %cst_9 = arith.constant 1.600000e+01 : f32
    %36 = vector.broadcast %cst_9 : f32 to vector<2x32xf32>
    %37 = arith.mulf %33, %36 : vector<2x32xf32>
    %38 = arith.cmpf oge, %35, %37 : vector<2x32xf32>
    %cst_10 = arith.constant 1.600000e+01 : f32
    %39 = vector.broadcast %cst_10 : f32 to vector<2x32xf32>
    %40 = arith.mulf %33, %39 : vector<2x32xf32>
    %cst_11 = arith.constant 1.600000e+01 : f32
    %41 = vector.broadcast %cst_11 : f32 to vector<2x32xf32>
    %42 = arith.addf %40, %41 : vector<2x32xf32>
    %43 = arith.cmpf olt, %35, %42 : vector<2x32xf32>
    %44 = arith.andi %38, %43 : vector<2x32xi1>
    %cst_12 = arith.constant 6.250000e-02 : f32
    %cst_13 = arith.constant 0.000000e+00 : f32
    %45 = vector.broadcast %cst_12 : f32 to vector<2x32xf32>
    %46 = vector.broadcast %cst_13 : f32 to vector<2x32xf32>
    %47 = arith.select %44, %45, %46 : vector<2x32xi1>, vector<2x32xf32>
    %c0 = arith.constant 0 : index
    %c0_14 = arith.constant 0 : index
    %48 = vector.load %arg0[%c0, %c0_14] : memref<32x256xf32, #tpu.memory_space<vmem>>, vector<32x256xf32>
    %c0_15 = arith.constant 0 : index
    %c0_16 = arith.constant 0 : index
    %49 = vector.load %arg1[%c0_15, %c0_16] : memref<256x32xf32, #tpu.memory_space<vmem>>, vector<256x32xf32>
    %cst_17 = arith.constant dense<0.000000e+00> : vector<32x32xf32>
    %50 = tpu.matmul %48, %49, %cst_17 {dimension_numbers = #tpu.dot_dimension_numbers<[1], [0], [0], [1], [0, 0, 1, 1], [], []>} : vector<32x256xf32>, vector<256x32xf32>, vector<32x32xf32> -> vector<32x32xf32>
    %c0_18 = arith.constant 0 : index
    %c0_19 = arith.constant 0 : index
    %c0_20 = arith.constant 0 : index
    %51 = vector.load %arg2[%c0_18, %c0_19, %c0_20] : memref<4x64x128xf32, #tpu.memory_space<vmem>>, vector<1x64x128xf32>
    %52 = vector.shape_cast %51 : vector<1x64x128xf32> to vector<64x128xf32>
    %c0_21 = arith.constant 0 : index
    %c0_22 = arith.constant 0 : index
    %c0_23 = arith.constant 0 : index
    %53 = vector.load %arg3[%c0_21, %c0_22, %c0_23] : memref<4x160x32xf32, #tpu.memory_space<vmem>>, vector<1x160x32xf32>
    %54 = vector.shape_cast %53 : vector<1x160x32xf32> to vector<160x32xf32>
    %c0_24 = arith.constant 0 : index
    %c0_25 = arith.constant 0 : index
    %c0_26 = arith.constant 0 : index
    %55 = vector.load %arg4[%c0_24, %c0_25, %c0_26] : memref<4x8x128xf32, #tpu.memory_space<vmem>>, vector<1x8x128xf32>
    %56 = vector.shape_cast %55 : vector<1x8x128xf32> to vector<8x128xf32>
    %57 = vector.extract_strided_slice %52 {offsets = [0, 0], sizes = [32, 128], strides = [1, 1]} : vector<64x128xf32> to vector<32x128xf32>
    %cst_27 = arith.constant dense<0.000000e+00> : vector<32x128xf32>
    %58 = tpu.matmul %50, %57, %cst_27 {dimension_numbers = #tpu.dot_dimension_numbers<[1], [0], [0], [1], [0, 0, 1, 1], [], []>} : vector<32x32xf32>, vector<32x128xf32>, vector<32x128xf32> -> vector<32x128xf32>
    %59 = vector.extract_strided_slice %56 {offsets = [0, 0], sizes = [1, 128], strides = [1, 1]} : vector<8x128xf32> to vector<1x128xf32>
    %60 = vector.broadcast %59 : vector<1x128xf32> to vector<32x128xf32>
    %61 = arith.addf %58, %60 : vector<32x128xf32>
    %62 = vector.extract_strided_slice %61 {offsets = [0, 0], sizes = [32, 32], strides = [1, 1]} : vector<32x128xf32> to vector<32x32xf32>
    %63 = vector.extract_strided_slice %61 {offsets = [0, 32], sizes = [32, 32], strides = [1, 1]} : vector<32x128xf32> to vector<32x32xf32>
    %64 = vector.extract_strided_slice %61 {offsets = [0, 64], sizes = [32, 32], strides = [1, 1]} : vector<32x128xf32> to vector<32x32xf32>
    %65 = vector.extract_strided_slice %63 {offsets = [0, 0], sizes = [16, 32], strides = [1, 1]} : vector<32x32xf32> to vector<16x32xf32>
    %66 = vector.extract_strided_slice %63 {offsets = [16, 0], sizes = [16, 32], strides = [1, 1]} : vector<32x32xf32> to vector<16x32xf32>
    %67 = tpu.concatenate %65, %66 in 1 : vector<16x32xf32>, vector<16x32xf32> -> vector<16x64xf32>
    %68 = vector.extract_strided_slice %64 {offsets = [0, 0], sizes = [16, 32], strides = [1, 1]} : vector<32x32xf32> to vector<16x32xf32>
    %69 = vector.extract_strided_slice %64 {offsets = [16, 0], sizes = [16, 32], strides = [1, 1]} : vector<32x32xf32> to vector<16x32xf32>
    %70 = tpu.concatenate %68, %69 in 1 : vector<16x32xf32>, vector<16x32xf32> -> vector<16x64xf32>
    %71 = tpu.concatenate %67, %67 in 0 : vector<16x64xf32>, vector<16x64xf32> -> vector<32x64xf32>
    %72 = tpu.concatenate %70, %70 in 0 : vector<16x64xf32>, vector<16x64xf32> -> vector<32x64xf32>
    %73 = tpu.concatenate %62, %62 in 1 : vector<32x32xf32>, vector<32x32xf32> -> vector<32x64xf32>
    %74 = arith.mulf %73, %71 : vector<32x64xf32>
    %cst_28 = arith.constant dense<0.000000e+00> : vector<32x16xf32>
    %75 = tpu.matmul %74, %15, %cst_28 {dimension_numbers = #tpu.dot_dimension_numbers<[1], [0], [0], [1], [0, 0, 1, 1], [], []>} : vector<32x64xf32>, vector<64x16xf32>, vector<32x16xf32> -> vector<32x16xf32>
    %76 = vector.extract_strided_slice %75 {offsets = [0, 0], sizes = [32, 8], strides = [1, 1]} : vector<32x16xf32> to vector<32x8xf32>
    %77 = vector.extract_strided_slice %75 {offsets = [0, 8], sizes = [32, 8], strides = [1, 1]} : vector<32x16xf32> to vector<32x8xf32>
    %78 = arith.maximumf %76, %77 : vector<32x8xf32>
    %79 = arith.subf %76, %78 : vector<32x8xf32>
    %80 = math.exp %79 : vector<32x8xf32>
    %81 = arith.subf %77, %78 : vector<32x8xf32>
    %82 = math.exp %81 : vector<32x8xf32>
    %83 = arith.addf %80, %82 : vector<32x8xf32>
    %84 = tpu.reciprocal %83 {approx = true} : vector<32x8xf32> -> vector<32x8xf32>
    %85 = arith.mulf %80, %84 : vector<32x8xf32>
    %86 = arith.mulf %82, %84 : vector<32x8xf32>
    %87 = tpu.concatenate %85, %86 in 1 : vector<32x8xf32>, vector<32x8xf32> -> vector<32x16xf32>
    %cst_29 = arith.constant dense<0.000000e+00> : vector<32x64xf32>
    %88 = tpu.matmul %87, %31, %cst_29 {dimension_numbers = #tpu.dot_dimension_numbers<[1], [0], [0], [1], [0, 0, 1, 1], [], []>} : vector<32x16xf32>, vector<16x64xf32>, vector<32x64xf32> -> vector<32x64xf32>
    %89 = arith.mulf %88, %72 : vector<32x64xf32>
    %90 = vector.extract_strided_slice %89 {offsets = [0, 0], sizes = [32, 32], strides = [1, 1]} : vector<32x64xf32> to vector<32x32xf32>
    %91 = vector.extract_strided_slice %89 {offsets = [0, 32], sizes = [32, 32], strides = [1, 1]} : vector<32x64xf32> to vector<32x32xf32>
    %92 = arith.addf %90, %91 : vector<32x32xf32>
    %93 = vector.extract_strided_slice %54 {offsets = [128, 0], sizes = [32, 32], strides = [1, 1]} : vector<160x32xf32> to vector<32x32xf32>
    %cst_30 = arith.constant dense<0.000000e+00> : vector<32x32xf32>
    %94 = tpu.matmul %92, %93, %cst_30 {dimension_numbers = #tpu.dot_dimension_numbers<[1], [0], [0], [1], [0, 0, 1, 1], [], []>} : vector<32x32xf32>, vector<32x32xf32>, vector<32x32xf32> -> vector<32x32xf32>
    %95 = vector.extract_strided_slice %56 {offsets = [2, 0], sizes = [1, 32], strides = [1, 1]} : vector<8x128xf32> to vector<1x32xf32>
    %96 = vector.broadcast %95 : vector<1x32xf32> to vector<32x32xf32>
    %97 = arith.addf %94, %96 : vector<32x32xf32>
    %98 = arith.addf %50, %97 : vector<32x32xf32>
    %99 = vector.extract_strided_slice %56 {offsets = [3, 0], sizes = [1, 32], strides = [1, 1]} : vector<8x128xf32> to vector<1x32xf32>
    %100 = vector.extract_strided_slice %56 {offsets = [4, 0], sizes = [1, 32], strides = [1, 1]} : vector<8x128xf32> to vector<1x32xf32>
    %cst_31 = arith.constant dense<0.000000e+00> : vector<32xf32>
    %101 = vector.multi_reduction <add>, %98, %cst_31 [1] : vector<32x32xf32> to vector<32xf32>
    %102 = vector.shape_cast %101 : vector<32xf32> to vector<32x1xf32>
    %cst_32 = arith.constant 3.200000e+01 : f32
    %103 = vector.broadcast %cst_32 : f32 to vector<32x1xf32>
    %104 = arith.divf %102, %103 : vector<32x1xf32>
    %105 = vector.broadcast %104 : vector<32x1xf32> to vector<32x32xf32>
    %106 = arith.subf %98, %105 : vector<32x32xf32>
    %107 = arith.mulf %106, %106 : vector<32x32xf32>
    %cst_33 = arith.constant dense<0.000000e+00> : vector<32xf32>
    %108 = vector.multi_reduction <add>, %107, %cst_33 [1] : vector<32x32xf32> to vector<32xf32>
    %109 = vector.shape_cast %108 : vector<32xf32> to vector<32x1xf32>
    %cst_34 = arith.constant 3.200000e+01 : f32
    %110 = vector.broadcast %cst_34 : f32 to vector<32x1xf32>
    %111 = arith.divf %109, %110 : vector<32x1xf32>
    %112 = vector.broadcast %104 : vector<32x1xf32> to vector<32x32xf32>
    %113 = arith.subf %98, %112 : vector<32x32xf32>
    %cst_35 = arith.constant 9.99999974E-6 : f32
    %114 = vector.broadcast %cst_35 : f32 to vector<32x1xf32>
    %115 = arith.addf %111, %114 : vector<32x1xf32>
    %116 = math.rsqrt %115 : vector<32x1xf32>
    %117 = vector.broadcast %116 : vector<32x1xf32> to vector<32x32xf32>
    %118 = arith.mulf %113, %117 : vector<32x32xf32>
    %119 = vector.broadcast %99 : vector<1x32xf32> to vector<32x32xf32>
    %120 = arith.mulf %118, %119 : vector<32x32xf32>
    %121 = vector.broadcast %100 : vector<1x32xf32> to vector<32x32xf32>
    %122 = arith.addf %120, %121 : vector<32x32xf32>
    %123 = vector.extract_strided_slice %52 {offsets = [32, 0], sizes = [32, 128], strides = [1, 1]} : vector<64x128xf32> to vector<32x128xf32>
    %cst_36 = arith.constant dense<0.000000e+00> : vector<32x128xf32>
    %124 = tpu.matmul %122, %123, %cst_36 {dimension_numbers = #tpu.dot_dimension_numbers<[1], [0], [0], [1], [0, 0, 1, 1], [], []>} : vector<32x32xf32>, vector<32x128xf32>, vector<32x128xf32> -> vector<32x128xf32>
    %125 = vector.extract_strided_slice %56 {offsets = [1, 0], sizes = [1, 128], strides = [1, 1]} : vector<8x128xf32> to vector<1x128xf32>
    %126 = vector.broadcast %125 : vector<1x128xf32> to vector<32x128xf32>
    %127 = arith.addf %124, %126 : vector<32x128xf32>
    %cst_37 = arith.constant 5.000000e-01 : f32
    %128 = vector.broadcast %cst_37 : f32 to vector<32x128xf32>
    %129 = arith.mulf %128, %127 : vector<32x128xf32>
    %cst_38 = arith.constant 0.707106769 : f32
    %130 = vector.broadcast %cst_38 : f32 to vector<32x128xf32>
    %131 = arith.mulf %127, %130 : vector<32x128xf32>
    %cst_39 = arith.constant -4.000000e+00 : f32
    %cst_40 = arith.constant 4.000000e+00 : f32
    %132 = vector.broadcast %cst_39 : f32 to vector<32x128xf32>
    %133 = arith.maximumf %132, %131 : vector<32x128xf32>
    %134 = vector.broadcast %cst_40 : f32 to vector<32x128xf32>
    %135 = arith.minimumf %134, %133 : vector<32x128xf32>
    %136 = arith.mulf %135, %135 : vector<32x128xf32>
    %cst_41 = arith.constant -2.72614237E-10 : f32
    %137 = vector.broadcast %cst_41 : f32 to vector<32x128xf32>
    %138 = arith.mulf %136, %137 : vector<32x128xf32>
    %cst_42 = arith.constant 2.77068146E-8 : f32
    %139 = vector.broadcast %cst_42 : f32 to vector<32x128xf32>
    %140 = arith.addf %138, %139 : vector<32x128xf32>
    %141 = arith.mulf %136, %140 : vector<32x128xf32>
    %cst_43 = arith.constant -2.10102394E-6 : f32
    %142 = vector.broadcast %cst_43 : f32 to vector<32x128xf32>
    %143 = arith.addf %141, %142 : vector<32x128xf32>
    %144 = arith.mulf %136, %143 : vector<32x128xf32>
    %cst_44 = arith.constant -5.69250624E-5 : f32
    %145 = vector.broadcast %cst_44 : f32 to vector<32x128xf32>
    %146 = arith.addf %144, %145 : vector<32x128xf32>
    %147 = arith.mulf %136, %146 : vector<32x128xf32>
    %cst_45 = arith.constant -7.34990637E-4 : f32
    %148 = vector.broadcast %cst_45 : f32 to vector<32x128xf32>
    %149 = arith.addf %147, %148 : vector<32x128xf32>
    %150 = arith.mulf %136, %149 : vector<32x128xf32>
    %cst_46 = arith.constant -2.954600e-03 : f32
    %151 = vector.broadcast %cst_46 : f32 to vector<32x128xf32>
    %152 = arith.addf %150, %151 : vector<32x128xf32>
    %153 = arith.mulf %136, %152 : vector<32x128xf32>
    %cst_47 = arith.constant -0.0160960332 : f32
    %154 = vector.broadcast %cst_47 : f32 to vector<32x128xf32>
    %155 = arith.addf %153, %154 : vector<32x128xf32>
    %156 = arith.mulf %135, %155 : vector<32x128xf32>
    %cst_48 = arith.constant -1.45660715E-5 : f32
    %157 = vector.broadcast %cst_48 : f32 to vector<32x128xf32>
    %158 = arith.mulf %136, %157 : vector<32x128xf32>
    %cst_49 = arith.constant -2.13374049E-4 : f32
    %159 = vector.broadcast %cst_49 : f32 to vector<32x128xf32>
    %160 = arith.addf %158, %159 : vector<32x128xf32>
    %161 = arith.mulf %136, %160 : vector<32x128xf32>
    %cst_50 = arith.constant -0.00168282702 : f32
    %162 = vector.broadcast %cst_50 : f32 to vector<32x128xf32>
    %163 = arith.addf %161, %162 : vector<32x128xf32>
    %164 = arith.mulf %136, %163 : vector<32x128xf32>
    %cst_51 = arith.constant -0.00737332925 : f32
    %165 = vector.broadcast %cst_51 : f32 to vector<32x128xf32>
    %166 = arith.addf %164, %165 : vector<32x128xf32>
    %167 = arith.mulf %136, %166 : vector<32x128xf32>
    %cst_52 = arith.constant -0.0142647391 : f32
    %168 = vector.broadcast %cst_52 : f32 to vector<32x128xf32>
    %169 = arith.addf %167, %168 : vector<32x128xf32>
    %170 = arith.divf %156, %169 : vector<32x128xf32>
    %cst_53 = arith.constant 1.000000e+00 : f32
    %171 = vector.broadcast %cst_53 : f32 to vector<32x128xf32>
    %172 = arith.addf %171, %170 : vector<32x128xf32>
    %173 = arith.mulf %129, %172 : vector<32x128xf32>
    %174 = vector.extract_strided_slice %54 {offsets = [0, 0], sizes = [128, 32], strides = [1, 1]} : vector<160x32xf32> to vector<128x32xf32>
    %cst_54 = arith.constant dense<0.000000e+00> : vector<32x32xf32>
    %175 = tpu.matmul %173, %174, %cst_54 {dimension_numbers = #tpu.dot_dimension_numbers<[1], [0], [0], [1], [0, 0, 1, 1], [], []>} : vector<32x128xf32>, vector<128x32xf32>, vector<32x32xf32> -> vector<32x32xf32>
    %176 = vector.extract_strided_slice %56 {offsets = [7, 0], sizes = [1, 32], strides = [1, 1]} : vector<8x128xf32> to vector<1x32xf32>
    %177 = vector.broadcast %176 : vector<1x32xf32> to vector<32x32xf32>
    %178 = arith.addf %175, %177 : vector<32x32xf32>
    %179 = arith.addf %122, %178 : vector<32x32xf32>
    %180 = vector.extract_strided_slice %56 {offsets = [5, 0], sizes = [1, 32], strides = [1, 1]} : vector<8x128xf32> to vector<1x32xf32>
    %181 = vector.extract_strided_slice %56 {offsets = [6, 0], sizes = [1, 32], strides = [1, 1]} : vector<8x128xf32> to vector<1x32xf32>
    %cst_55 = arith.constant dense<0.000000e+00> : vector<32xf32>
    %182 = vector.multi_reduction <add>, %179, %cst_55 [1] : vector<32x32xf32> to vector<32xf32>
    %183 = vector.shape_cast %182 : vector<32xf32> to vector<32x1xf32>
    %cst_56 = arith.constant 3.200000e+01 : f32
    %184 = vector.broadcast %cst_56 : f32 to vector<32x1xf32>
    %185 = arith.divf %183, %184 : vector<32x1xf32>
    %186 = vector.broadcast %185 : vector<32x1xf32> to vector<32x32xf32>
    %187 = arith.subf %179, %186 : vector<32x32xf32>
    %188 = arith.mulf %187, %187 : vector<32x32xf32>
    %cst_57 = arith.constant dense<0.000000e+00> : vector<32xf32>
    %189 = vector.multi_reduction <add>, %188, %cst_57 [1] : vector<32x32xf32> to vector<32xf32>
    %190 = vector.shape_cast %189 : vector<32xf32> to vector<32x1xf32>
    %cst_58 = arith.constant 3.200000e+01 : f32
    %191 = vector.broadcast %cst_58 : f32 to vector<32x1xf32>
    %192 = arith.divf %190, %191 : vector<32x1xf32>
    %193 = vector.broadcast %185 : vector<32x1xf32> to vector<32x32xf32>
    %194 = arith.subf %179, %193 : vector<32x32xf32>
    %cst_59 = arith.constant 9.99999974E-6 : f32
    %195 = vector.broadcast %cst_59 : f32 to vector<32x1xf32>
    %196 = arith.addf %192, %195 : vector<32x1xf32>
    %197 = math.rsqrt %196 : vector<32x1xf32>
    %198 = vector.broadcast %197 : vector<32x1xf32> to vector<32x32xf32>
    %199 = arith.mulf %194, %198 : vector<32x32xf32>
    %200 = vector.broadcast %180 : vector<1x32xf32> to vector<32x32xf32>
    %201 = arith.mulf %199, %200 : vector<32x32xf32>
    %202 = vector.broadcast %181 : vector<1x32xf32> to vector<32x32xf32>
    %203 = arith.addf %201, %202 : vector<32x32xf32>
    %c1 = arith.constant 1 : index
    %c0_60 = arith.constant 0 : index
    %c0_61 = arith.constant 0 : index
    %204 = vector.load %arg2[%c1, %c0_60, %c0_61] : memref<4x64x128xf32, #tpu.memory_space<vmem>>, vector<1x64x128xf32>
    %205 = vector.shape_cast %204 : vector<1x64x128xf32> to vector<64x128xf32>
    %c1_62 = arith.constant 1 : index
    %c0_63 = arith.constant 0 : index
    %c0_64 = arith.constant 0 : index
    %206 = vector.load %arg3[%c1_62, %c0_63, %c0_64] : memref<4x160x32xf32, #tpu.memory_space<vmem>>, vector<1x160x32xf32>
    %207 = vector.shape_cast %206 : vector<1x160x32xf32> to vector<160x32xf32>
    %c1_65 = arith.constant 1 : index
    %c0_66 = arith.constant 0 : index
    %c0_67 = arith.constant 0 : index
    %208 = vector.load %arg4[%c1_65, %c0_66, %c0_67] : memref<4x8x128xf32, #tpu.memory_space<vmem>>, vector<1x8x128xf32>
    %209 = vector.shape_cast %208 : vector<1x8x128xf32> to vector<8x128xf32>
    %210 = vector.extract_strided_slice %205 {offsets = [0, 0], sizes = [32, 128], strides = [1, 1]} : vector<64x128xf32> to vector<32x128xf32>
    %cst_68 = arith.constant dense<0.000000e+00> : vector<32x128xf32>
    %211 = tpu.matmul %203, %210, %cst_68 {dimension_numbers = #tpu.dot_dimension_numbers<[1], [0], [0], [1], [0, 0, 1, 1], [], []>} : vector<32x32xf32>, vector<32x128xf32>, vector<32x128xf32> -> vector<32x128xf32>
    %212 = vector.extract_strided_slice %209 {offsets = [0, 0], sizes = [1, 128], strides = [1, 1]} : vector<8x128xf32> to vector<1x128xf32>
    %213 = vector.broadcast %212 : vector<1x128xf32> to vector<32x128xf32>
    %214 = arith.addf %211, %213 : vector<32x128xf32>
    %215 = vector.extract_strided_slice %214 {offsets = [0, 0], sizes = [32, 32], strides = [1, 1]} : vector<32x128xf32> to vector<32x32xf32>
    %216 = vector.extract_strided_slice %214 {offsets = [0, 32], sizes = [32, 32], strides = [1, 1]} : vector<32x128xf32> to vector<32x32xf32>
    %217 = vector.extract_strided_slice %214 {offsets = [0, 64], sizes = [32, 32], strides = [1, 1]} : vector<32x128xf32> to vector<32x32xf32>
    %218 = vector.extract_strided_slice %216 {offsets = [0, 0], sizes = [16, 32], strides = [1, 1]} : vector<32x32xf32> to vector<16x32xf32>
    %219 = vector.extract_strided_slice %216 {offsets = [16, 0], sizes = [16, 32], strides = [1, 1]} : vector<32x32xf32> to vector<16x32xf32>
    %220 = tpu.concatenate %218, %219 in 1 : vector<16x32xf32>, vector<16x32xf32> -> vector<16x64xf32>
    %221 = vector.extract_strided_slice %217 {offsets = [0, 0], sizes = [16, 32], strides = [1, 1]} : vector<32x32xf32> to vector<16x32xf32>
    %222 = vector.extract_strided_slice %217 {offsets = [16, 0], sizes = [16, 32], strides = [1, 1]} : vector<32x32xf32> to vector<16x32xf32>
    %223 = tpu.concatenate %221, %222 in 1 : vector<16x32xf32>, vector<16x32xf32> -> vector<16x64xf32>
    %224 = tpu.concatenate %220, %220 in 0 : vector<16x64xf32>, vector<16x64xf32> -> vector<32x64xf32>
    %225 = tpu.concatenate %223, %223 in 0 : vector<16x64xf32>, vector<16x64xf32> -> vector<32x64xf32>
    %226 = tpu.concatenate %215, %215 in 1 : vector<32x32xf32>, vector<32x32xf32> -> vector<32x64xf32>
    %227 = arith.mulf %226, %224 : vector<32x64xf32>
    %cst_69 = arith.constant dense<0.000000e+00> : vector<32x16xf32>
    %228 = tpu.matmul %227, %15, %cst_69 {dimension_numbers = #tpu.dot_dimension_numbers<[1], [0], [0], [1], [0, 0, 1, 1], [], []>} : vector<32x64xf32>, vector<64x16xf32>, vector<32x16xf32> -> vector<32x16xf32>
    %229 = vector.extract_strided_slice %228 {offsets = [0, 0], sizes = [32, 8], strides = [1, 1]} : vector<32x16xf32> to vector<32x8xf32>
    %230 = vector.extract_strided_slice %228 {offsets = [0, 8], sizes = [32, 8], strides = [1, 1]} : vector<32x16xf32> to vector<32x8xf32>
    %231 = arith.maximumf %229, %230 : vector<32x8xf32>
    %232 = arith.subf %229, %231 : vector<32x8xf32>
    %233 = math.exp %232 : vector<32x8xf32>
    %234 = arith.subf %230, %231 : vector<32x8xf32>
    %235 = math.exp %234 : vector<32x8xf32>
    %236 = arith.addf %233, %235 : vector<32x8xf32>
    %237 = tpu.reciprocal %236 {approx = true} : vector<32x8xf32> -> vector<32x8xf32>
    %238 = arith.mulf %233, %237 : vector<32x8xf32>
    %239 = arith.mulf %235, %237 : vector<32x8xf32>
    %240 = tpu.concatenate %238, %239 in 1 : vector<32x8xf32>, vector<32x8xf32> -> vector<32x16xf32>
    %cst_70 = arith.constant dense<0.000000e+00> : vector<32x64xf32>
    %241 = tpu.matmul %240, %31, %cst_70 {dimension_numbers = #tpu.dot_dimension_numbers<[1], [0], [0], [1], [0, 0, 1, 1], [], []>} : vector<32x16xf32>, vector<16x64xf32>, vector<32x64xf32> -> vector<32x64xf32>
    %242 = arith.mulf %241, %225 : vector<32x64xf32>
    %243 = vector.extract_strided_slice %242 {offsets = [0, 0], sizes = [32, 32], strides = [1, 1]} : vector<32x64xf32> to vector<32x32xf32>
    %244 = vector.extract_strided_slice %242 {offsets = [0, 32], sizes = [32, 32], strides = [1, 1]} : vector<32x64xf32> to vector<32x32xf32>
    %245 = arith.addf %243, %244 : vector<32x32xf32>
    %246 = vector.extract_strided_slice %207 {offsets = [128, 0], sizes = [32, 32], strides = [1, 1]} : vector<160x32xf32> to vector<32x32xf32>
    %cst_71 = arith.constant dense<0.000000e+00> : vector<32x32xf32>
    %247 = tpu.matmul %245, %246, %cst_71 {dimension_numbers = #tpu.dot_dimension_numbers<[1], [0], [0], [1], [0, 0, 1, 1], [], []>} : vector<32x32xf32>, vector<32x32xf32>, vector<32x32xf32> -> vector<32x32xf32>
    %248 = vector.extract_strided_slice %209 {offsets = [2, 0], sizes = [1, 32], strides = [1, 1]} : vector<8x128xf32> to vector<1x32xf32>
    %249 = vector.broadcast %248 : vector<1x32xf32> to vector<32x32xf32>
    %250 = arith.addf %247, %249 : vector<32x32xf32>
    %251 = arith.addf %203, %250 : vector<32x32xf32>
    %252 = vector.extract_strided_slice %209 {offsets = [3, 0], sizes = [1, 32], strides = [1, 1]} : vector<8x128xf32> to vector<1x32xf32>
    %253 = vector.extract_strided_slice %209 {offsets = [4, 0], sizes = [1, 32], strides = [1, 1]} : vector<8x128xf32> to vector<1x32xf32>
    %cst_72 = arith.constant dense<0.000000e+00> : vector<32xf32>
    %254 = vector.multi_reduction <add>, %251, %cst_72 [1] : vector<32x32xf32> to vector<32xf32>
    %255 = vector.shape_cast %254 : vector<32xf32> to vector<32x1xf32>
    %cst_73 = arith.constant 3.200000e+01 : f32
    %256 = vector.broadcast %cst_73 : f32 to vector<32x1xf32>
    %257 = arith.divf %255, %256 : vector<32x1xf32>
    %258 = vector.broadcast %257 : vector<32x1xf32> to vector<32x32xf32>
    %259 = arith.subf %251, %258 : vector<32x32xf32>
    %260 = arith.mulf %259, %259 : vector<32x32xf32>
    %cst_74 = arith.constant dense<0.000000e+00> : vector<32xf32>
    %261 = vector.multi_reduction <add>, %260, %cst_74 [1] : vector<32x32xf32> to vector<32xf32>
    %262 = vector.shape_cast %261 : vector<32xf32> to vector<32x1xf32>
    %cst_75 = arith.constant 3.200000e+01 : f32
    %263 = vector.broadcast %cst_75 : f32 to vector<32x1xf32>
    %264 = arith.divf %262, %263 : vector<32x1xf32>
    %265 = vector.broadcast %257 : vector<32x1xf32> to vector<32x32xf32>
    %266 = arith.subf %251, %265 : vector<32x32xf32>
    %cst_76 = arith.constant 9.99999974E-6 : f32
    %267 = vector.broadcast %cst_76 : f32 to vector<32x1xf32>
    %268 = arith.addf %264, %267 : vector<32x1xf32>
    %269 = math.rsqrt %268 : vector<32x1xf32>
    %270 = vector.broadcast %269 : vector<32x1xf32> to vector<32x32xf32>
    %271 = arith.mulf %266, %270 : vector<32x32xf32>
    %272 = vector.broadcast %252 : vector<1x32xf32> to vector<32x32xf32>
    %273 = arith.mulf %271, %272 : vector<32x32xf32>
    %274 = vector.broadcast %253 : vector<1x32xf32> to vector<32x32xf32>
    %275 = arith.addf %273, %274 : vector<32x32xf32>
    %276 = vector.extract_strided_slice %205 {offsets = [32, 0], sizes = [32, 128], strides = [1, 1]} : vector<64x128xf32> to vector<32x128xf32>
    %cst_77 = arith.constant dense<0.000000e+00> : vector<32x128xf32>
    %277 = tpu.matmul %275, %276, %cst_77 {dimension_numbers = #tpu.dot_dimension_numbers<[1], [0], [0], [1], [0, 0, 1, 1], [], []>} : vector<32x32xf32>, vector<32x128xf32>, vector<32x128xf32> -> vector<32x128xf32>
    %278 = vector.extract_strided_slice %209 {offsets = [1, 0], sizes = [1, 128], strides = [1, 1]} : vector<8x128xf32> to vector<1x128xf32>
    %279 = vector.broadcast %278 : vector<1x128xf32> to vector<32x128xf32>
    %280 = arith.addf %277, %279 : vector<32x128xf32>
    %cst_78 = arith.constant 5.000000e-01 : f32
    %281 = vector.broadcast %cst_78 : f32 to vector<32x128xf32>
    %282 = arith.mulf %281, %280 : vector<32x128xf32>
    %cst_79 = arith.constant 0.707106769 : f32
    %283 = vector.broadcast %cst_79 : f32 to vector<32x128xf32>
    %284 = arith.mulf %280, %283 : vector<32x128xf32>
    %cst_80 = arith.constant -4.000000e+00 : f32
    %cst_81 = arith.constant 4.000000e+00 : f32
    %285 = vector.broadcast %cst_80 : f32 to vector<32x128xf32>
    %286 = arith.maximumf %285, %284 : vector<32x128xf32>
    %287 = vector.broadcast %cst_81 : f32 to vector<32x128xf32>
    %288 = arith.minimumf %287, %286 : vector<32x128xf32>
    %289 = arith.mulf %288, %288 : vector<32x128xf32>
    %cst_82 = arith.constant -2.72614237E-10 : f32
    %290 = vector.broadcast %cst_82 : f32 to vector<32x128xf32>
    %291 = arith.mulf %289, %290 : vector<32x128xf32>
    %cst_83 = arith.constant 2.77068146E-8 : f32
    %292 = vector.broadcast %cst_83 : f32 to vector<32x128xf32>
    %293 = arith.addf %291, %292 : vector<32x128xf32>
    %294 = arith.mulf %289, %293 : vector<32x128xf32>
    %cst_84 = arith.constant -2.10102394E-6 : f32
    %295 = vector.broadcast %cst_84 : f32 to vector<32x128xf32>
    %296 = arith.addf %294, %295 : vector<32x128xf32>
    %297 = arith.mulf %289, %296 : vector<32x128xf32>
    %cst_85 = arith.constant -5.69250624E-5 : f32
    %298 = vector.broadcast %cst_85 : f32 to vector<32x128xf32>
    %299 = arith.addf %297, %298 : vector<32x128xf32>
    %300 = arith.mulf %289, %299 : vector<32x128xf32>
    %cst_86 = arith.constant -7.34990637E-4 : f32
    %301 = vector.broadcast %cst_86 : f32 to vector<32x128xf32>
    %302 = arith.addf %300, %301 : vector<32x128xf32>
    %303 = arith.mulf %289, %302 : vector<32x128xf32>
    %cst_87 = arith.constant -2.954600e-03 : f32
    %304 = vector.broadcast %cst_87 : f32 to vector<32x128xf32>
    %305 = arith.addf %303, %304 : vector<32x128xf32>
    %306 = arith.mulf %289, %305 : vector<32x128xf32>
    %cst_88 = arith.constant -0.0160960332 : f32
    %307 = vector.broadcast %cst_88 : f32 to vector<32x128xf32>
    %308 = arith.addf %306, %307 : vector<32x128xf32>
    %309 = arith.mulf %288, %308 : vector<32x128xf32>
    %cst_89 = arith.constant -1.45660715E-5 : f32
    %310 = vector.broadcast %cst_89 : f32 to vector<32x128xf32>
    %311 = arith.mulf %289, %310 : vector<32x128xf32>
    %cst_90 = arith.constant -2.13374049E-4 : f32
    %312 = vector.broadcast %cst_90 : f32 to vector<32x128xf32>
    %313 = arith.addf %311, %312 : vector<32x128xf32>
    %314 = arith.mulf %289, %313 : vector<32x128xf32>
    %cst_91 = arith.constant -0.00168282702 : f32
    %315 = vector.broadcast %cst_91 : f32 to vector<32x128xf32>
    %316 = arith.addf %314, %315 : vector<32x128xf32>
    %317 = arith.mulf %289, %316 : vector<32x128xf32>
    %cst_92 = arith.constant -0.00737332925 : f32
    %318 = vector.broadcast %cst_92 : f32 to vector<32x128xf32>
    %319 = arith.addf %317, %318 : vector<32x128xf32>
    %320 = arith.mulf %289, %319 : vector<32x128xf32>
    %cst_93 = arith.constant -0.0142647391 : f32
    %321 = vector.broadcast %cst_93 : f32 to vector<32x128xf32>
    %322 = arith.addf %320, %321 : vector<32x128xf32>
    %323 = arith.divf %309, %322 : vector<32x128xf32>
    %cst_94 = arith.constant 1.000000e+00 : f32
    %324 = vector.broadcast %cst_94 : f32 to vector<32x128xf32>
    %325 = arith.addf %324, %323 : vector<32x128xf32>
    %326 = arith.mulf %282, %325 : vector<32x128xf32>
    %327 = vector.extract_strided_slice %207 {offsets = [0, 0], sizes = [128, 32], strides = [1, 1]} : vector<160x32xf32> to vector<128x32xf32>
    %cst_95 = arith.constant dense<0.000000e+00> : vector<32x32xf32>
    %328 = tpu.matmul %326, %327, %cst_95 {dimension_numbers = #tpu.dot_dimension_numbers<[1], [0], [0], [1], [0, 0, 1, 1], [], []>} : vector<32x128xf32>, vector<128x32xf32>, vector<32x32xf32> -> vector<32x32xf32>
    %329 = vector.extract_strided_slice %209 {offsets = [7, 0], sizes = [1, 32], strides = [1, 1]} : vector<8x128xf32> to vector<1x32xf32>
    %330 = vector.broadcast %329 : vector<1x32xf32> to vector<32x32xf32>
    %331 = arith.addf %328, %330 : vector<32x32xf32>
    %332 = arith.addf %275, %331 : vector<32x32xf32>
    %333 = vector.extract_strided_slice %209 {offsets = [5, 0], sizes = [1, 32], strides = [1, 1]} : vector<8x128xf32> to vector<1x32xf32>
    %334 = vector.extract_strided_slice %209 {offsets = [6, 0], sizes = [1, 32], strides = [1, 1]} : vector<8x128xf32> to vector<1x32xf32>
    %cst_96 = arith.constant dense<0.000000e+00> : vector<32xf32>
    %335 = vector.multi_reduction <add>, %332, %cst_96 [1] : vector<32x32xf32> to vector<32xf32>
    %336 = vector.shape_cast %335 : vector<32xf32> to vector<32x1xf32>
    %cst_97 = arith.constant 3.200000e+01 : f32
    %337 = vector.broadcast %cst_97 : f32 to vector<32x1xf32>
    %338 = arith.divf %336, %337 : vector<32x1xf32>
    %339 = vector.broadcast %338 : vector<32x1xf32> to vector<32x32xf32>
    %340 = arith.subf %332, %339 : vector<32x32xf32>
    %341 = arith.mulf %340, %340 : vector<32x32xf32>
    %cst_98 = arith.constant dense<0.000000e+00> : vector<32xf32>
    %342 = vector.multi_reduction <add>, %341, %cst_98 [1] : vector<32x32xf32> to vector<32xf32>
    %343 = vector.shape_cast %342 : vector<32xf32> to vector<32x1xf32>
    %cst_99 = arith.constant 3.200000e+01 : f32
    %344 = vector.broadcast %cst_99 : f32 to vector<32x1xf32>
    %345 = arith.divf %343, %344 : vector<32x1xf32>
    %346 = vector.broadcast %338 : vector<32x1xf32> to vector<32x32xf32>
    %347 = arith.subf %332, %346 : vector<32x32xf32>
    %cst_100 = arith.constant 9.99999974E-6 : f32
    %348 = vector.broadcast %cst_100 : f32 to vector<32x1xf32>
    %349 = arith.addf %345, %348 : vector<32x1xf32>
    %350 = math.rsqrt %349 : vector<32x1xf32>
    %351 = vector.broadcast %350 : vector<32x1xf32> to vector<32x32xf32>
    %352 = arith.mulf %347, %351 : vector<32x32xf32>
    %353 = vector.broadcast %333 : vector<1x32xf32> to vector<32x32xf32>
    %354 = arith.mulf %352, %353 : vector<32x32xf32>
    %355 = vector.broadcast %334 : vector<1x32xf32> to vector<32x32xf32>
    %356 = arith.addf %354, %355 : vector<32x32xf32>
    %c2 = arith.constant 2 : index
    %c0_101 = arith.constant 0 : index
    %c0_102 = arith.constant 0 : index
    %357 = vector.load %arg2[%c2, %c0_101, %c0_102] : memref<4x64x128xf32, #tpu.memory_space<vmem>>, vector<1x64x128xf32>
    %358 = vector.shape_cast %357 : vector<1x64x128xf32> to vector<64x128xf32>
    %c2_103 = arith.constant 2 : index
    %c0_104 = arith.constant 0 : index
    %c0_105 = arith.constant 0 : index
    %359 = vector.load %arg3[%c2_103, %c0_104, %c0_105] : memref<4x160x32xf32, #tpu.memory_space<vmem>>, vector<1x160x32xf32>
    %360 = vector.shape_cast %359 : vector<1x160x32xf32> to vector<160x32xf32>
    %c2_106 = arith.constant 2 : index
    %c0_107 = arith.constant 0 : index
    %c0_108 = arith.constant 0 : index
    %361 = vector.load %arg4[%c2_106, %c0_107, %c0_108] : memref<4x8x128xf32, #tpu.memory_space<vmem>>, vector<1x8x128xf32>
    %362 = vector.shape_cast %361 : vector<1x8x128xf32> to vector<8x128xf32>
    %363 = vector.extract_strided_slice %358 {offsets = [0, 0], sizes = [32, 128], strides = [1, 1]} : vector<64x128xf32> to vector<32x128xf32>
    %cst_109 = arith.constant dense<0.000000e+00> : vector<32x128xf32>
    %364 = tpu.matmul %356, %363, %cst_109 {dimension_numbers = #tpu.dot_dimension_numbers<[1], [0], [0], [1], [0, 0, 1, 1], [], []>} : vector<32x32xf32>, vector<32x128xf32>, vector<32x128xf32> -> vector<32x128xf32>
    %365 = vector.extract_strided_slice %362 {offsets = [0, 0], sizes = [1, 128], strides = [1, 1]} : vector<8x128xf32> to vector<1x128xf32>
    %366 = vector.broadcast %365 : vector<1x128xf32> to vector<32x128xf32>
    %367 = arith.addf %364, %366 : vector<32x128xf32>
    %368 = vector.extract_strided_slice %367 {offsets = [0, 0], sizes = [32, 32], strides = [1, 1]} : vector<32x128xf32> to vector<32x32xf32>
    %369 = vector.extract_strided_slice %367 {offsets = [0, 32], sizes = [32, 32], strides = [1, 1]} : vector<32x128xf32> to vector<32x32xf32>
    %370 = vector.extract_strided_slice %367 {offsets = [0, 64], sizes = [32, 32], strides = [1, 1]} : vector<32x128xf32> to vector<32x32xf32>
    %371 = vector.extract_strided_slice %369 {offsets = [0, 0], sizes = [16, 32], strides = [1, 1]} : vector<32x32xf32> to vector<16x32xf32>
    %372 = vector.extract_strided_slice %369 {offsets = [16, 0], sizes = [16, 32], strides = [1, 1]} : vector<32x32xf32> to vector<16x32xf32>
    %373 = tpu.concatenate %371, %372 in 1 : vector<16x32xf32>, vector<16x32xf32> -> vector<16x64xf32>
    %374 = vector.extract_strided_slice %370 {offsets = [0, 0], sizes = [16, 32], strides = [1, 1]} : vector<32x32xf32> to vector<16x32xf32>
    %375 = vector.extract_strided_slice %370 {offsets = [16, 0], sizes = [16, 32], strides = [1, 1]} : vector<32x32xf32> to vector<16x32xf32>
    %376 = tpu.concatenate %374, %375 in 1 : vector<16x32xf32>, vector<16x32xf32> -> vector<16x64xf32>
    %377 = tpu.concatenate %373, %373 in 0 : vector<16x64xf32>, vector<16x64xf32> -> vector<32x64xf32>
    %378 = tpu.concatenate %376, %376 in 0 : vector<16x64xf32>, vector<16x64xf32> -> vector<32x64xf32>
    %379 = tpu.concatenate %368, %368 in 1 : vector<32x32xf32>, vector<32x32xf32> -> vector<32x64xf32>
    %380 = arith.mulf %379, %377 : vector<32x64xf32>
    %cst_110 = arith.constant dense<0.000000e+00> : vector<32x16xf32>
    %381 = tpu.matmul %380, %15, %cst_110 {dimension_numbers = #tpu.dot_dimension_numbers<[1], [0], [0], [1], [0, 0, 1, 1], [], []>} : vector<32x64xf32>, vector<64x16xf32>, vector<32x16xf32> -> vector<32x16xf32>
    %382 = vector.extract_strided_slice %381 {offsets = [0, 0], sizes = [32, 8], strides = [1, 1]} : vector<32x16xf32> to vector<32x8xf32>
    %383 = vector.extract_strided_slice %381 {offsets = [0, 8], sizes = [32, 8], strides = [1, 1]} : vector<32x16xf32> to vector<32x8xf32>
    %384 = arith.maximumf %382, %383 : vector<32x8xf32>
    %385 = arith.subf %382, %384 : vector<32x8xf32>
    %386 = math.exp %385 : vector<32x8xf32>
    %387 = arith.subf %383, %384 : vector<32x8xf32>
    %388 = math.exp %387 : vector<32x8xf32>
    %389 = arith.addf %386, %388 : vector<32x8xf32>
    %390 = tpu.reciprocal %389 {approx = true} : vector<32x8xf32> -> vector<32x8xf32>
    %391 = arith.mulf %386, %390 : vector<32x8xf32>
    %392 = arith.mulf %388, %390 : vector<32x8xf32>
    %393 = tpu.concatenate %391, %392 in 1 : vector<32x8xf32>, vector<32x8xf32> -> vector<32x16xf32>
    %cst_111 = arith.constant dense<0.000000e+00> : vector<32x64xf32>
    %394 = tpu.matmul %393, %31, %cst_111 {dimension_numbers = #tpu.dot_dimension_numbers<[1], [0], [0], [1], [0, 0, 1, 1], [], []>} : vector<32x16xf32>, vector<16x64xf32>, vector<32x64xf32> -> vector<32x64xf32>
    %395 = arith.mulf %394, %378 : vector<32x64xf32>
    %396 = vector.extract_strided_slice %395 {offsets = [0, 0], sizes = [32, 32], strides = [1, 1]} : vector<32x64xf32> to vector<32x32xf32>
    %397 = vector.extract_strided_slice %395 {offsets = [0, 32], sizes = [32, 32], strides = [1, 1]} : vector<32x64xf32> to vector<32x32xf32>
    %398 = arith.addf %396, %397 : vector<32x32xf32>
    %399 = vector.extract_strided_slice %360 {offsets = [128, 0], sizes = [32, 32], strides = [1, 1]} : vector<160x32xf32> to vector<32x32xf32>
    %cst_112 = arith.constant dense<0.000000e+00> : vector<32x32xf32>
    %400 = tpu.matmul %398, %399, %cst_112 {dimension_numbers = #tpu.dot_dimension_numbers<[1], [0], [0], [1], [0, 0, 1, 1], [], []>} : vector<32x32xf32>, vector<32x32xf32>, vector<32x32xf32> -> vector<32x32xf32>
    %401 = vector.extract_strided_slice %362 {offsets = [2, 0], sizes = [1, 32], strides = [1, 1]} : vector<8x128xf32> to vector<1x32xf32>
    %402 = vector.broadcast %401 : vector<1x32xf32> to vector<32x32xf32>
    %403 = arith.addf %400, %402 : vector<32x32xf32>
    %404 = arith.addf %356, %403 : vector<32x32xf32>
    %405 = vector.extract_strided_slice %362 {offsets = [3, 0], sizes = [1, 32], strides = [1, 1]} : vector<8x128xf32> to vector<1x32xf32>
    %406 = vector.extract_strided_slice %362 {offsets = [4, 0], sizes = [1, 32], strides = [1, 1]} : vector<8x128xf32> to vector<1x32xf32>
    %cst_113 = arith.constant dense<0.000000e+00> : vector<32xf32>
    %407 = vector.multi_reduction <add>, %404, %cst_113 [1] : vector<32x32xf32> to vector<32xf32>
    %408 = vector.shape_cast %407 : vector<32xf32> to vector<32x1xf32>
    %cst_114 = arith.constant 3.200000e+01 : f32
    %409 = vector.broadcast %cst_114 : f32 to vector<32x1xf32>
    %410 = arith.divf %408, %409 : vector<32x1xf32>
    %411 = vector.broadcast %410 : vector<32x1xf32> to vector<32x32xf32>
    %412 = arith.subf %404, %411 : vector<32x32xf32>
    %413 = arith.mulf %412, %412 : vector<32x32xf32>
    %cst_115 = arith.constant dense<0.000000e+00> : vector<32xf32>
    %414 = vector.multi_reduction <add>, %413, %cst_115 [1] : vector<32x32xf32> to vector<32xf32>
    %415 = vector.shape_cast %414 : vector<32xf32> to vector<32x1xf32>
    %cst_116 = arith.constant 3.200000e+01 : f32
    %416 = vector.broadcast %cst_116 : f32 to vector<32x1xf32>
    %417 = arith.divf %415, %416 : vector<32x1xf32>
    %418 = vector.broadcast %410 : vector<32x1xf32> to vector<32x32xf32>
    %419 = arith.subf %404, %418 : vector<32x32xf32>
    %cst_117 = arith.constant 9.99999974E-6 : f32
    %420 = vector.broadcast %cst_117 : f32 to vector<32x1xf32>
    %421 = arith.addf %417, %420 : vector<32x1xf32>
    %422 = math.rsqrt %421 : vector<32x1xf32>
    %423 = vector.broadcast %422 : vector<32x1xf32> to vector<32x32xf32>
    %424 = arith.mulf %419, %423 : vector<32x32xf32>
    %425 = vector.broadcast %405 : vector<1x32xf32> to vector<32x32xf32>
    %426 = arith.mulf %424, %425 : vector<32x32xf32>
    %427 = vector.broadcast %406 : vector<1x32xf32> to vector<32x32xf32>
    %428 = arith.addf %426, %427 : vector<32x32xf32>
    %429 = vector.extract_strided_slice %358 {offsets = [32, 0], sizes = [32, 128], strides = [1, 1]} : vector<64x128xf32> to vector<32x128xf32>
    %cst_118 = arith.constant dense<0.000000e+00> : vector<32x128xf32>
    %430 = tpu.matmul %428, %429, %cst_118 {dimension_numbers = #tpu.dot_dimension_numbers<[1], [0], [0], [1], [0, 0, 1, 1], [], []>} : vector<32x32xf32>, vector<32x128xf32>, vector<32x128xf32> -> vector<32x128xf32>
    %431 = vector.extract_strided_slice %362 {offsets = [1, 0], sizes = [1, 128], strides = [1, 1]} : vector<8x128xf32> to vector<1x128xf32>
    %432 = vector.broadcast %431 : vector<1x128xf32> to vector<32x128xf32>
    %433 = arith.addf %430, %432 : vector<32x128xf32>
    %cst_119 = arith.constant 5.000000e-01 : f32
    %434 = vector.broadcast %cst_119 : f32 to vector<32x128xf32>
    %435 = arith.mulf %434, %433 : vector<32x128xf32>
    %cst_120 = arith.constant 0.707106769 : f32
    %436 = vector.broadcast %cst_120 : f32 to vector<32x128xf32>
    %437 = arith.mulf %433, %436 : vector<32x128xf32>
    %cst_121 = arith.constant -4.000000e+00 : f32
    %cst_122 = arith.constant 4.000000e+00 : f32
    %438 = vector.broadcast %cst_121 : f32 to vector<32x128xf32>
    %439 = arith.maximumf %438, %437 : vector<32x128xf32>
    %440 = vector.broadcast %cst_122 : f32 to vector<32x128xf32>
    %441 = arith.minimumf %440, %439 : vector<32x128xf32>
    %442 = arith.mulf %441, %441 : vector<32x128xf32>
    %cst_123 = arith.constant -2.72614237E-10 : f32
    %443 = vector.broadcast %cst_123 : f32 to vector<32x128xf32>
    %444 = arith.mulf %442, %443 : vector<32x128xf32>
    %cst_124 = arith.constant 2.77068146E-8 : f32
    %445 = vector.broadcast %cst_124 : f32 to vector<32x128xf32>
    %446 = arith.addf %444, %445 : vector<32x128xf32>
    %447 = arith.mulf %442, %446 : vector<32x128xf32>
    %cst_125 = arith.constant -2.10102394E-6 : f32
    %448 = vector.broadcast %cst_125 : f32 to vector<32x128xf32>
    %449 = arith.addf %447, %448 : vector<32x128xf32>
    %450 = arith.mulf %442, %449 : vector<32x128xf32>
    %cst_126 = arith.constant -5.69250624E-5 : f32
    %451 = vector.broadcast %cst_126 : f32 to vector<32x128xf32>
    %452 = arith.addf %450, %451 : vector<32x128xf32>
    %453 = arith.mulf %442, %452 : vector<32x128xf32>
    %cst_127 = arith.constant -7.34990637E-4 : f32
    %454 = vector.broadcast %cst_127 : f32 to vector<32x128xf32>
    %455 = arith.addf %453, %454 : vector<32x128xf32>
    %456 = arith.mulf %442, %455 : vector<32x128xf32>
    %cst_128 = arith.constant -2.954600e-03 : f32
    %457 = vector.broadcast %cst_128 : f32 to vector<32x128xf32>
    %458 = arith.addf %456, %457 : vector<32x128xf32>
    %459 = arith.mulf %442, %458 : vector<32x128xf32>
    %cst_129 = arith.constant -0.0160960332 : f32
    %460 = vector.broadcast %cst_129 : f32 to vector<32x128xf32>
    %461 = arith.addf %459, %460 : vector<32x128xf32>
    %462 = arith.mulf %441, %461 : vector<32x128xf32>
    %cst_130 = arith.constant -1.45660715E-5 : f32
    %463 = vector.broadcast %cst_130 : f32 to vector<32x128xf32>
    %464 = arith.mulf %442, %463 : vector<32x128xf32>
    %cst_131 = arith.constant -2.13374049E-4 : f32
    %465 = vector.broadcast %cst_131 : f32 to vector<32x128xf32>
    %466 = arith.addf %464, %465 : vector<32x128xf32>
    %467 = arith.mulf %442, %466 : vector<32x128xf32>
    %cst_132 = arith.constant -0.00168282702 : f32
    %468 = vector.broadcast %cst_132 : f32 to vector<32x128xf32>
    %469 = arith.addf %467, %468 : vector<32x128xf32>
    %470 = arith.mulf %442, %469 : vector<32x128xf32>
    %cst_133 = arith.constant -0.00737332925 : f32
    %471 = vector.broadcast %cst_133 : f32 to vector<32x128xf32>
    %472 = arith.addf %470, %471 : vector<32x128xf32>
    %473 = arith.mulf %442, %472 : vector<32x128xf32>
    %cst_134 = arith.constant -0.0142647391 : f32
    %474 = vector.broadcast %cst_134 : f32 to vector<32x128xf32>
    %475 = arith.addf %473, %474 : vector<32x128xf32>
    %476 = arith.divf %462, %475 : vector<32x128xf32>
    %cst_135 = arith.constant 1.000000e+00 : f32
    %477 = vector.broadcast %cst_135 : f32 to vector<32x128xf32>
    %478 = arith.addf %477, %476 : vector<32x128xf32>
    %479 = arith.mulf %435, %478 : vector<32x128xf32>
    %480 = vector.extract_strided_slice %360 {offsets = [0, 0], sizes = [128, 32], strides = [1, 1]} : vector<160x32xf32> to vector<128x32xf32>
    %cst_136 = arith.constant dense<0.000000e+00> : vector<32x32xf32>
    %481 = tpu.matmul %479, %480, %cst_136 {dimension_numbers = #tpu.dot_dimension_numbers<[1], [0], [0], [1], [0, 0, 1, 1], [], []>} : vector<32x128xf32>, vector<128x32xf32>, vector<32x32xf32> -> vector<32x32xf32>
    %482 = vector.extract_strided_slice %362 {offsets = [7, 0], sizes = [1, 32], strides = [1, 1]} : vector<8x128xf32> to vector<1x32xf32>
    %483 = vector.broadcast %482 : vector<1x32xf32> to vector<32x32xf32>
    %484 = arith.addf %481, %483 : vector<32x32xf32>
    %485 = arith.addf %428, %484 : vector<32x32xf32>
    %486 = vector.extract_strided_slice %362 {offsets = [5, 0], sizes = [1, 32], strides = [1, 1]} : vector<8x128xf32> to vector<1x32xf32>
    %487 = vector.extract_strided_slice %362 {offsets = [6, 0], sizes = [1, 32], strides = [1, 1]} : vector<8x128xf32> to vector<1x32xf32>
    %cst_137 = arith.constant dense<0.000000e+00> : vector<32xf32>
    %488 = vector.multi_reduction <add>, %485, %cst_137 [1] : vector<32x32xf32> to vector<32xf32>
    %489 = vector.shape_cast %488 : vector<32xf32> to vector<32x1xf32>
    %cst_138 = arith.constant 3.200000e+01 : f32
    %490 = vector.broadcast %cst_138 : f32 to vector<32x1xf32>
    %491 = arith.divf %489, %490 : vector<32x1xf32>
    %492 = vector.broadcast %491 : vector<32x1xf32> to vector<32x32xf32>
    %493 = arith.subf %485, %492 : vector<32x32xf32>
    %494 = arith.mulf %493, %493 : vector<32x32xf32>
    %cst_139 = arith.constant dense<0.000000e+00> : vector<32xf32>
    %495 = vector.multi_reduction <add>, %494, %cst_139 [1] : vector<32x32xf32> to vector<32xf32>
    %496 = vector.shape_cast %495 : vector<32xf32> to vector<32x1xf32>
    %cst_140 = arith.constant 3.200000e+01 : f32
    %497 = vector.broadcast %cst_140 : f32 to vector<32x1xf32>
    %498 = arith.divf %496, %497 : vector<32x1xf32>
    %499 = vector.broadcast %491 : vector<32x1xf32> to vector<32x32xf32>
    %500 = arith.subf %485, %499 : vector<32x32xf32>
    %cst_141 = arith.constant 9.99999974E-6 : f32
    %501 = vector.broadcast %cst_141 : f32 to vector<32x1xf32>
    %502 = arith.addf %498, %501 : vector<32x1xf32>
    %503 = math.rsqrt %502 : vector<32x1xf32>
    %504 = vector.broadcast %503 : vector<32x1xf32> to vector<32x32xf32>
    %505 = arith.mulf %500, %504 : vector<32x32xf32>
    %506 = vector.broadcast %486 : vector<1x32xf32> to vector<32x32xf32>
    %507 = arith.mulf %505, %506 : vector<32x32xf32>
    %508 = vector.broadcast %487 : vector<1x32xf32> to vector<32x32xf32>
    %509 = arith.addf %507, %508 : vector<32x32xf32>
    %c3 = arith.constant 3 : index
    %c0_142 = arith.constant 0 : index
    %c0_143 = arith.constant 0 : index
    %510 = vector.load %arg2[%c3, %c0_142, %c0_143] : memref<4x64x128xf32, #tpu.memory_space<vmem>>, vector<1x64x128xf32>
    %511 = vector.shape_cast %510 : vector<1x64x128xf32> to vector<64x128xf32>
    %c3_144 = arith.constant 3 : index
    %c0_145 = arith.constant 0 : index
    %c0_146 = arith.constant 0 : index
    %512 = vector.load %arg3[%c3_144, %c0_145, %c0_146] : memref<4x160x32xf32, #tpu.memory_space<vmem>>, vector<1x160x32xf32>
    %513 = vector.shape_cast %512 : vector<1x160x32xf32> to vector<160x32xf32>
    %c3_147 = arith.constant 3 : index
    %c0_148 = arith.constant 0 : index
    %c0_149 = arith.constant 0 : index
    %514 = vector.load %arg4[%c3_147, %c0_148, %c0_149] : memref<4x8x128xf32, #tpu.memory_space<vmem>>, vector<1x8x128xf32>
    %515 = vector.shape_cast %514 : vector<1x8x128xf32> to vector<8x128xf32>
    %516 = vector.extract_strided_slice %511 {offsets = [0, 0], sizes = [32, 128], strides = [1, 1]} : vector<64x128xf32> to vector<32x128xf32>
    %cst_150 = arith.constant dense<0.000000e+00> : vector<32x128xf32>
    %517 = tpu.matmul %509, %516, %cst_150 {dimension_numbers = #tpu.dot_dimension_numbers<[1], [0], [0], [1], [0, 0, 1, 1], [], []>} : vector<32x32xf32>, vector<32x128xf32>, vector<32x128xf32> -> vector<32x128xf32>
    %518 = vector.extract_strided_slice %515 {offsets = [0, 0], sizes = [1, 128], strides = [1, 1]} : vector<8x128xf32> to vector<1x128xf32>
    %519 = vector.broadcast %518 : vector<1x128xf32> to vector<32x128xf32>
    %520 = arith.addf %517, %519 : vector<32x128xf32>
    %521 = vector.extract_strided_slice %520 {offsets = [0, 0], sizes = [32, 32], strides = [1, 1]} : vector<32x128xf32> to vector<32x32xf32>
    %522 = vector.extract_strided_slice %520 {offsets = [0, 32], sizes = [32, 32], strides = [1, 1]} : vector<32x128xf32> to vector<32x32xf32>
    %523 = vector.extract_strided_slice %520 {offsets = [0, 64], sizes = [32, 32], strides = [1, 1]} : vector<32x128xf32> to vector<32x32xf32>
    %524 = vector.extract_strided_slice %522 {offsets = [0, 0], sizes = [16, 32], strides = [1, 1]} : vector<32x32xf32> to vector<16x32xf32>
    %525 = vector.extract_strided_slice %522 {offsets = [16, 0], sizes = [16, 32], strides = [1, 1]} : vector<32x32xf32> to vector<16x32xf32>
    %526 = tpu.concatenate %524, %525 in 1 : vector<16x32xf32>, vector<16x32xf32> -> vector<16x64xf32>
    %527 = vector.extract_strided_slice %523 {offsets = [0, 0], sizes = [16, 32], strides = [1, 1]} : vector<32x32xf32> to vector<16x32xf32>
    %528 = vector.extract_strided_slice %523 {offsets = [16, 0], sizes = [16, 32], strides = [1, 1]} : vector<32x32xf32> to vector<16x32xf32>
    %529 = tpu.concatenate %527, %528 in 1 : vector<16x32xf32>, vector<16x32xf32> -> vector<16x64xf32>
    %530 = tpu.concatenate %526, %526 in 0 : vector<16x64xf32>, vector<16x64xf32> -> vector<32x64xf32>
    %531 = tpu.concatenate %529, %529 in 0 : vector<16x64xf32>, vector<16x64xf32> -> vector<32x64xf32>
    %532 = tpu.concatenate %521, %521 in 1 : vector<32x32xf32>, vector<32x32xf32> -> vector<32x64xf32>
    %533 = arith.mulf %532, %530 : vector<32x64xf32>
    %cst_151 = arith.constant dense<0.000000e+00> : vector<32x16xf32>
    %534 = tpu.matmul %533, %15, %cst_151 {dimension_numbers = #tpu.dot_dimension_numbers<[1], [0], [0], [1], [0, 0, 1, 1], [], []>} : vector<32x64xf32>, vector<64x16xf32>, vector<32x16xf32> -> vector<32x16xf32>
    %535 = vector.extract_strided_slice %534 {offsets = [0, 0], sizes = [32, 8], strides = [1, 1]} : vector<32x16xf32> to vector<32x8xf32>
    %536 = vector.extract_strided_slice %534 {offsets = [0, 8], sizes = [32, 8], strides = [1, 1]} : vector<32x16xf32> to vector<32x8xf32>
    %537 = arith.maximumf %535, %536 : vector<32x8xf32>
    %538 = arith.subf %535, %537 : vector<32x8xf32>
    %539 = math.exp %538 : vector<32x8xf32>
    %540 = arith.subf %536, %537 : vector<32x8xf32>
    %541 = math.exp %540 : vector<32x8xf32>
    %542 = arith.addf %539, %541 : vector<32x8xf32>
    %543 = tpu.reciprocal %542 {approx = true} : vector<32x8xf32> -> vector<32x8xf32>
    %544 = arith.mulf %539, %543 : vector<32x8xf32>
    %545 = arith.mulf %541, %543 : vector<32x8xf32>
    %546 = tpu.concatenate %544, %545 in 1 : vector<32x8xf32>, vector<32x8xf32> -> vector<32x16xf32>
    %cst_152 = arith.constant dense<0.000000e+00> : vector<32x64xf32>
    %547 = tpu.matmul %546, %31, %cst_152 {dimension_numbers = #tpu.dot_dimension_numbers<[1], [0], [0], [1], [0, 0, 1, 1], [], []>} : vector<32x16xf32>, vector<16x64xf32>, vector<32x64xf32> -> vector<32x64xf32>
    %548 = arith.mulf %547, %531 : vector<32x64xf32>
    %549 = vector.extract_strided_slice %548 {offsets = [0, 0], sizes = [32, 32], strides = [1, 1]} : vector<32x64xf32> to vector<32x32xf32>
    %550 = vector.extract_strided_slice %548 {offsets = [0, 32], sizes = [32, 32], strides = [1, 1]} : vector<32x64xf32> to vector<32x32xf32>
    %551 = arith.addf %549, %550 : vector<32x32xf32>
    %552 = vector.extract_strided_slice %513 {offsets = [128, 0], sizes = [32, 32], strides = [1, 1]} : vector<160x32xf32> to vector<32x32xf32>
    %cst_153 = arith.constant dense<0.000000e+00> : vector<32x32xf32>
    %553 = tpu.matmul %551, %552, %cst_153 {dimension_numbers = #tpu.dot_dimension_numbers<[1], [0], [0], [1], [0, 0, 1, 1], [], []>} : vector<32x32xf32>, vector<32x32xf32>, vector<32x32xf32> -> vector<32x32xf32>
    %554 = vector.extract_strided_slice %515 {offsets = [2, 0], sizes = [1, 32], strides = [1, 1]} : vector<8x128xf32> to vector<1x32xf32>
    %555 = vector.broadcast %554 : vector<1x32xf32> to vector<32x32xf32>
    %556 = arith.addf %553, %555 : vector<32x32xf32>
    %557 = arith.addf %509, %556 : vector<32x32xf32>
    %558 = vector.extract_strided_slice %515 {offsets = [3, 0], sizes = [1, 32], strides = [1, 1]} : vector<8x128xf32> to vector<1x32xf32>
    %559 = vector.extract_strided_slice %515 {offsets = [4, 0], sizes = [1, 32], strides = [1, 1]} : vector<8x128xf32> to vector<1x32xf32>
    %cst_154 = arith.constant dense<0.000000e+00> : vector<32xf32>
    %560 = vector.multi_reduction <add>, %557, %cst_154 [1] : vector<32x32xf32> to vector<32xf32>
    %561 = vector.shape_cast %560 : vector<32xf32> to vector<32x1xf32>
    %cst_155 = arith.constant 3.200000e+01 : f32
    %562 = vector.broadcast %cst_155 : f32 to vector<32x1xf32>
    %563 = arith.divf %561, %562 : vector<32x1xf32>
    %564 = vector.broadcast %563 : vector<32x1xf32> to vector<32x32xf32>
    %565 = arith.subf %557, %564 : vector<32x32xf32>
    %566 = arith.mulf %565, %565 : vector<32x32xf32>
    %cst_156 = arith.constant dense<0.000000e+00> : vector<32xf32>
    %567 = vector.multi_reduction <add>, %566, %cst_156 [1] : vector<32x32xf32> to vector<32xf32>
    %568 = vector.shape_cast %567 : vector<32xf32> to vector<32x1xf32>
    %cst_157 = arith.constant 3.200000e+01 : f32
    %569 = vector.broadcast %cst_157 : f32 to vector<32x1xf32>
    %570 = arith.divf %568, %569 : vector<32x1xf32>
    %571 = vector.broadcast %563 : vector<32x1xf32> to vector<32x32xf32>
    %572 = arith.subf %557, %571 : vector<32x32xf32>
    %cst_158 = arith.constant 9.99999974E-6 : f32
    %573 = vector.broadcast %cst_158 : f32 to vector<32x1xf32>
    %574 = arith.addf %570, %573 : vector<32x1xf32>
    %575 = math.rsqrt %574 : vector<32x1xf32>
    %576 = vector.broadcast %575 : vector<32x1xf32> to vector<32x32xf32>
    %577 = arith.mulf %572, %576 : vector<32x32xf32>
    %578 = vector.broadcast %558 : vector<1x32xf32> to vector<32x32xf32>
    %579 = arith.mulf %577, %578 : vector<32x32xf32>
    %580 = vector.broadcast %559 : vector<1x32xf32> to vector<32x32xf32>
    %581 = arith.addf %579, %580 : vector<32x32xf32>
    %582 = vector.extract_strided_slice %511 {offsets = [32, 0], sizes = [32, 128], strides = [1, 1]} : vector<64x128xf32> to vector<32x128xf32>
    %cst_159 = arith.constant dense<0.000000e+00> : vector<32x128xf32>
    %583 = tpu.matmul %581, %582, %cst_159 {dimension_numbers = #tpu.dot_dimension_numbers<[1], [0], [0], [1], [0, 0, 1, 1], [], []>} : vector<32x32xf32>, vector<32x128xf32>, vector<32x128xf32> -> vector<32x128xf32>
    %584 = vector.extract_strided_slice %515 {offsets = [1, 0], sizes = [1, 128], strides = [1, 1]} : vector<8x128xf32> to vector<1x128xf32>
    %585 = vector.broadcast %584 : vector<1x128xf32> to vector<32x128xf32>
    %586 = arith.addf %583, %585 : vector<32x128xf32>
    %cst_160 = arith.constant 5.000000e-01 : f32
    %587 = vector.broadcast %cst_160 : f32 to vector<32x128xf32>
    %588 = arith.mulf %587, %586 : vector<32x128xf32>
    %cst_161 = arith.constant 0.707106769 : f32
    %589 = vector.broadcast %cst_161 : f32 to vector<32x128xf32>
    %590 = arith.mulf %586, %589 : vector<32x128xf32>
    %cst_162 = arith.constant -4.000000e+00 : f32
    %cst_163 = arith.constant 4.000000e+00 : f32
    %591 = vector.broadcast %cst_162 : f32 to vector<32x128xf32>
    %592 = arith.maximumf %591, %590 : vector<32x128xf32>
    %593 = vector.broadcast %cst_163 : f32 to vector<32x128xf32>
    %594 = arith.minimumf %593, %592 : vector<32x128xf32>
    %595 = arith.mulf %594, %594 : vector<32x128xf32>
    %cst_164 = arith.constant -2.72614237E-10 : f32
    %596 = vector.broadcast %cst_164 : f32 to vector<32x128xf32>
    %597 = arith.mulf %595, %596 : vector<32x128xf32>
    %cst_165 = arith.constant 2.77068146E-8 : f32
    %598 = vector.broadcast %cst_165 : f32 to vector<32x128xf32>
    %599 = arith.addf %597, %598 : vector<32x128xf32>
    %600 = arith.mulf %595, %599 : vector<32x128xf32>
    %cst_166 = arith.constant -2.10102394E-6 : f32
    %601 = vector.broadcast %cst_166 : f32 to vector<32x128xf32>
    %602 = arith.addf %600, %601 : vector<32x128xf32>
    %603 = arith.mulf %595, %602 : vector<32x128xf32>
    %cst_167 = arith.constant -5.69250624E-5 : f32
    %604 = vector.broadcast %cst_167 : f32 to vector<32x128xf32>
    %605 = arith.addf %603, %604 : vector<32x128xf32>
    %606 = arith.mulf %595, %605 : vector<32x128xf32>
    %cst_168 = arith.constant -7.34990637E-4 : f32
    %607 = vector.broadcast %cst_168 : f32 to vector<32x128xf32>
    %608 = arith.addf %606, %607 : vector<32x128xf32>
    %609 = arith.mulf %595, %608 : vector<32x128xf32>
    %cst_169 = arith.constant -2.954600e-03 : f32
    %610 = vector.broadcast %cst_169 : f32 to vector<32x128xf32>
    %611 = arith.addf %609, %610 : vector<32x128xf32>
    %612 = arith.mulf %595, %611 : vector<32x128xf32>
    %cst_170 = arith.constant -0.0160960332 : f32
    %613 = vector.broadcast %cst_170 : f32 to vector<32x128xf32>
    %614 = arith.addf %612, %613 : vector<32x128xf32>
    %615 = arith.mulf %594, %614 : vector<32x128xf32>
    %cst_171 = arith.constant -1.45660715E-5 : f32
    %616 = vector.broadcast %cst_171 : f32 to vector<32x128xf32>
    %617 = arith.mulf %595, %616 : vector<32x128xf32>
    %cst_172 = arith.constant -2.13374049E-4 : f32
    %618 = vector.broadcast %cst_172 : f32 to vector<32x128xf32>
    %619 = arith.addf %617, %618 : vector<32x128xf32>
    %620 = arith.mulf %595, %619 : vector<32x128xf32>
    %cst_173 = arith.constant -0.00168282702 : f32
    %621 = vector.broadcast %cst_173 : f32 to vector<32x128xf32>
    %622 = arith.addf %620, %621 : vector<32x128xf32>
    %623 = arith.mulf %595, %622 : vector<32x128xf32>
    %cst_174 = arith.constant -0.00737332925 : f32
    %624 = vector.broadcast %cst_174 : f32 to vector<32x128xf32>
    %625 = arith.addf %623, %624 : vector<32x128xf32>
    %626 = arith.mulf %595, %625 : vector<32x128xf32>
    %cst_175 = arith.constant -0.0142647391 : f32
    %627 = vector.broadcast %cst_175 : f32 to vector<32x128xf32>
    %628 = arith.addf %626, %627 : vector<32x128xf32>
    %629 = arith.divf %615, %628 : vector<32x128xf32>
    %cst_176 = arith.constant 1.000000e+00 : f32
    %630 = vector.broadcast %cst_176 : f32 to vector<32x128xf32>
    %631 = arith.addf %630, %629 : vector<32x128xf32>
    %632 = arith.mulf %588, %631 : vector<32x128xf32>
    %633 = vector.extract_strided_slice %513 {offsets = [0, 0], sizes = [128, 32], strides = [1, 1]} : vector<160x32xf32> to vector<128x32xf32>
    %cst_177 = arith.constant dense<0.000000e+00> : vector<32x32xf32>
    %634 = tpu.matmul %632, %633, %cst_177 {dimension_numbers = #tpu.dot_dimension_numbers<[1], [0], [0], [1], [0, 0, 1, 1], [], []>} : vector<32x128xf32>, vector<128x32xf32>, vector<32x32xf32> -> vector<32x32xf32>
    %635 = vector.extract_strided_slice %515 {offsets = [7, 0], sizes = [1, 32], strides = [1, 1]} : vector<8x128xf32> to vector<1x32xf32>
    %636 = vector.broadcast %635 : vector<1x32xf32> to vector<32x32xf32>
    %637 = arith.addf %634, %636 : vector<32x32xf32>
    %638 = arith.addf %581, %637 : vector<32x32xf32>
    %639 = vector.extract_strided_slice %515 {offsets = [5, 0], sizes = [1, 32], strides = [1, 1]} : vector<8x128xf32> to vector<1x32xf32>
    %640 = vector.extract_strided_slice %515 {offsets = [6, 0], sizes = [1, 32], strides = [1, 1]} : vector<8x128xf32> to vector<1x32xf32>
    %cst_178 = arith.constant dense<0.000000e+00> : vector<32xf32>
    %641 = vector.multi_reduction <add>, %638, %cst_178 [1] : vector<32x32xf32> to vector<32xf32>
    %642 = vector.shape_cast %641 : vector<32xf32> to vector<32x1xf32>
    %cst_179 = arith.constant 3.200000e+01 : f32
    %643 = vector.broadcast %cst_179 : f32 to vector<32x1xf32>
    %644 = arith.divf %642, %643 : vector<32x1xf32>
    %645 = vector.broadcast %644 : vector<32x1xf32> to vector<32x32xf32>
    %646 = arith.subf %638, %645 : vector<32x32xf32>
    %647 = arith.mulf %646, %646 : vector<32x32xf32>
    %cst_180 = arith.constant dense<0.000000e+00> : vector<32xf32>
    %648 = vector.multi_reduction <add>, %647, %cst_180 [1] : vector<32x32xf32> to vector<32xf32>
    %649 = vector.shape_cast %648 : vector<32xf32> to vector<32x1xf32>
    %cst_181 = arith.constant 3.200000e+01 : f32
    %650 = vector.broadcast %cst_181 : f32 to vector<32x1xf32>
    %651 = arith.divf %649, %650 : vector<32x1xf32>
    %652 = vector.broadcast %644 : vector<32x1xf32> to vector<32x32xf32>
    %653 = arith.subf %638, %652 : vector<32x32xf32>
    %cst_182 = arith.constant 9.99999974E-6 : f32
    %654 = vector.broadcast %cst_182 : f32 to vector<32x1xf32>
    %655 = arith.addf %651, %654 : vector<32x1xf32>
    %656 = math.rsqrt %655 : vector<32x1xf32>
    %657 = vector.broadcast %656 : vector<32x1xf32> to vector<32x32xf32>
    %658 = arith.mulf %653, %657 : vector<32x32xf32>
    %659 = vector.broadcast %639 : vector<1x32xf32> to vector<32x32xf32>
    %660 = arith.mulf %658, %659 : vector<32x32xf32>
    %661 = vector.broadcast %640 : vector<1x32xf32> to vector<32x32xf32>
    %662 = arith.addf %660, %661 : vector<32x32xf32>
    %c0_183 = arith.constant 0 : index
    %c0_184 = arith.constant 0 : index
    %663 = vector.load %arg5[%c0_183, %c0_184] : memref<40x32xf32, #tpu.memory_space<vmem>>, vector<40x32xf32>
    %cst_185 = arith.constant dense<0.000000e+00> : vector<2x32xf32>
    %664 = tpu.matmul %47, %662, %cst_185 {dimension_numbers = #tpu.dot_dimension_numbers<[1], [0], [0], [1], [0, 0, 1, 1], [], []>} : vector<2x32xf32>, vector<32x32xf32>, vector<2x32xf32> -> vector<2x32xf32>
    %665 = vector.extract_strided_slice %663 {offsets = [33, 0], sizes = [1, 32], strides = [1, 1]} : vector<40x32xf32> to vector<1x32xf32>
    %666 = vector.extract_strided_slice %663 {offsets = [34, 0], sizes = [1, 32], strides = [1, 1]} : vector<40x32xf32> to vector<1x32xf32>
    %cst_186 = arith.constant dense<0.000000e+00> : vector<2xf32>
    %667 = vector.multi_reduction <add>, %664, %cst_186 [1] : vector<2x32xf32> to vector<2xf32>
    %668 = vector.shape_cast %667 : vector<2xf32> to vector<2x1xf32>
    %cst_187 = arith.constant 3.200000e+01 : f32
    %669 = vector.broadcast %cst_187 : f32 to vector<2x1xf32>
    %670 = arith.divf %668, %669 : vector<2x1xf32>
    %671 = vector.broadcast %670 : vector<2x1xf32> to vector<2x32xf32>
    %672 = arith.subf %664, %671 : vector<2x32xf32>
    %673 = arith.mulf %672, %672 : vector<2x32xf32>
    %cst_188 = arith.constant dense<0.000000e+00> : vector<2xf32>
    %674 = vector.multi_reduction <add>, %673, %cst_188 [1] : vector<2x32xf32> to vector<2xf32>
    %675 = vector.shape_cast %674 : vector<2xf32> to vector<2x1xf32>
    %cst_189 = arith.constant 3.200000e+01 : f32
    %676 = vector.broadcast %cst_189 : f32 to vector<2x1xf32>
    %677 = arith.divf %675, %676 : vector<2x1xf32>
    %678 = vector.broadcast %670 : vector<2x1xf32> to vector<2x32xf32>
    %679 = arith.subf %664, %678 : vector<2x32xf32>
    %cst_190 = arith.constant 9.99999974E-6 : f32
    %680 = vector.broadcast %cst_190 : f32 to vector<2x1xf32>
    %681 = arith.addf %677, %680 : vector<2x1xf32>
    %682 = math.rsqrt %681 : vector<2x1xf32>
    %683 = vector.broadcast %682 : vector<2x1xf32> to vector<2x32xf32>
    %684 = arith.mulf %679, %683 : vector<2x32xf32>
    %685 = vector.broadcast %665 : vector<1x32xf32> to vector<2x32xf32>
    %686 = arith.mulf %684, %685 : vector<2x32xf32>
    %687 = vector.broadcast %666 : vector<1x32xf32> to vector<2x32xf32>
    %688 = arith.addf %686, %687 : vector<2x32xf32>
    %689 = vector.extract_strided_slice %663 {offsets = [0, 0], sizes = [32, 2], strides = [1, 1]} : vector<40x32xf32> to vector<32x2xf32>
    %cst_191 = arith.constant dense<0.000000e+00> : vector<2x2xf32>
    %690 = tpu.matmul %688, %689, %cst_191 {dimension_numbers = #tpu.dot_dimension_numbers<[1], [0], [0], [1], [0, 0, 1, 1], [], []>} : vector<2x32xf32>, vector<32x2xf32>, vector<2x2xf32> -> vector<2x2xf32>
    %691 = vector.extract_strided_slice %663 {offsets = [32, 0], sizes = [1, 2], strides = [1, 1]} : vector<40x32xf32> to vector<1x2xf32>
    %692 = vector.broadcast %691 : vector<1x2xf32> to vector<2x2xf32>
    %693 = arith.addf %690, %692 : vector<2x2xf32>
    %c0_192 = arith.constant 0 : index
    %c0_193 = arith.constant 0 : index
    %694 = vector.load %arg6[%c0_192, %c0_193] : memref<2x2xf32, #tpu.memory_space<vmem>>, vector<2x2xf32>
    tpu.vector_store %arg6[%c0_192, %c0_193], %693 {strides = array<i32>} : memref<2x2xf32, #tpu.memory_space<vmem>>, vector<2x2xf32>,
    return
  }
}

</mosaic_0001>

<llo_original>
// kernel: cvt_forward.1
$region0: #{cvt_forward.1}
  #allocation0 [shape = 'u32[]', space=smem, size = 0x4, offset = 0x4, fixed_abs, tag = 'smem constant byte address 0x4 - core index']
  #allocation1 [shape = 'u32[144,128]{1,0:T(1,128)}', space=vmem, size = 0x12000, scoped, tag = 'internal scratch']
  %s0 = inlined_call_operand.vmem [shape: f32[32,256], index: 0, kind: input, shape index: {}]
  %s1 = inlined_call_operand.vmem [shape: f32[256,32], index: 1, kind: input, shape index: {}]
  %s2 = inlined_call_operand.vmem [shape: f32[4,64,128], index: 2, kind: input, shape index: {}]
  %s3 = inlined_call_operand.vmem [shape: f32[4,160,32], index: 3, kind: input, shape index: {}]
  %s4 = inlined_call_operand.vmem [shape: f32[4,8,128], index: 4, kind: input, shape index: {}]
  %s5 = inlined_call_operand.vmem [shape: f32[40,32], index: 5, kind: input, shape index: {}]
  %s6 = inlined_call_operand.hbm [shape: f32[2,2], index: 6, kind: output, shape index: {}]
  %s7 = sld [smem:[#allocation0]]
  $region34: #{cvt_forward.1} parent=0
    _
  %s9 = ssub.s32 1, %s7
  %s10 = scalar_select 0, %s9, %s7
  $region1: #{cvt_forward.1} parent=0
    #allocation2 [shape = 'u8[1024]{0}', space=vmem, size = 0x400, scoped, tag = 'output window, operand 0, single buffered']
    #allocation3 [shape = 's32[1]{0}', space=sflag, size = 0x4, scoped, tag = 'scoped memory for cvt_forward.1']
    %11 = vsyncpa [#allocation3], 0
    // Predicated region
    $region2: #{cvt_forward.1} parent=1 // pred_check
      _
    $region3: #{cvt_forward.1} parent=1 // pred_check_branch
      %13 = sbr.rel (0) target = $region5
    $region4: #{cvt_forward.1} parent=1 // pred_region
      _
    $region5: #{cvt_forward.1} parent=1 // pred_fallthru
      _
    // Predicated region
    $region6: #{cvt_forward.1} parent=1 // pred_check
      _
    $region7: #{cvt_forward.1} parent=1 // pred_check_branch
      %15 = sbr.rel (0) target = $region9
    $region8: #{cvt_forward.1} parent=1 // pred_region
      _
    $region9: #{cvt_forward.1} parent=1 // pred_fallthru
      _
    // Predicated region
    $region10: #{cvt_forward.1} parent=1 // pred_check
      _
    $region11: #{cvt_forward.1} parent=1 // pred_check_branch
      %17 = sbr.rel (0) target = $region13
    $region12: #{cvt_forward.1} parent=1 // pred_region
      _
    $region13: #{cvt_forward.1} parent=1 // pred_fallthru
      _
    // Predicated region
    $region14: #{cvt_forward.1} parent=1 // pred_check
      _
    $region15: #{cvt_forward.1} parent=1 // pred_check_branch
      %19 = sbr.rel (0) target = $region17
    $region16: #{cvt_forward.1} parent=1 // pred_region
      _
    $region17: #{cvt_forward.1} parent=1 // pred_fallthru
      _
    // Predicated region
    $region18: #{cvt_forward.1} parent=1 // pred_check
      _
    $region19: #{cvt_forward.1} parent=1 // pred_check_branch
      %21 = sbr.rel (0) target = $region21
    $region20: #{cvt_forward.1} parent=1 // pred_region
      _
    $region21: #{cvt_forward.1} parent=1 // pred_fallthru
      _
    // Predicated region
    $region22: #{cvt_forward.1} parent=1 // pred_check
      _
    $region23: #{cvt_forward.1} parent=1 // pred_check_branch
      %23 = sbr.rel (0) target = $region25
    $region24: #{cvt_forward.1} parent=1 // pred_region
      _
    $region25: #{cvt_forward.1} parent=1 // pred_fallthru
      _
    %v24 = vlaneseq
    %v25 = vshrl.u32 %v24, 7
    %v26 = vadd.s32 %v25, 8
    %v27 = vadd.s32 %v25, 16
    %v28 = vadd.s32 %v25, 24
    %v29 = vadd.s32 %v25, 32
    %v30 = vadd.s32 %v25, 40
    %v31 = vadd.s32 %v25, 48
    %v32 = vadd.s32 %v25, 56
    %v33 = vcvt.s32.f32 %v25
    %v34 = vcvt.s32.f32 %v26
    %v35 = vcvt.s32.f32 %v27
    %v36 = vcvt.s32.f32 %v28
    %v37 = vcvt.s32.f32 %v29
    %v38 = vcvt.s32.f32 %v30
    %v39 = vcvt.s32.f32 %v31
    %v40 = vcvt.s32.f32 %v32
    %v41 = vlaneseq
    %v42 = vand.u32 %v41, 127
    %v43 = vcvt.s32.f32 %v42
    %v44 = vmul.f32 %v43, 4.0
    %vm45 = vcmp.ge.f32.partialorder %v33, %v44
    %vm46 = vcmp.ge.f32.partialorder %v34, %v44
    %vm47 = vcmp.ge.f32.partialorder %v35, %v44
    %vm48 = vcmp.ge.f32.partialorder %v36, %v44
    %vm49 = vcmp.ge.f32.partialorder %v37, %v44
    %vm50 = vcmp.ge.f32.partialorder %v38, %v44
    %vm51 = vcmp.ge.f32.partialorder %v39, %v44
    %vm52 = vcmp.ge.f32.partialorder %v40, %v44
    %v53 = vadd.f32 %v44, 4.0
    %vm54 = vcmp.lt.f32.partialorder %v33, %v53
    %vm55 = vcmp.lt.f32.partialorder %v34, %v53
    %vm56 = vcmp.lt.f32.partialorder %v35, %v53
    %vm57 = vcmp.lt.f32.partialorder %v36, %v53
    %vm58 = vcmp.lt.f32.partialorder %v37, %v53
    %vm59 = vcmp.lt.f32.partialorder %v38, %v53
    %vm60 = vcmp.lt.f32.partialorder %v39, %v53
    %vm61 = vcmp.lt.f32.partialorder %v40, %v53
    %vm62 = vmand %vm45, %vm54
    %vm63 = vmand %vm46, %vm55
    %vm64 = vmand %vm47, %vm56
    %vm65 = vmand %vm48, %vm57
    %vm66 = vmand %vm49, %vm58
    %vm67 = vmand %vm50, %vm59
    %vm68 = vmand %vm51, %vm60
    %vm69 = vmand %vm52, %vm61
    %v70 = vsel %vm62, 1.0, 0.0
    %v71 = vsel %vm63, 1.0, 0.0
    %v72 = vsel %vm64, 1.0, 0.0
    %v73 = vsel %vm65, 1.0, 0.0
    %v74 = vsel %vm66, 1.0, 0.0
    %v75 = vsel %vm67, 1.0, 0.0
    %v76 = vsel %vm68, 1.0, 0.0
    %v77 = vsel %vm69, 1.0, 0.0
    %v78 = vmul.f32 %v33, 4.0
    %v79 = vmul.f32 %v34, 4.0
    %vm80 = vcmp.ge.f32.partialorder %v43, %v78
    %vm81 = vcmp.ge.f32.partialorder %v43, %v79
    %v82 = vadd.f32 %v78, 4.0
    %v83 = vadd.f32 %v79, 4.0
    %vm84 = vcmp.lt.f32.partialorder %v43, %v82
    %vm85 = vcmp.lt.f32.partialorder %v43, %v83
    %vm86 = vmand %vm80, %vm84
    %vm87 = vmand %vm81, %vm85
    %v88 = vsel %vm86, 1.0, 0.0
    %v89 = vsel %vm87, 1.0, 0.0
    %v90 = vmul.f32 %v33, 16.0
    %vm91 = vcmp.ge.f32.partialorder %v43, %v90
    %v92 = vadd.f32 %v90, 16.0
    %vm93 = vcmp.lt.f32.partialorder %v43, %v92
    %vm94 = vmand %vm91, %vm93
    %v95 = vsel %vm94, 0.0625, 0.0
    %v96 = vld [vmem:[%s0] sm:$0xff]
    %v97 = vld [vmem:[%s0 + $0x8] sm:$0xff]
    %v98 = vld [vmem:[%s0 + $0x10] sm:$0xff]
    %v99 = vld [vmem:[%s0 + $0x18] sm:$0xff]
    %v100 = vld [vmem:[%s0 + $0x20] sm:$0xff]
    %v101 = vld [vmem:[%s0 + $0x28] sm:$0xff]
    %v102 = vld [vmem:[%s0 + $0x30] sm:$0xff]
    %v103 = vld [vmem:[%s0 + $0x38] sm:$0xff]
    %v104 = vld [vmem:[%s1] sm:$0xff]
    %v105 = vld [vmem:[%s1 + $0x8] sm:$0xff]
    %v106 = vld [vmem:[%s1 + $0x10] sm:$0xff]
    %v107 = vld [vmem:[%s1 + $0x18] sm:$0xff]
    %v108 = vld [vmem:[%s1 + $0x20] sm:$0xff]
    %v109 = vld [vmem:[%s1 + $0x28] sm:$0xff]
    %v110 = vld [vmem:[%s1 + $0x30] sm:$0xff]
    %v111 = vld [vmem:[%s1 + $0x38] sm:$0xff]
    %v112 = vld [vmem:[%s1 + $0x40] sm:$0xff]
    %v113 = vld [vmem:[%s1 + $0x48] sm:$0xff]
    %v114 = vld [vmem:[%s1 + $0x50] sm:$0xff]
    %v115 = vld [vmem:[%s1 + $0x58] sm:$0xff]
    %v116 = vld [vmem:[%s1 + $0x60] sm:$0xff]
    %v117 = vld [vmem:[%s1 + $0x68] sm:$0xff]
    %v118 = vld [vmem:[%s1 + $0x70] sm:$0xff]
    %v119 = vld [vmem:[%s1 + $0x78] sm:$0xff]
    %v120 = vld [vmem:[%s1 + $0x80] sm:$0xff]
    %v121 = vld [vmem:[%s1 + $0x88] sm:$0xff]
    %v122 = vld [vmem:[%s1 + $0x90] sm:$0xff]
    %v123 = vld [vmem:[%s1 + $0x98] sm:$0xff]
    %v124 = vld [vmem:[%s1 + $0xa0] sm:$0xff]
    %v125 = vld [vmem:[%s1 + $0xa8] sm:$0xff]
    %v126 = vld [vmem:[%s1 + $0xb0] sm:$0xff]
    %v127 = vld [vmem:[%s1 + $0xb8] sm:$0xff]
    %v128 = vld [vmem:[%s1 + $0xc0] sm:$0xff]
    %v129 = vld [vmem:[%s1 + $0xc8] sm:$0xff]
    %v130 = vld [vmem:[%s1 + $0xd0] sm:$0xff]
    %v131 = vld [vmem:[%s1 + $0xd8] sm:$0xff]
    %v132 = vld [vmem:[%s1 + $0xe0] sm:$0xff]
    %v133 = vld [vmem:[%s1 + $0xe8] sm:$0xff]
    %v134 = vld [vmem:[%s1 + $0xf0] sm:$0xff]
    %v135 = vld [vmem:[%s1 + $0xf8] sm:$0xff]
    %136 = vmatprep.subr.mxu0 0.0
    %137 = vmatpush1.msra.mxu0 %v119
    %138 = vmatprep.subr.mxu0 0.0
    %139 = vmatpush1.msra.mxu0 %v118
    %140 = vmatprep.subr.mxu0 0.0
    %141 = vmatpush1.msra.mxu0 %v117
    %142 = vmatprep.subr.mxu0 0.0
    %143 = vmatpush1.msra.mxu0 %v116
    %144 = vmatprep.subr.mxu0 0.0
    %145 = vmatpush1.msra.mxu0 %v115
    %146 = vmatprep.subr.mxu0 0.0
    %147 = vmatpush1.msra.mxu0 %v114
    %148 = vmatprep.subr.mxu0 0.0
    %149 = vmatpush1.msra.mxu0 %v113
    %150 = vmatprep.subr.mxu0 0.0
    %151 = vmatpush1.msra.mxu0 %v112
    %152 = vmatprep.subr.mxu0 0.0
    %153 = vmatpush1.msra.mxu0 %v111
    %154 = vmatprep.subr.mxu0 0.0
    %155 = vmatpush1.msra.mxu0 %v110
    %156 = vmatprep.subr.mxu0 0.0
    %157 = vmatpush1.msra.mxu0 %v109
    %158 = vmatprep.subr.mxu0 0.0
    %159 = vmatpush1.msra.mxu0 %v108
    %160 = vmatprep.subr.mxu0 0.0
    %161 = vmatpush1.msra.mxu0 %v107
    %162 = vmatprep.subr.mxu0 0.0
    %163 = vmatpush1.msra.mxu0 %v106
    %164 = vmatprep.subr.mxu0 0.0
    %165 = vmatpush1.msra.mxu0 %v105
    %166 = vmatprep.subr.mxu0 0.0
    %167 = vmatpush1.msra.mxu0 %v104
    %168 = vmatprep.subr.mxu0 0.0
    %169 = vmatpush2.msra.mxu0 %v135
    %170 = vmatprep.subr.mxu0 0.0
    %171 = vmatpush2.msra.mxu0 %v134
    %172 = vmatprep.subr.mxu0 0.0
    %173 = vmatpush2.msra.mxu0 %v133
    %174 = vmatprep.subr.mxu0 0.0
    %175 = vmatpush2.msra.mxu0 %v132
    %176 = vmatprep.subr.mxu0 0.0
    %177 = vmatpush2.msra.mxu0 %v131
    %178 = vmatprep.subr.mxu0 0.0
    %179 = vmatpush2.msra.mxu0 %v130
    %180 = vmatprep.subr.mxu0 0.0
    %181 = vmatpush2.msra.mxu0 %v129
    %182 = vmatprep.subr.mxu0 0.0
    %183 = vmatpush2.msra.mxu0 %v128
    %184 = vmatprep.subr.mxu0 0.0
    %185 = vmatpush2.msra.mxu0 %v127
    %186 = vmatprep.subr.mxu0 0.0
    %187 = vmatpush2.msra.mxu0 %v126
    %188 = vmatprep.subr.mxu0 0.0
    %189 = vmatpush2.msra.mxu0 %v125
    %190 = vmatprep.subr.mxu0 0.0
    %191 = vmatpush2.msra.mxu0 %v124
    %192 = vmatprep.subr.mxu0 0.0
    %193 = vmatpush2.msra.mxu0 %v123
    %194 = vmatprep.subr.mxu0 0.0
    %195 = vmatpush2.msra.mxu0 %v122
    %196 = vmatprep.subr.mxu0 0.0
    %197 = vmatpush2.msra.mxu0 %v121
    %198 = vmatprep.subr.mxu0 0.0
    %199 = vmatpush2.msra.mxu0 %v120
    %200 = vmatprep.mubr.f32.mxu0 %v97
    %201 = vmatmul.mubr.f32.gmra.mxu0 %v96
    %v202 = vpop.f32.mrf.mxu0
    %v203 = vadd.f32 0.0, %v202
    %v204 = vpop.f32.mrf.mxu0
    %205 = vmatprep.mubr.f32.mxu0 %v99
    %206 = vmatmul.mubr.f32.gmra.mxu0 %v98
    %v207 = vpop.f32.mrf.mxu0
    %v208 = vadd.f32 0.0, %v207
    %v209 = vpop.f32.mrf.mxu0
    %210 = vmatprep.mubr.f32.mxu0 %v101
    %211 = vmatmul.mubr.f32.gmra.mxu0 %v100
    %v212 = vpop.f32.mrf.mxu0
    %v213 = vadd.f32 0.0, %v212
    %v214 = vpop.f32.mrf.mxu0
    %215 = vmatprep.mubr.f32.mxu0 %v103
    %216 = vmatmul.mubr.f32.gmra.mxu0 %v102
    %v217 = vpop.f32.mrf.mxu0
    %v218 = vadd.f32 0.0, %v217
    %v219 = vpop.f32.mrf.mxu0
    %220 = vdwg.mxu0
    %v221 = vld [vmem:[%s2] sm:$0xff]
    %v222 = vld [vmem:[%s2 + $0x8] sm:$0xff]
    %v223 = vld [vmem:[%s2 + $0x10] sm:$0xff]
    %v224 = vld [vmem:[%s2 + $0x18] sm:$0xff]
    %v225 = vld [vmem:[%s2 + $0x20] sm:$0xff]
    %v226 = vld [vmem:[%s2 + $0x28] sm:$0xff]
    %v227 = vld [vmem:[%s2 + $0x30] sm:$0xff]
    %v228 = vld [vmem:[%s2 + $0x38] sm:$0xff]
    %v229 = vld [vmem:[%s3] sm:$0xff]
    %v230 = vld [vmem:[%s3 + $0x8] sm:$0xff]
    %v231 = vld [vmem:[%s3 + $0x10] sm:$0xff]
    %v232 = vld [vmem:[%s3 + $0x18] sm:$0xff]
    %v233 = vld [vmem:[%s3 + $0x20] sm:$0xff]
    %v234 = vld [vmem:[%s3 + $0x28] sm:$0xff]
    %v235 = vld [vmem:[%s3 + $0x30] sm:$0xff]
    %v236 = vld [vmem:[%s3 + $0x38] sm:$0xff]
    %v237 = vld [vmem:[%s3 + $0x40] sm:$0xff]
    %v238 = vld [vmem:[%s3 + $0x48] sm:$0xff]
    %v239 = vld [vmem:[%s3 + $0x50] sm:$0xff]
    %v240 = vld [vmem:[%s3 + $0x58] sm:$0xff]
    %v241 = vld [vmem:[%s3 + $0x60] sm:$0xff]
    %v242 = vld [vmem:[%s3 + $0x68] sm:$0xff]
    %v243 = vld [vmem:[%s3 + $0x70] sm:$0xff]
    %v244 = vld [vmem:[%s3 + $0x78] sm:$0xff]
    %v245 = vld [vmem:[%s3 + $0x80] sm:$0xff]
    %v246 = vld [vmem:[%s3 + $0x88] sm:$0xff]
    %v247 = vld [vmem:[%s3 + $0x90] sm:$0xff]
    %v248 = vld [vmem:[%s3 + $0x98] sm:$0xff]
    %v249 = vld [vmem:[%s4] sm:$0xff]
    %v250 = vlaneseq
    %v251 = vshrl.u32 %v250, 7
    %v252 = vsub.s32 0, %v251
    %v253 = vrot.slane %v249, %v252
    %vm254 = vcmask 261120
    %v256 = vsel %vm254, %v203, 0
    %v259 = vsel %vm254, %v208, 0
    %v262 = vsel %vm254, %v213, 0
    %v265 = vsel %vm254, %v218, 0
    %267 = vmatprep.subr.mxu0 0.0
    %268 = vmatpush1.msra.mxu0 0.0
    %269 = vmatprep.subr.mxu0 0.0
    %270 = vmatpush1.msra.mxu0 0.0
    %271 = vmatprep.subr.mxu0 0.0
    %272 = vmatpush1.msra.mxu0 0.0
    %273 = vmatprep.subr.mxu0 0.0
    %274 = vmatpush1.msra.mxu0 0.0
    %275 = vmatprep.subr.mxu0 0.0
    %276 = vmatpush1.msra.mxu0 0.0
    %277 = vmatprep.subr.mxu0 0.0
    %278 = vmatpush1.msra.mxu0 0.0
    %279 = vmatprep.subr.mxu0 0.0
    %280 = vmatpush1.msra.mxu0 0.0
    %281 = vmatprep.subr.mxu0 0.0
    %282 = vmatpush1.msra.mxu0 0.0
    %283 = vmatprep.subr.mxu0 0.0
    %284 = vmatpush1.msra.mxu0 0.0
    %285 = vmatprep.subr.mxu0 0.0
    %286 = vmatpush1.msra.mxu0 0.0
    %287 = vmatprep.subr.mxu0 0.0
    %288 = vmatpush1.msra.mxu0 0.0
    %289 = vmatprep.subr.mxu0 0.0
    %290 = vmatpush1.msra.mxu0 0.0
    %291 = vmatprep.subr.mxu0 0.0
    %292 = vmatpush1.msra.mxu0 %v224
    %293 = vmatprep.subr.mxu0 0.0
    %294 = vmatpush1.msra.mxu0 %v223
    %295 = vmatprep.subr.mxu0 0.0
    %296 = vmatpush1.msra.mxu0 %v222
    %297 = vmatprep.subr.mxu0 0.0
    %298 = vmatpush1.msra.mxu0 %v221
    %299 = vmatprep.subr.mxu0 0.0
    %300 = vmatpush2.msra.mxu0 0.0
    %301 = vmatprep.subr.mxu0 0.0
    %302 = vmatpush2.msra.mxu0 0.0
    %303 = vmatprep.subr.mxu0 0.0
    %304 = vmatpush2.msra.mxu0 0.0
    %305 = vmatprep.subr.mxu0 0.0
    %306 = vmatpush2.msra.mxu0 0.0
    %307 = vmatprep.subr.mxu0 0.0
    %308 = vmatpush2.msra.mxu0 0.0
    %309 = vmatprep.subr.mxu0 0.0
    %310 = vmatpush2.msra.mxu0 0.0
    %311 = vmatprep.subr.mxu0 0.0
    %312 = vmatpush2.msra.mxu0 0.0
    %313 = vmatprep.subr.mxu0 0.0
    %314 = vmatpush2.msra.mxu0 0.0
    %315 = vmatprep.subr.mxu0 0.0
    %316 = vmatpush2.msra.mxu0 0.0
    %317 = vmatprep.subr.mxu0 0.0
    %318 = vmatpush2.msra.mxu0 0.0
    %319 = vmatprep.subr.mxu0 0.0
    %320 = vmatpush2.msra.mxu0 0.0
    %321 = vmatprep.subr.mxu0 0.0
    %322 = vmatpush2.msra.mxu0 0.0
    %323 = vmatprep.subr.mxu0 0.0
    %324 = vmatpush2.msra.mxu0 0.0
    %325 = vmatprep.subr.mxu0 0.0
    %326 = vmatpush2.msra.mxu0 0.0
    %327 = vmatprep.subr.mxu0 0.0
    %328 = vmatpush2.msra.mxu0 0.0
    %329 = vmatprep.subr.mxu0 0.0
    %330 = vmatpush2.msra.mxu0 0.0
    %331 = vmatprep.mubr.f32.mxu0 0.0
    %332 = vmatmul.mubr.f32.gmra.mxu0 %v256
    %v333 = vpop.f32.mrf.mxu0
    %v334 = vadd.f32 %v253, %v333
    %v335 = vpop.f32.mrf.mxu0
    %336 = vmatprep.mubr.f32.mxu0 0.0
    %337 = vmatmul.mubr.f32.gmra.mxu0 %v259
    %v338 = vpop.f32.mrf.mxu0
    %v339 = vadd.f32 %v253, %v338
    %v340 = vpop.f32.mrf.mxu0
    %341 = vmatprep.mubr.f32.mxu0 0.0
    %342 = vmatmul.mubr.f32.gmra.mxu0 %v262
    %v343 = vpop.f32.mrf.mxu0
    %v344 = vadd.f32 %v253, %v343
    %v345 = vpop.f32.mrf.mxu0
    %346 = vmatprep.mubr.f32.mxu0 0.0
    %347 = vmatmul.mubr.f32.gmra.mxu0 %v265
    %v348 = vpop.f32.mrf.mxu0
    %v349 = vadd.f32 %v253, %v348
    %v350 = vpop.f32.mrf.mxu0
    %351 = vdwg.mxu0
    %354 = vrot.lane.b32.xlu0 %v334, 96
    %v355 = vpop.permute.xlu0 %354
    %356 = vrot.lane.b32.xlu0 %v339, 96
    %v357 = vpop.permute.xlu0 %356
    %v360 = vsel %vm254, %v355, %v344
    %v361 = vsel %vm254, %v357, %v349
    %362 = vrot.lane.b32.xlu0 %v334, 64
    %v363 = vpop.permute.xlu0 %362
    %364 = vrot.lane.b32.xlu0 %v339, 64
    %v365 = vpop.permute.xlu0 %364
    %370 = vrot.lane.b32.xlu0 %v344, 96
    %v371 = vpop.permute.xlu0 %370
    %372 = vrot.lane.b32.xlu0 %v349, 96
    %v373 = vpop.permute.xlu0 %372
    %v376 = vsel %vm254, %v363, %v371
    %v377 = vsel %vm254, %v365, %v373
    %378 = vrot.lane.b32.xlu0 %v334, 32
    %v379 = vpop.permute.xlu0 %378
    %380 = vrot.lane.b32.xlu0 %v339, 32
    %v381 = vpop.permute.xlu0 %380
    %382 = vrot.lane.b32.xlu0 %v344, 32
    %v383 = vpop.permute.xlu0 %382
    %384 = vrot.lane.b32.xlu0 %v349, 32
    %v385 = vpop.permute.xlu0 %384
    %v390 = vsel %vm254, %v334, %v379
    %v391 = vsel %vm254, %v339, %v381
    %v392 = vsel %vm254, %v344, %v383
    %v393 = vsel %vm254, %v349, %v385
    %v394 = vmul.f32 %v390, %v360
    %v395 = vmul.f32 %v391, %v361
    %v396 = vmul.f32 %v392, %v360
    %v397 = vmul.f32 %v393, %v361
    %vm398 = vcmask 523264
    %v400 = vsel %vm398, %v394, 0
    %v403 = vsel %vm398, %v395, 0
    %v406 = vsel %vm398, %v396, 0
    %v409 = vsel %vm398, %v397, 0
    %411 = vmatprep.subr.mxu0 0.0
    %412 = vmatpush1.msra.mxu0 0.0
    %413 = vmatprep.subr.mxu0 0.0
    %414 = vmatpush1.msra.mxu0 0.0
    %415 = vmatprep.subr.mxu0 0.0
    %416 = vmatpush1.msra.mxu0 0.0
    %417 = vmatprep.subr.mxu0 0.0
    %418 = vmatpush1.msra.mxu0 0.0
    %419 = vmatprep.subr.mxu0 0.0
    %420 = vmatpush1.msra.mxu0 0.0
    %421 = vmatprep.subr.mxu0 0.0
    %422 = vmatpush1.msra.mxu0 0.0
    %423 = vmatprep.subr.mxu0 0.0
    %424 = vmatpush1.msra.mxu0 0.0
    %425 = vmatprep.subr.mxu0 0.0
    %426 = vmatpush1.msra.mxu0 0.0
    %427 = vmatprep.subr.mxu0 0.0
    %428 = vmatpush1.msra.mxu0 %v77
    %429 = vmatprep.subr.mxu0 0.0
    %430 = vmatpush1.msra.mxu0 %v76
    %431 = vmatprep.subr.mxu0 0.0
    %432 = vmatpush1.msra.mxu0 %v75
    %433 = vmatprep.subr.mxu0 0.0
    %434 = vmatpush1.msra.mxu0 %v74
    %435 = vmatprep.subr.mxu0 0.0
    %436 = vmatpush1.msra.mxu0 %v73
    %437 = vmatprep.subr.mxu0 0.0
    %438 = vmatpush1.msra.mxu0 %v72
    %439 = vmatprep.subr.mxu0 0.0
    %440 = vmatpush1.msra.mxu0 %v71
    %441 = vmatprep.subr.mxu0 0.0
    %442 = vmatpush1.msra.mxu0 %v70
    %443 = vmatprep.subr.mxu0 0.0
    %444 = vmatpush2.msra.mxu0 0.0
    %445 = vmatprep.subr.mxu0 0.0
    %446 = vmatpush2.msra.mxu0 0.0
    %447 = vmatprep.subr.mxu0 0.0
    %448 = vmatpush2.msra.mxu0 0.0
    %449 = vmatprep.subr.mxu0 0.0
    %450 = vmatpush2.msra.mxu0 0.0
    %451 = vmatprep.subr.mxu0 0.0
    %452 = vmatpush2.msra.mxu0 0.0
    %453 = vmatprep.subr.mxu0 0.0
    %454 = vmatpush2.msra.mxu0 0.0
    %455 = vmatprep.subr.mxu0 0.0
    %456 = vmatpush2.msra.mxu0 0.0
    %457 = vmatprep.subr.mxu0 0.0
    %458 = vmatpush2.msra.mxu0 0.0
    %459 = vmatprep.subr.mxu0 0.0
    %460 = vmatpush2.msra.mxu0 0.0
    %461 = vmatprep.subr.mxu0 0.0
    %462 = vmatpush2.msra.mxu0 0.0
    %463 = vmatprep.subr.mxu0 0.0
    %464 = vmatpush2.msra.mxu0 0.0
    %465 = vmatprep.subr.mxu0 0.0
    %466 = vmatpush2.msra.mxu0 0.0
    %467 = vmatprep.subr.mxu0 0.0
    %468 = vmatpush2.msra.mxu0 0.0
    %469 = vmatprep.subr.mxu0 0.0
    %470 = vmatpush2.msra.mxu0 0.0
    %471 = vmatprep.subr.mxu0 0.0
    %472 = vmatpush2.msra.mxu0 0.0
    %473 = vmatprep.subr.mxu0 0.0
    %474 = vmatpush2.msra.mxu0 0.0
    %475 = vmatprep.mubr.f32.mxu0 0.0
    %476 = vmatmul.mubr.f32.gmra.mxu0 %v400
    %v477 = vpop.f32.mrf.mxu0
    %v478 = vadd.f32 0.0, %v477
    %v479 = vpop.f32.mrf.mxu0
    %480 = vmatprep.mubr.f32.mxu0 0.0
    %481 = vmatmul.mubr.f32.gmra.mxu0 %v403
    %v482 = vpop.f32.mrf.mxu0
    %v483 = vadd.f32 0.0, %v482
    %v484 = vpop.f32.mrf.mxu0
    %485 = vmatprep.mubr.f32.mxu0 0.0
    %486 = vmatmul.mubr.f32.gmra.mxu0 %v406
    %v487 = vpop.f32.mrf.mxu0
    %v488 = vadd.f32 0.0, %v487
    %v489 = vpop.f32.mrf.mxu0
    %490 = vmatprep.mubr.f32.mxu0 0.0
    %491 = vmatmul.mubr.f32.gmra.mxu0 %v409
    %v492 = vpop.f32.mrf.mxu0
    %v493 = vadd.f32 0.0, %v492
    %v494 = vpop.f32.mrf.mxu0
    %495 = vdwg.mxu0
    %500 = vrot.lane.b32.xlu0 %v478, 120
    %v501 = vpop.permute.xlu0 %500
    %502 = vrot.lane.b32.xlu0 %v483, 120
    %v503 = vpop.permute.xlu0 %502
    %504 = vrot.lane.b32.xlu0 %v488, 120
    %v505 = vpop.permute.xlu0 %504
    %506 = vrot.lane.b32.xlu0 %v493, 120
    %v507 = vpop.permute.xlu0 %506
    %v512 = vmax.f32 %v478, %v501
    %v513 = vmax.f32 %v483, %v503
    %v514 = vmax.f32 %v488, %v505
    %v515 = vmax.f32 %v493, %v507
    %v516 = vsub.f32 %v478, %v512
    %v517 = vsub.f32 %v483, %v513
    %v518 = vsub.f32 %v488, %v514
    %v519 = vsub.f32 %v493, %v515
    %v520 = vmul.f32 %v516, 1.442695
    %v521 = vpow.pop %v520
    %v522 = vmul.f32 %v517, 1.442695
    %v523 = vpow.pop %v522
    %v524 = vmul.f32 %v518, 1.442695
    %v525 = vpow.pop %v524
    %v526 = vmul.f32 %v519, 1.442695
    %v527 = vpow.pop %v526
    %532 = vrot.lane.b32.xlu0 %v512, 8
    %v533 = vpop.permute.xlu0 %532
    %534 = vrot.lane.b32.xlu0 %v513, 8
    %v535 = vpop.permute.xlu0 %534
    %536 = vrot.lane.b32.xlu0 %v514, 8
    %v537 = vpop.permute.xlu0 %536
    %538 = vrot.lane.b32.xlu0 %v515, 8
    %v539 = vpop.permute.xlu0 %538
    %v544 = vsub.f32 %v478, %v533
    %v545 = vsub.f32 %v483, %v535
    %v546 = vsub.f32 %v488, %v537
    %v547 = vsub.f32 %v493, %v539
    %v548 = vmul.f32 %v544, 1.442695
    %v549 = vpow.pop %v548
    %v550 = vmul.f32 %v545, 1.442695
    %v551 = vpow.pop %v550
    %v552 = vmul.f32 %v546, 1.442695
    %v553 = vpow.pop %v552
    %v554 = vmul.f32 %v547, 1.442695
    %v555 = vpow.pop %v554
    %560 = vrot.lane.b32.xlu0 %v549, 120
    %v561 = vpop.permute.xlu0 %560
    %562 = vrot.lane.b32.xlu0 %v551, 120
    %v563 = vpop.permute.xlu0 %562
    %564 = vrot.lane.b32.xlu0 %v553, 120
    %v565 = vpop.permute.xlu0 %564
    %566 = vrot.lane.b32.xlu0 %v555, 120
    %v567 = vpop.permute.xlu0 %566
    %v572 = vadd.f32 %v521, %v561
    %v573 = vadd.f32 %v523, %v563
    %v574 = vadd.f32 %v525, %v565
    %v575 = vadd.f32 %v527, %v567
    %v576 = vrcp.pop %v572
    %v577 = vrcp.pop %v573
    %v578 = vrcp.pop %v574
    %v579 = vrcp.pop %v575
    %v580 = vmul.f32 %v521, %v576
    %v581 = vmul.f32 %v523, %v577
    %v582 = vmul.f32 %v525, %v578
    %v583 = vmul.f32 %v527, %v579
    %588 = vrot.lane.b32.xlu0 %v576, 8
    %v589 = vpop.permute.xlu0 %588
    %590 = vrot.lane.b32.xlu0 %v577, 8
    %v591 = vpop.permute.xlu0 %590
    %592 = vrot.lane.b32.xlu0 %v578, 8
    %v593 = vpop.permute.xlu0 %592
    %594 = vrot.lane.b32.xlu0 %v579, 8
    %v595 = vpop.permute.xlu0 %594
    %v600 = vmul.f32 %v549, %v589
    %v601 = vmul.f32 %v551, %v591
    %v602 = vmul.f32 %v553, %v593
    %v603 = vmul.f32 %v555, %v595
    %vm604 = vcmask 64512
    %v605 = vsel %vm604, %v580, %v600
    %v606 = vsel %vm604, %v581, %v601
    %v607 = vsel %vm604, %v582, %v602
    %v608 = vsel %vm604, %v583, %v603
    %vm609 = vcmask 130048
    %v611 = vsel %vm609, %v605, 0
    %v614 = vsel %vm609, %v606, 0
    %v617 = vsel %vm609, %v607, 0
    %v620 = vsel %vm609, %v608, 0
    %622 = vmatprep.subr.mxu0 0.0
    %623 = vmatpush1.msra.mxu0 0.0
    %624 = vmatprep.subr.mxu0 0.0
    %625 = vmatpush1.msra.mxu0 0.0
    %626 = vmatprep.subr.mxu0 0.0
    %627 = vmatpush1.msra.mxu0 0.0
    %628 = vmatprep.subr.mxu0 0.0
    %629 = vmatpush1.msra.mxu0 0.0
    %630 = vmatprep.subr.mxu0 0.0
    %631 = vmatpush1.msra.mxu0 0.0
    %632 = vmatprep.subr.mxu0 0.0
    %633 = vmatpush1.msra.mxu0 0.0
    %634 = vmatprep.subr.mxu0 0.0
    %635 = vmatpush1.msra.mxu0 0.0
    %636 = vmatprep.subr.mxu0 0.0
    %637 = vmatpush1.msra.mxu0 0.0
    %638 = vmatprep.subr.mxu0 0.0
    %639 = vmatpush1.msra.mxu0 0.0
    %640 = vmatprep.subr.mxu0 0.0
    %641 = vmatpush1.msra.mxu0 0.0
    %642 = vmatprep.subr.mxu0 0.0
    %643 = vmatpush1.msra.mxu0 0.0
    %644 = vmatprep.subr.mxu0 0.0
    %645 = vmatpush1.msra.mxu0 0.0
    %646 = vmatprep.subr.mxu0 0.0
    %647 = vmatpush1.msra.mxu0 0.0
    %648 = vmatprep.subr.mxu0 0.0
    %649 = vmatpush1.msra.mxu0 0.0
    %650 = vmatprep.subr.mxu0 0.0
    %651 = vmatpush1.msra.mxu0 %v89
    %652 = vmatprep.subr.mxu0 0.0
    %653 = vmatpush1.msra.mxu0 %v88
    %654 = vmatprep.subr.mxu0 0.0
    %655 = vmatpush2.msra.mxu0 0.0
    %656 = vmatprep.subr.mxu0 0.0
    %657 = vmatpush2.msra.mxu0 0.0
    %658 = vmatprep.subr.mxu0 0.0
    %659 = vmatpush2.msra.mxu0 0.0
    %660 = vmatprep.subr.mxu0 0.0
    %661 = vmatpush2.msra.mxu0 0.0
    %662 = vmatprep.subr.mxu0 0.0
    %663 = vmatpush2.msra.mxu0 0.0
    %664 = vmatprep.subr.mxu0 0.0
    %665 = vmatpush2.msra.mxu0 0.0
    %666 = vmatprep.subr.mxu0 0.0
    %667 = vmatpush2.msra.mxu0 0.0
    %668 = vmatprep.subr.mxu0 0.0
    %669 = vmatpush2.msra.mxu0 0.0
    %670 = vmatprep.subr.mxu0 0.0
    %671 = vmatpush2.msra.mxu0 0.0
    %672 = vmatprep.subr.mxu0 0.0
    %673 = vmatpush2.msra.mxu0 0.0
    %674 = vmatprep.subr.mxu0 0.0
    %675 = vmatpush2.msra.mxu0 0.0
    %676 = vmatprep.subr.mxu0 0.0
    %677 = vmatpush2.msra.mxu0 0.0
    %678 = vmatprep.subr.mxu0 0.0
    %679 = vmatpush2.msra.mxu0 0.0
    %680 = vmatprep.subr.mxu0 0.0
    %681 = vmatpush2.msra.mxu0 0.0
    %682 = vmatprep.subr.mxu0 0.0
    %683 = vmatpush2.msra.mxu0 0.0
    %684 = vmatprep.subr.mxu0 0.0
    %685 = vmatpush2.msra.mxu0 0.0
    %686 = vmatprep.mubr.f32.mxu0 0.0
    %687 = vmatmul.mubr.f32.gmra.mxu0 %v611
    %v688 = vpop.f32.mrf.mxu0
    %v689 = vadd.f32 0.0, %v688
    %v690 = vpop.f32.mrf.mxu0
    %691 = vmatprep.mubr.f32.mxu0 0.0
    %692 = vmatmul.mubr.f32.gmra.mxu0 %v614
    %v693 = vpop.f32.mrf.mxu0
    %v694 = vadd.f32 0.0, %v693
    %v695 = vpop.f32.mrf.mxu0
    %696 = vmatprep.mubr.f32.mxu0 0.0
    %697 = vmatmul.mubr.f32.gmra.mxu0 %v617
    %v698 = vpop.f32.mrf.mxu0
    %v699 = vadd.f32 0.0, %v698
    %v700 = vpop.f32.mrf.mxu0
    %701 = vmatprep.mubr.f32.mxu0 0.0
    %702 = vmatmul.mubr.f32.gmra.mxu0 %v620
    %v703 = vpop.f32.mrf.mxu0
    %v704 = vadd.f32 0.0, %v703
    %v705 = vpop.f32.mrf.mxu0
    %706 = vdwg.mxu0
    %v707 = vmul.f32 %v689, %v376
    %v708 = vmul.f32 %v694, %v377
    %v709 = vmul.f32 %v699, %v376
    %v710 = vmul.f32 %v704, %v377
    %715 = vrot.lane.b32.xlu0 %v707, 96
    %v716 = vpop.permute.xlu0 %715
    %717 = vrot.lane.b32.xlu0 %v708, 96
    %v718 = vpop.permute.xlu0 %717
    %719 = vrot.lane.b32.xlu0 %v709, 96
    %v720 = vpop.permute.xlu0 %719
    %721 = vrot.lane.b32.xlu0 %v710, 96
    %v722 = vpop.permute.xlu0 %721
    %v727 = vadd.f32 %v707, %v716
    %v728 = vadd.f32 %v708, %v718
    %v729 = vadd.f32 %v709, %v720
    %v730 = vadd.f32 %v710, %v722
    %v731 = vlaneseq
    %v732 = vshrl.u32 %v731, 7
    %v733 = vsub.s32 2, %v732
    %v734 = vrot.slane %v249, %v733
    %v736 = vsel %vm254, %v727, 0
    %v739 = vsel %vm254, %v728, 0
    %v742 = vsel %vm254, %v729, 0
    %v745 = vsel %vm254, %v730, 0
    %747 = vmatprep.subr.mxu0 0.0
    %748 = vmatpush1.msra.mxu0 0.0
    %749 = vmatprep.subr.mxu0 0.0
    %750 = vmatpush1.msra.mxu0 0.0
    %751 = vmatprep.subr.mxu0 0.0
    %752 = vmatpush1.msra.mxu0 0.0
    %753 = vmatprep.subr.mxu0 0.0
    %754 = vmatpush1.msra.mxu0 0.0
    %755 = vmatprep.subr.mxu0 0.0
    %756 = vmatpush1.msra.mxu0 0.0
    %757 = vmatprep.subr.mxu0 0.0
    %758 = vmatpush1.msra.mxu0 0.0
    %759 = vmatprep.subr.mxu0 0.0
    %760 = vmatpush1.msra.mxu0 0.0
    %761 = vmatprep.subr.mxu0 0.0
    %762 = vmatpush1.msra.mxu0 0.0
    %763 = vmatprep.subr.mxu0 0.0
    %764 = vmatpush1.msra.mxu0 0.0
    %765 = vmatprep.subr.mxu0 0.0
    %766 = vmatpush1.msra.mxu0 0.0
    %767 = vmatprep.subr.mxu0 0.0
    %768 = vmatpush1.msra.mxu0 0.0
    %769 = vmatprep.subr.mxu0 0.0
    %770 = vmatpush1.msra.mxu0 0.0
    %771 = vmatprep.subr.mxu0 0.0
    %772 = vmatpush1.msra.mxu0 %v248
    %773 = vmatprep.subr.mxu0 0.0
    %774 = vmatpush1.msra.mxu0 %v247
    %775 = vmatprep.subr.mxu0 0.0
    %776 = vmatpush1.msra.mxu0 %v246
    %777 = vmatprep.subr.mxu0 0.0
    %778 = vmatpush1.msra.mxu0 %v245
    %779 = vmatprep.subr.mxu0 0.0
    %780 = vmatpush2.msra.mxu0 0.0
    %781 = vmatprep.subr.mxu0 0.0
    %782 = vmatpush2.msra.mxu0 0.0
    %783 = vmatprep.subr.mxu0 0.0
    %784 = vmatpush2.msra.mxu0 0.0
    %785 = vmatprep.subr.mxu0 0.0
    %786 = vmatpush2.msra.mxu0 0.0
    %787 = vmatprep.subr.mxu0 0.0
    %788 = vmatpush2.msra.mxu0 0.0
    %789 = vmatprep.subr.mxu0 0.0
    %790 = vmatpush2.msra.mxu0 0.0
    %791 = vmatprep.subr.mxu0 0.0
    %792 = vmatpush2.msra.mxu0 0.0
    %793 = vmatprep.subr.mxu0 0.0
    %794 = vmatpush2.msra.mxu0 0.0
    %795 = vmatprep.subr.mxu0 0.0
    %796 = vmatpush2.msra.mxu0 0.0
    %797 = vmatprep.subr.mxu0 0.0
    %798 = vmatpush2.msra.mxu0 0.0
    %799 = vmatprep.subr.mxu0 0.0
    %800 = vmatpush2.msra.mxu0 0.0
    %801 = vmatprep.subr.mxu0 0.0
    %802 = vmatpush2.msra.mxu0 0.0
    %803 = vmatprep.subr.mxu0 0.0
    %804 = vmatpush2.msra.mxu0 0.0
    %805 = vmatprep.subr.mxu0 0.0
    %806 = vmatpush2.msra.mxu0 0.0
    %807 = vmatprep.subr.mxu0 0.0
    %808 = vmatpush2.msra.mxu0 0.0
    %809 = vmatprep.subr.mxu0 0.0
    %810 = vmatpush2.msra.mxu0 0.0
    %811 = vmatprep.mubr.f32.mxu0 0.0
    %812 = vmatmul.mubr.f32.gmra.mxu0 %v736
    %v813 = vpop.f32.mrf.mxu0
    %v814 = vadd.f32 %v734, %v813
    %v815 = vpop.f32.mrf.mxu0
    %816 = vmatprep.mubr.f32.mxu0 0.0
    %817 = vmatmul.mubr.f32.gmra.mxu0 %v739
    %v818 = vpop.f32.mrf.mxu0
    %v819 = vadd.f32 %v734, %v818
    %v820 = vpop.f32.mrf.mxu0
    %821 = vmatprep.mubr.f32.mxu0 0.0
    %822 = vmatmul.mubr.f32.gmra.mxu0 %v742
    %v823 = vpop.f32.mrf.mxu0
    %v824 = vadd.f32 %v734, %v823
    %v825 = vpop.f32.mrf.mxu0
    %826 = vmatprep.mubr.f32.mxu0 0.0
    %827 = vmatmul.mubr.f32.gmra.mxu0 %v745
    %v828 = vpop.f32.mrf.mxu0
    %v829 = vadd.f32 %v734, %v828
    %v830 = vpop.f32.mrf.mxu0
    %831 = vdwg.mxu0
    %v832 = vadd.f32 %v203, %v814
    %v833 = vadd.f32 %v208, %v819
    %v834 = vadd.f32 %v213, %v824
    %v835 = vadd.f32 %v218, %v829
    %v836 = vsel %vm254, %v832, 0.0
    %837 = vadd.xlane.f32.xlu0 %v836
    %v838 = vpop.xlane.xlu0 %837
    %v839 = vsel %vm254, %v833, 0.0
    %840 = vadd.xlane.f32.xlu0 %v839
    %v841 = vpop.xlane.xlu0 %840
    %v842 = vsel %vm254, %v834, 0.0
    %843 = vadd.xlane.f32.xlu0 %v842
    %v844 = vpop.xlane.xlu0 %843
    %v845 = vsel %vm254, %v835, 0.0
    %846 = vadd.xlane.f32.xlu0 %v845
    %v847 = vpop.xlane.xlu0 %846
    %v848 = vrcp.pop 32.0
    %v849 = vmul.f32 %v838, %v848
    %v850 = vmul.f32 %v841, %v848
    %v851 = vmul.f32 %v844, %v848
    %v852 = vmul.f32 %v847, %v848
    %v853 = vsub.f32 %v832, %v849
    %v854 = vsub.f32 %v833, %v850
    %v855 = vsub.f32 %v834, %v851
    %v856 = vsub.f32 %v835, %v852
    %v857 = vmul.f32 %v853, %v853
    %v858 = vmul.f32 %v854, %v854
    %v859 = vmul.f32 %v855, %v855
    %v860 = vmul.f32 %v856, %v856
    %v861 = vsel %vm254, %v857, 0.0
    %862 = vadd.xlane.f32.xlu0 %v861
    %v863 = vpop.xlane.xlu0 %862
    %v864 = vsel %vm254, %v858, 0.0
    %865 = vadd.xlane.f32.xlu0 %v864
    %v866 = vpop.xlane.xlu0 %865
    %v867 = vsel %vm254, %v859, 0.0
    %868 = vadd.xlane.f32.xlu0 %v867
    %v869 = vpop.xlane.xlu0 %868
    %v870 = vsel %vm254, %v860, 0.0
    %871 = vadd.xlane.f32.xlu0 %v870
    %v872 = vpop.xlane.xlu0 %871
    %v873 = vmul.f32 %v863, %v848
    %v874 = vmul.f32 %v866, %v848
    %v875 = vmul.f32 %v869, %v848
    %v876 = vmul.f32 %v872, %v848
    %v877 = vadd.f32 %v873, 1e-05
    %v878 = vadd.f32 %v874, 1e-05
    %v879 = vadd.f32 %v875, 1e-05
    %v880 = vadd.f32 %v876, 1e-05
    %v881 = vrsqrt.pop %v877
    %v882 = vrsqrt.pop %v878
    %v883 = vrsqrt.pop %v879
    %v884 = vrsqrt.pop %v880
    %v885 = vmul.f32 %v853, %v881
    %v886 = vmul.f32 %v854, %v882
    %v887 = vmul.f32 %v855, %v883
    %v888 = vmul.f32 %v856, %v884
    %v889 = vlaneseq
    %v890 = vshrl.u32 %v889, 7
    %v891 = vsub.s32 3, %v890
    %v892 = vrot.slane %v249, %v891
    %v893 = vmul.f32 %v885, %v892
    %v894 = vmul.f32 %v886, %v892
    %v895 = vmul.f32 %v887, %v892
    %v896 = vmul.f32 %v888, %v892
    %v897 = vlaneseq
    %v898 = vshrl.u32 %v897, 7
    %v899 = vsub.s32 4, %v898
    %v900 = vrot.slane %v249, %v899
    %v901 = vadd.f32 %v893, %v900
    %v902 = vadd.f32 %v894, %v900
    %v903 = vadd.f32 %v895, %v900
    %v904 = vadd.f32 %v896, %v900
    %v905 = vlaneseq
    %v906 = vshrl.u32 %v905, 7
    %v907 = vsub.s32 1, %v906
    %v908 = vrot.slane %v249, %v907
    %v910 = vsel %vm254, %v901, 0
    %v913 = vsel %vm254, %v902, 0
    %v916 = vsel %vm254, %v903, 0
    %v919 = vsel %vm254, %v904, 0
    %921 = vmatprep.subr.mxu0 0.0
    %922 = vmatpush1.msra.mxu0 0.0
    %923 = vmatprep.subr.mxu0 0.0
    %924 = vmatpush1.msra.mxu0 0.0
    %925 = vmatprep.subr.mxu0 0.0
    %926 = vmatpush1.msra.mxu0 0.0
    %927 = vmatprep.subr.mxu0 0.0
    %928 = vmatpush1.msra.mxu0 0.0
    %929 = vmatprep.subr.mxu0 0.0
    %930 = vmatpush1.msra.mxu0 0.0
    %931 = vmatprep.subr.mxu0 0.0
    %932 = vmatpush1.msra.mxu0 0.0
    %933 = vmatprep.subr.mxu0 0.0
    %934 = vmatpush1.msra.mxu0 0.0
    %935 = vmatprep.subr.mxu0 0.0
    %936 = vmatpush1.msra.mxu0 0.0
    %937 = vmatprep.subr.mxu0 0.0
    %938 = vmatpush1.msra.mxu0 0.0
    %939 = vmatprep.subr.mxu0 0.0
    %940 = vmatpush1.msra.mxu0 0.0
    %941 = vmatprep.subr.mxu0 0.0
    %942 = vmatpush1.msra.mxu0 0.0
    %943 = vmatprep.subr.mxu0 0.0
    %944 = vmatpush1.msra.mxu0 0.0
    %945 = vmatprep.subr.mxu0 0.0
    %946 = vmatpush1.msra.mxu0 %v228
    %947 = vmatprep.subr.mxu0 0.0
    %948 = vmatpush1.msra.mxu0 %v227
    %949 = vmatprep.subr.mxu0 0.0
    %950 = vmatpush1.msra.mxu0 %v226
    %951 = vmatprep.subr.mxu0 0.0
    %952 = vmatpush1.msra.mxu0 %v225
    %953 = vmatprep.subr.mxu0 0.0
    %954 = vmatpush2.msra.mxu0 0.0
    %955 = vmatprep.subr.mxu0 0.0
    %956 = vmatpush2.msra.mxu0 0.0
    %957 = vmatprep.subr.mxu0 0.0
    %958 = vmatpush2.msra.mxu0 0.0
    %959 = vmatprep.subr.mxu0 0.0
    %960 = vmatpush2.msra.mxu0 0.0
    %961 = vmatprep.subr.mxu0 0.0
    %962 = vmatpush2.msra.mxu0 0.0
    %963 = vmatprep.subr.mxu0 0.0
    %964 = vmatpush2.msra.mxu0 0.0
    %965 = vmatprep.subr.mxu0 0.0
    %966 = vmatpush2.msra.mxu0 0.0
    %967 = vmatprep.subr.mxu0 0.0
    %968 = vmatpush2.msra.mxu0 0.0
    %969 = vmatprep.subr.mxu0 0.0
    %970 = vmatpush2.msra.mxu0 0.0
    %971 = vmatprep.subr.mxu0 0.0
    %972 = vmatpush2.msra.mxu0 0.0
    %973 = vmatprep.subr.mxu0 0.0
    %974 = vmatpush2.msra.mxu0 0.0
    %975 = vmatprep.subr.mxu0 0.0
    %976 = vmatpush2.msra.mxu0 0.0
    %977 = vmatprep.subr.mxu0 0.0
    %978 = vmatpush2.msra.mxu0 0.0
    %979 = vmatprep.subr.mxu0 0.0
    %980 = vmatpush2.msra.mxu0 0.0
    %981 = vmatprep.subr.mxu0 0.0
    %982 = vmatpush2.msra.mxu0 0.0
    %983 = vmatprep.subr.mxu0 0.0
    %984 = vmatpush2.msra.mxu0 0.0
    %985 = vmatprep.mubr.f32.mxu0 0.0
    %986 = vmatmul.mubr.f32.gmra.mxu0 %v910
    %v987 = vpop.f32.mrf.mxu0
    %v988 = vadd.f32 %v908, %v987
    %v989 = vpop.f32.mrf.mxu0
    %990 = vmatprep.mubr.f32.mxu0 0.0
    %991 = vmatmul.mubr.f32.gmra.mxu0 %v913
    %v992 = vpop.f32.mrf.mxu0
    %v993 = vadd.f32 %v908, %v992
    %v994 = vpop.f32.mrf.mxu0
    %995 = vmatprep.mubr.f32.mxu0 0.0
    %996 = vmatmul.mubr.f32.gmra.mxu0 %v916
    %v997 = vpop.f32.mrf.mxu0
    %v998 = vadd.f32 %v908, %v997
    %v999 = vpop.f32.mrf.mxu0
    %1000 = vmatprep.mubr.f32.mxu0 0.0
    %1001 = vmatmul.mubr.f32.gmra.mxu0 %v919
    %v1002 = vpop.f32.mrf.mxu0
    %v1003 = vadd.f32 %v908, %v1002
    %v1004 = vpop.f32.mrf.mxu0
    %1005 = vdwg.mxu0
    %v1006 = vmul.f32 %v988, 0.5
    %v1007 = vmul.f32 %v993, 0.5
    %v1008 = vmul.f32 %v998, 0.5
    %v1009 = vmul.f32 %v1003, 0.5
    %v1010 = vmul.f32 %v988, 0.70710677
    %v1011 = vmul.f32 %v993, 0.70710677
    %v1012 = vmul.f32 %v998, 0.70710677
    %v1013 = vmul.f32 %v1003, 0.70710677
    %v1014 = vmax.f32 %v1010, -4.0
    %v1015 = vmax.f32 %v1011, -4.0
    %v1016 = vmax.f32 %v1012, -4.0
    %v1017 = vmax.f32 %v1013, -4.0
    %v1018 = vmin.f32 %v1014, 4.0
    %v1019 = vmin.f32 %v1015, 4.0
    %v1020 = vmin.f32 %v1016, 4.0
    %v1021 = vmin.f32 %v1017, 4.0
    %v1022 = vmul.f32 %v1018, %v1018
    %v1023 = vmul.f32 %v1019, %v1019
    %v1024 = vmul.f32 %v1020, %v1020
    %v1025 = vmul.f32 %v1021, %v1021
    %v1026 = vmul.f32 %v1022, -2.7261424e-10
    %v1027 = vmul.f32 %v1023, -2.7261424e-10
    %v1028 = vmul.f32 %v1024, -2.7261424e-10
    %v1029 = vmul.f32 %v1025, -2.7261424e-10
    %v1030 = vadd.f32 %v1026, 2.7706815e-08
    %v1031 = vadd.f32 %v1027, 2.7706815e-08
    %v1032 = vadd.f32 %v1028, 2.7706815e-08
    %v1033 = vadd.f32 %v1029, 2.7706815e-08
    %v1034 = vmul.f32 %v1022, %v1030
    %v1035 = vmul.f32 %v1023, %v1031
    %v1036 = vmul.f32 %v1024, %v1032
    %v1037 = vmul.f32 %v1025, %v1033
    %v1038 = vadd.f32 %v1034, -2.101024e-06
    %v1039 = vadd.f32 %v1035, -2.101024e-06
    %v1040 = vadd.f32 %v1036, -2.101024e-06
    %v1041 = vadd.f32 %v1037, -2.101024e-06
    %v1042 = vmul.f32 %v1022, %v1038
    %v1043 = vmul.f32 %v1023, %v1039
    %v1044 = vmul.f32 %v1024, %v1040
    %v1045 = vmul.f32 %v1025, %v1041
    %v1046 = vadd.f32 %v1042, -5.6925062e-05
    %v1047 = vadd.f32 %v1043, -5.6925062e-05
    %v1048 = vadd.f32 %v1044, -5.6925062e-05
    %v1049 = vadd.f32 %v1045, -5.6925062e-05
    %v1050 = vmul.f32 %v1022, %v1046
    %v1051 = vmul.f32 %v1023, %v1047
    %v1052 = vmul.f32 %v1024, %v1048
    %v1053 = vmul.f32 %v1025, %v1049
    %v1054 = vadd.f32 %v1050, -0.00073499064
    %v1055 = vadd.f32 %v1051, -0.00073499064
    %v1056 = vadd.f32 %v1052, -0.00073499064
    %v1057 = vadd.f32 %v1053, -0.00073499064
    %v1058 = vmul.f32 %v1022, %v1054
    %v1059 = vmul.f32 %v1023, %v1055
    %v1060 = vmul.f32 %v1024, %v1056
    %v1061 = vmul.f32 %v1025, %v1057
    %v1062 = vadd.f32 %v1058, -0.0029546
    %v1063 = vadd.f32 %v1059, -0.0029546
    %v1064 = vadd.f32 %v1060, -0.0029546
    %v1065 = vadd.f32 %v1061, -0.0029546
    %v1066 = vmul.f32 %v1022, %v1062
    %v1067 = vmul.f32 %v1023, %v1063
    %v1068 = vmul.f32 %v1024, %v1064
    %v1069 = vmul.f32 %v1025, %v1065
    %v1070 = vadd.f32 %v1066, -0.016096033
    %v1071 = vadd.f32 %v1067, -0.016096033
    %v1072 = vadd.f32 %v1068, -0.016096033
    %v1073 = vadd.f32 %v1069, -0.016096033
    %v1074 = vmul.f32 %v1018, %v1070
    %v1075 = vmul.f32 %v1019, %v1071
    %v1076 = vmul.f32 %v1020, %v1072
    %v1077 = vmul.f32 %v1021, %v1073
    %v1078 = vmul.f32 %v1022, -1.45660715e-05
    %v1079 = vmul.f32 %v1023, -1.45660715e-05
    %v1080 = vmul.f32 %v1024, -1.45660715e-05
    %v1081 = vmul.f32 %v1025, -1.45660715e-05
    %v1082 = vadd.f32 %v1078, -0.00021337405
    %v1083 = vadd.f32 %v1079, -0.00021337405
    %v1084 = vadd.f32 %v1080, -0.00021337405
    %v1085 = vadd.f32 %v1081, -0.00021337405
    %v1086 = vmul.f32 %v1022, %v1082
    %v1087 = vmul.f32 %v1023, %v1083
    %v1088 = vmul.f32 %v1024, %v1084
    %v1089 = vmul.f32 %v1025, %v1085
    %v1090 = vadd.f32 %v1086, -0.001682827
    %v1091 = vadd.f32 %v1087, -0.001682827
    %v1092 = vadd.f32 %v1088, -0.001682827
    %v1093 = vadd.f32 %v1089, -0.001682827
    %v1094 = vmul.f32 %v1022, %v1090
    %v1095 = vmul.f32 %v1023, %v1091
    %v1096 = vmul.f32 %v1024, %v1092
    %v1097 = vmul.f32 %v1025, %v1093
    %v1098 = vadd.f32 %v1094, -0.0073733293
    %v1099 = vadd.f32 %v1095, -0.0073733293
    %v1100 = vadd.f32 %v1096, -0.0073733293
    %v1101 = vadd.f32 %v1097, -0.0073733293
    %v1102 = vmul.f32 %v1022, %v1098
    %v1103 = vmul.f32 %v1023, %v1099
    %v1104 = vmul.f32 %v1024, %v1100
    %v1105 = vmul.f32 %v1025, %v1101
    %v1106 = vadd.f32 %v1102, -0.014264739
    %v1107 = vadd.f32 %v1103, -0.014264739
    %v1108 = vadd.f32 %v1104, -0.014264739
    %v1109 = vadd.f32 %v1105, -0.014264739
    %v1110 = vrcp.pop %v1106
    %v1111 = vmul.f32 %v1074, %v1110
    %v1112 = vrcp.pop %v1107
    %v1113 = vmul.f32 %v1075, %v1112
    %v1114 = vrcp.pop %v1108
    %v1115 = vmul.f32 %v1076, %v1114
    %v1116 = vrcp.pop %v1109
    %v1117 = vmul.f32 %v1077, %v1116
    %v1118 = vadd.f32 %v1111, 1.0
    %v1119 = vadd.f32 %v1113, 1.0
    %v1120 = vadd.f32 %v1115, 1.0
    %v1121 = vadd.f32 %v1117, 1.0
    %v1122 = vmul.f32 %v1006, %v1118
    %v1123 = vmul.f32 %v1007, %v1119
    %v1124 = vmul.f32 %v1008, %v1120
    %v1125 = vmul.f32 %v1009, %v1121
    %v1126 = vlaneseq
    %v1127 = vshrl.u32 %v1126, 7
    %v1128 = vsub.s32 7, %v1127
    %v1129 = vrot.slane %v249, %v1128
    %1130 = vmatprep.subr.mxu0 0.0
    %1131 = vmatpush1.msra.mxu0 %v244
    %1132 = vmatprep.subr.mxu0 0.0
    %1133 = vmatpush1.msra.mxu0 %v243
    %1134 = vmatprep.subr.mxu0 0.0
    %1135 = vmatpush1.msra.mxu0 %v242
    %1136 = vmatprep.subr.mxu0 0.0
    %1137 = vmatpush1.msra.mxu0 %v241
    %1138 = vmatprep.subr.mxu0 0.0
    %1139 = vmatpush1.msra.mxu0 %v240
    %1140 = vmatprep.subr.mxu0 0.0
    %1141 = vmatpush1.msra.mxu0 %v239
    %1142 = vmatprep.subr.mxu0 0.0
    %1143 = vmatpush1.msra.mxu0 %v238
    %1144 = vmatprep.subr.mxu0 0.0
    %1145 = vmatpush1.msra.mxu0 %v237
    %1146 = vmatprep.subr.mxu0 0.0
    %1147 = vmatpush1.msra.mxu0 %v236
    %1148 = vmatprep.subr.mxu0 0.0
    %1149 = vmatpush1.msra.mxu0 %v235
    %1150 = vmatprep.subr.mxu0 0.0
    %1151 = vmatpush1.msra.mxu0 %v234
    %1152 = vmatprep.subr.mxu0 0.0
    %1153 = vmatpush1.msra.mxu0 %v233
    %1154 = vmatprep.subr.mxu0 0.0
    %1155 = vmatpush1.msra.mxu0 %v232
    %1156 = vmatprep.subr.mxu0 0.0
    %1157 = vmatpush1.msra.mxu0 %v231
    %1158 = vmatprep.subr.mxu0 0.0
    %1159 = vmatpush1.msra.mxu0 %v230
    %1160 = vmatprep.subr.mxu0 0.0
    %1161 = vmatpush1.msra.mxu0 %v229
    %1162 = vmatprep.subr.mxu0 0.0
    %1163 = vmatpush2.msra.mxu0 0.0
    %1164 = vmatprep.subr.mxu0 0.0
    %1165 = vmatpush2.msra.mxu0 0.0
    %1166 = vmatprep.subr.mxu0 0.0
    %1167 = vmatpush2.msra.mxu0 0.0
    %1168 = vmatprep.subr.mxu0 0.0
    %1169 = vmatpush2.msra.mxu0 0.0
    %1170 = vmatprep.subr.mxu0 0.0
    %1171 = vmatpush2.msra.mxu0 0.0
    %1172 = vmatprep.subr.mxu0 0.0
    %1173 = vmatpush2.msra.mxu0 0.0
    %1174 = vmatprep.subr.mxu0 0.0
    %1175 = vmatpush2.msra.mxu0 0.0
    %1176 = vmatprep.subr.mxu0 0.0
    %1177 = vmatpush2.msra.mxu0 0.0
    %1178 = vmatprep.subr.mxu0 0.0
    %1179 = vmatpush2.msra.mxu0 0.0
    %1180 = vmatprep.subr.mxu0 0.0
    %1181 = vmatpush2.msra.mxu0 0.0
    %1182 = vmatprep.subr.mxu0 0.0
    %1183 = vmatpush2.msra.mxu0 0.0
    %1184 = vmatprep.subr.mxu0 0.0
    %1185 = vmatpush2.msra.mxu0 0.0
    %1186 = vmatprep.subr.mxu0 0.0
    %1187 = vmatpush2.msra.mxu0 0.0
    %1188 = vmatprep.subr.mxu0 0.0
    %1189 = vmatpush2.msra.mxu0 0.0
    %1190 = vmatprep.subr.mxu0 0.0
    %1191 = vmatpush2.msra.mxu0 0.0
    %1192 = vmatprep.subr.mxu0 0.0
    %1193 = vmatpush2.msra.mxu0 0.0
    %1194 = vmatprep.mubr.f32.mxu0 0.0
    %1195 = vmatmul.mubr.f32.gmra.mxu0 %v1122
    %v1196 = vpop.f32.mrf.mxu0
    %v1197 = vadd.f32 %v1129, %v1196
    %v1198 = vpop.f32.mrf.mxu0
    %1199 = vmatprep.mubr.f32.mxu0 0.0
    %1200 = vmatmul.mubr.f32.gmra.mxu0 %v1123
    %v1201 = vpop.f32.mrf.mxu0
    %v1202 = vadd.f32 %v1129, %v1201
    %v1203 = vpop.f32.mrf.mxu0
    %1204 = vmatprep.mubr.f32.mxu0 0.0
    %1205 = vmatmul.mubr.f32.gmra.mxu0 %v1124
    %v1206 = vpop.f32.mrf.mxu0
    %v1207 = vadd.f32 %v1129, %v1206
    %v1208 = vpop.f32.mrf.mxu0
    %1209 = vmatprep.mubr.f32.mxu0 0.0
    %1210 = vmatmul.mubr.f32.gmra.mxu0 %v1125
    %v1211 = vpop.f32.mrf.mxu0
    %v1212 = vadd.f32 %v1129, %v1211
    %v1213 = vpop.f32.mrf.mxu0
    %1214 = vdwg.mxu0
    %v1215 = vadd.f32 %v901, %v1197
    %v1216 = vadd.f32 %v902, %v1202
    %v1217 = vadd.f32 %v903, %v1207
    %v1218 = vadd.f32 %v904, %v1212
    %v1219 = vsel %vm254, %v1215, 0.0
    %1220 = vadd.xlane.f32.xlu0 %v1219
    %v1221 = vpop.xlane.xlu0 %1220
    %v1222 = vsel %vm254, %v1216, 0.0
    %1223 = vadd.xlane.f32.xlu0 %v1222
    %v1224 = vpop.xlane.xlu0 %1223
    %v1225 = vsel %vm254, %v1217, 0.0
    %1226 = vadd.xlane.f32.xlu0 %v1225
    %v1227 = vpop.xlane.xlu0 %1226
    %v1228 = vsel %vm254, %v1218, 0.0
    %1229 = vadd.xlane.f32.xlu0 %v1228
    %v1230 = vpop.xlane.xlu0 %1229
    %v1231 = vmul.f32 %v1221, %v848
    %v1232 = vmul.f32 %v1224, %v848
    %v1233 = vmul.f32 %v1227, %v848
    %v1234 = vmul.f32 %v1230, %v848
    %v1235 = vsub.f32 %v1215, %v1231
    %v1236 = vsub.f32 %v1216, %v1232
    %v1237 = vsub.f32 %v1217, %v1233
    %v1238 = vsub.f32 %v1218, %v1234
    %v1239 = vmul.f32 %v1235, %v1235
    %v1240 = vmul.f32 %v1236, %v1236
    %v1241 = vmul.f32 %v1237, %v1237
    %v1242 = vmul.f32 %v1238, %v1238
    %v1243 = vsel %vm254, %v1239, 0.0
    %1244 = vadd.xlane.f32.xlu0 %v1243
    %v1245 = vpop.xlane.xlu0 %1244
    %v1246 = vsel %vm254, %v1240, 0.0
    %1247 = vadd.xlane.f32.xlu0 %v1246
    %v1248 = vpop.xlane.xlu0 %1247
    %v1249 = vsel %vm254, %v1241, 0.0
    %1250 = vadd.xlane.f32.xlu0 %v1249
    %v1251 = vpop.xlane.xlu0 %1250
    %v1252 = vsel %vm254, %v1242, 0.0
    %1253 = vadd.xlane.f32.xlu0 %v1252
    %v1254 = vpop.xlane.xlu0 %1253
    %v1255 = vmul.f32 %v1245, %v848
    %v1256 = vmul.f32 %v1248, %v848
    %v1257 = vmul.f32 %v1251, %v848
    %v1258 = vmul.f32 %v1254, %v848
    %v1259 = vadd.f32 %v1255, 1e-05
    %v1260 = vadd.f32 %v1256, 1e-05
    %v1261 = vadd.f32 %v1257, 1e-05
    %v1262 = vadd.f32 %v1258, 1e-05
    %v1263 = vrsqrt.pop %v1259
    %v1264 = vrsqrt.pop %v1260
    %v1265 = vrsqrt.pop %v1261
    %v1266 = vrsqrt.pop %v1262
    %v1267 = vmul.f32 %v1235, %v1263
    %v1268 = vmul.f32 %v1236, %v1264
    %v1269 = vmul.f32 %v1237, %v1265
    %v1270 = vmul.f32 %v1238, %v1266
    %v1271 = vlaneseq
    %v1272 = vshrl.u32 %v1271, 7
    %v1273 = vsub.s32 5, %v1272
    %v1274 = vrot.slane %v249, %v1273
    %v1275 = vmul.f32 %v1267, %v1274
    %v1276 = vmul.f32 %v1268, %v1274
    %v1277 = vmul.f32 %v1269, %v1274
    %v1278 = vmul.f32 %v1270, %v1274
    %v1279 = vlaneseq
    %v1280 = vshrl.u32 %v1279, 7
    %v1281 = vsub.s32 6, %v1280
    %v1282 = vrot.slane %v249, %v1281
    %v1283 = vadd.f32 %v1275, %v1282
    %v1284 = vadd.f32 %v1276, %v1282
    %v1285 = vadd.f32 %v1277, %v1282
    %v1286 = vadd.f32 %v1278, %v1282
    %s1287 = scalar_lea.vmem %s2, 64
    %v1288 = vld [vmem:[%s1287] sm:$0xff]
    %v1289 = vld [vmem:[%s1287 + $0x8] sm:$0xff]
    %v1290 = vld [vmem:[%s1287 + $0x10] sm:$0xff]
    %v1291 = vld [vmem:[%s1287 + $0x18] sm:$0xff]
    %v1292 = vld [vmem:[%s1287 + $0x20] sm:$0xff]
    %v1293 = vld [vmem:[%s1287 + $0x28] sm:$0xff]
    %v1294 = vld [vmem:[%s1287 + $0x30] sm:$0xff]
    %v1295 = vld [vmem:[%s1287 + $0x38] sm:$0xff]
    %s1296 = scalar_lea.vmem %s3, 160
    %v1297 = vld [vmem:[%s1296] sm:$0xff]
    %v1298 = vld [vmem:[%s1296 + $0x8] sm:$0xff]
    %v1299 = vld [vmem:[%s1296 + $0x10] sm:$0xff]
    %v1300 = vld [vmem:[%s1296 + $0x18] sm:$0xff]
    %v1301 = vld [vmem:[%s1296 + $0x20] sm:$0xff]
    %v1302 = vld [vmem:[%s1296 + $0x28] sm:$0xff]
    %v1303 = vld [vmem:[%s1296 + $0x30] sm:$0xff]
    %v1304 = vld [vmem:[%s1296 + $0x38] sm:$0xff]
    %v1305 = vld [vmem:[%s1296 + $0x40] sm:$0xff]
    %v1306 = vld [vmem:[%s1296 + $0x48] sm:$0xff]
    %v1307 = vld [vmem:[%s1296 + $0x50] sm:$0xff]
    %v1308 = vld [vmem:[%s1296 + $0x58] sm:$0xff]
    %v1309 = vld [vmem:[%s1296 + $0x60] sm:$0xff]
    %v1310 = vld [vmem:[%s1296 + $0x68] sm:$0xff]
    %v1311 = vld [vmem:[%s1296 + $0x70] sm:$0xff]
    %v1312 = vld [vmem:[%s1296 + $0x78] sm:$0xff]
    %v1313 = vld [vmem:[%s1296 + $0x80] sm:$0xff]
    %v1314 = vld [vmem:[%s1296 + $0x88] sm:$0xff]
    %v1315 = vld [vmem:[%s1296 + $0x90] sm:$0xff]
    %v1316 = vld [vmem:[%s1296 + $0x98] sm:$0xff]
    %s1317 = scalar_lea.vmem %s4, 8
    %v1318 = vld [vmem:[%s1317] sm:$0xff]
    %v1319 = vlaneseq
    %v1320 = vshrl.u32 %v1319, 7
    %v1321 = vsub.s32 0, %v1320
    %v1322 = vrot.slane %v1318, %v1321
    %v1324 = vsel %vm254, %v1283, 0
    %v1327 = vsel %vm254, %v1284, 0
    %v1330 = vsel %vm254, %v1285, 0
    %v1333 = vsel %vm254, %v1286, 0
    %1335 = vmatprep.subr.mxu0 0.0
    %1336 = vmatpush1.msra.mxu0 0.0
    %1337 = vmatprep.subr.mxu0 0.0
    %1338 = vmatpush1.msra.mxu0 0.0
    %1339 = vmatprep.subr.mxu0 0.0
    %1340 = vmatpush1.msra.mxu0 0.0
    %1341 = vmatprep.subr.mxu0 0.0
    %1342 = vmatpush1.msra.mxu0 0.0
    %1343 = vmatprep.subr.mxu0 0.0
    %1344 = vmatpush1.msra.mxu0 0.0
    %1345 = vmatprep.subr.mxu0 0.0
    %1346 = vmatpush1.msra.mxu0 0.0
    %1347 = vmatprep.subr.mxu0 0.0
    %1348 = vmatpush1.msra.mxu0 0.0
    %1349 = vmatprep.subr.mxu0 0.0
    %1350 = vmatpush1.msra.mxu0 0.0
    %1351 = vmatprep.subr.mxu0 0.0
    %1352 = vmatpush1.msra.mxu0 0.0
    %1353 = vmatprep.subr.mxu0 0.0
    %1354 = vmatpush1.msra.mxu0 0.0
    %1355 = vmatprep.subr.mxu0 0.0
    %1356 = vmatpush1.msra.mxu0 0.0
    %1357 = vmatprep.subr.mxu0 0.0
    %1358 = vmatpush1.msra.mxu0 0.0
    %1359 = vmatprep.subr.mxu0 0.0
    %1360 = vmatpush1.msra.mxu0 %v1291
    %1361 = vmatprep.subr.mxu0 0.0
    %1362 = vmatpush1.msra.mxu0 %v1290
    %1363 = vmatprep.subr.mxu0 0.0
    %1364 = vmatpush1.msra.mxu0 %v1289
    %1365 = vmatprep.subr.mxu0 0.0
    %1366 = vmatpush1.msra.mxu0 %v1288
    %1367 = vmatprep.subr.mxu0 0.0
    %1368 = vmatpush2.msra.mxu0 0.0
    %1369 = vmatprep.subr.mxu0 0.0
    %1370 = vmatpush2.msra.mxu0 0.0
    %1371 = vmatprep.subr.mxu0 0.0
    %1372 = vmatpush2.msra.mxu0 0.0
    %1373 = vmatprep.subr.mxu0 0.0
    %1374 = vmatpush2.msra.mxu0 0.0
    %1375 = vmatprep.subr.mxu0 0.0
    %1376 = vmatpush2.msra.mxu0 0.0
    %1377 = vmatprep.subr.mxu0 0.0
    %1378 = vmatpush2.msra.mxu0 0.0
    %1379 = vmatprep.subr.mxu0 0.0
    %1380 = vmatpush2.msra.mxu0 0.0
    %1381 = vmatprep.subr.mxu0 0.0
    %1382 = vmatpush2.msra.mxu0 0.0
    %1383 = vmatprep.subr.mxu0 0.0
    %1384 = vmatpush2.msra.mxu0 0.0
    %1385 = vmatprep.subr.mxu0 0.0
    %1386 = vmatpush2.msra.mxu0 0.0
    %1387 = vmatprep.subr.mxu0 0.0
    %1388 = vmatpush2.msra.mxu0 0.0
    %1389 = vmatprep.subr.mxu0 0.0
    %1390 = vmatpush2.msra.mxu0 0.0
    %1391 = vmatprep.subr.mxu0 0.0
    %1392 = vmatpush2.msra.mxu0 0.0
    %1393 = vmatprep.subr.mxu0 0.0
    %1394 = vmatpush2.msra.mxu0 0.0
    %1395 = vmatprep.subr.mxu0 0.0
    %1396 = vmatpush2.msra.mxu0 0.0
    %1397 = vmatprep.subr.mxu0 0.0
    %1398 = vmatpush2.msra.mxu0 0.0
    %1399 = vmatprep.mubr.f32.mxu0 0.0
    %1400 = vmatmul.mubr.f32.gmra.mxu0 %v1324
    %v1401 = vpop.f32.mrf.mxu0
    %v1402 = vadd.f32 %v1322, %v1401
    %v1403 = vpop.f32.mrf.mxu0
    %1404 = vmatprep.mubr.f32.mxu0 0.0
    %1405 = vmatmul.mubr.f32.gmra.mxu0 %v1327
    %v1406 = vpop.f32.mrf.mxu0
    %v1407 = vadd.f32 %v1322, %v1406
    %v1408 = vpop.f32.mrf.mxu0
    %1409 = vmatprep.mubr.f32.mxu0 0.0
    %1410 = vmatmul.mubr.f32.gmra.mxu0 %v1330
    %v1411 = vpop.f32.mrf.mxu0
    %v1412 = vadd.f32 %v1322, %v1411
    %v1413 = vpop.f32.mrf.mxu0
    %1414 = vmatprep.mubr.f32.mxu0 0.0
    %1415 = vmatmul.mubr.f32.gmra.mxu0 %v1333
    %v1416 = vpop.f32.mrf.mxu0
    %v1417 = vadd.f32 %v1322, %v1416
    %v1418 = vpop.f32.mrf.mxu0
    %1419 = vdwg.mxu0
    %1422 = vrot.lane.b32.xlu0 %v1402, 96
    %v1423 = vpop.permute.xlu0 %1422
    %1424 = vrot.lane.b32.xlu0 %v1407, 96
    %v1425 = vpop.permute.xlu0 %1424
    %v1428 = vsel %vm254, %v1423, %v1412
    %v1429 = vsel %vm254, %v1425, %v1417
    %1430 = vrot.lane.b32.xlu0 %v1402, 64
    %v1431 = vpop.permute.xlu0 %1430
    %1432 = vrot.lane.b32.xlu0 %v1407, 64
    %v1433 = vpop.permute.xlu0 %1432
    %1438 = vrot.lane.b32.xlu0 %v1412, 96
    %v1439 = vpop.permute.xlu0 %1438
    %1440 = vrot.lane.b32.xlu0 %v1417, 96
    %v1441 = vpop.permute.xlu0 %1440
    %v1444 = vsel %vm254, %v1431, %v1439
    %v1445 = vsel %vm254, %v1433, %v1441
    %1446 = vrot.lane.b32.xlu0 %v1402, 32
    %v1447 = vpop.permute.xlu0 %1446
    %1448 = vrot.lane.b32.xlu0 %v1407, 32
    %v1449 = vpop.permute.xlu0 %1448
    %1450 = vrot.lane.b32.xlu0 %v1412, 32
    %v1451 = vpop.permute.xlu0 %1450
    %1452 = vrot.lane.b32.xlu0 %v1417, 32
    %v1453 = vpop.permute.xlu0 %1452
    %v1458 = vsel %vm254, %v1402, %v1447
    %v1459 = vsel %vm254, %v1407, %v1449
    %v1460 = vsel %vm254, %v1412, %v1451
    %v1461 = vsel %vm254, %v1417, %v1453
    %v1462 = vmul.f32 %v1458, %v1428
    %v1463 = vmul.f32 %v1459, %v1429
    %v1464 = vmul.f32 %v1460, %v1428
    %v1465 = vmul.f32 %v1461, %v1429
    %v1467 = vsel %vm398, %v1462, 0
    %v1470 = vsel %vm398, %v1463, 0
    %v1473 = vsel %vm398, %v1464, 0
    %v1476 = vsel %vm398, %v1465, 0
    %1478 = vmatprep.subr.mxu0 0.0
    %1479 = vmatpush1.msra.mxu0 0.0
    %1480 = vmatprep.subr.mxu0 0.0
    %1481 = vmatpush1.msra.mxu0 0.0
    %1482 = vmatprep.subr.mxu0 0.0
    %1483 = vmatpush1.msra.mxu0 0.0
    %1484 = vmatprep.subr.mxu0 0.0
    %1485 = vmatpush1.msra.mxu0 0.0
    %1486 = vmatprep.subr.mxu0 0.0
    %1487 = vmatpush1.msra.mxu0 0.0
    %1488 = vmatprep.subr.mxu0 0.0
    %1489 = vmatpush1.msra.mxu0 0.0
    %1490 = vmatprep.subr.mxu0 0.0
    %1491 = vmatpush1.msra.mxu0 0.0
    %1492 = vmatprep.subr.mxu0 0.0
    %1493 = vmatpush1.msra.mxu0 0.0
    %1494 = vmatprep.subr.mxu0 0.0
    %1495 = vmatpush1.msra.mxu0 %v77
    %1496 = vmatprep.subr.mxu0 0.0
    %1497 = vmatpush1.msra.mxu0 %v76
    %1498 = vmatprep.subr.mxu0 0.0
    %1499 = vmatpush1.msra.mxu0 %v75
    %1500 = vmatprep.subr.mxu0 0.0
    %1501 = vmatpush1.msra.mxu0 %v74
    %1502 = vmatprep.subr.mxu0 0.0
    %1503 = vmatpush1.msra.mxu0 %v73
    %1504 = vmatprep.subr.mxu0 0.0
    %1505 = vmatpush1.msra.mxu0 %v72
    %1506 = vmatprep.subr.mxu0 0.0
    %1507 = vmatpush1.msra.mxu0 %v71
    %1508 = vmatprep.subr.mxu0 0.0
    %1509 = vmatpush1.msra.mxu0 %v70
    %1510 = vmatprep.subr.mxu0 0.0
    %1511 = vmatpush2.msra.mxu0 0.0
    %1512 = vmatprep.subr.mxu0 0.0
    %1513 = vmatpush2.msra.mxu0 0.0
    %1514 = vmatprep.subr.mxu0 0.0
    %1515 = vmatpush2.msra.mxu0 0.0
    %1516 = vmatprep.subr.mxu0 0.0
    %1517 = vmatpush2.msra.mxu0 0.0
    %1518 = vmatprep.subr.mxu0 0.0
    %1519 = vmatpush2.msra.mxu0 0.0
    %1520 = vmatprep.subr.mxu0 0.0
    %1521 = vmatpush2.msra.mxu0 0.0
    %1522 = vmatprep.subr.mxu0 0.0
    %1523 = vmatpush2.msra.mxu0 0.0
    %1524 = vmatprep.subr.mxu0 0.0
    %1525 = vmatpush2.msra.mxu0 0.0
    %1526 = vmatprep.subr.mxu0 0.0
    %1527 = vmatpush2.msra.mxu0 0.0
    %1528 = vmatprep.subr.mxu0 0.0
    %1529 = vmatpush2.msra.mxu0 0.0
    %1530 = vmatprep.subr.mxu0 0.0
    %1531 = vmatpush2.msra.mxu0 0.0
    %1532 = vmatprep.subr.mxu0 0.0
    %1533 = vmatpush2.msra.mxu0 0.0
    %1534 = vmatprep.subr.mxu0 0.0
    %1535 = vmatpush2.msra.mxu0 0.0
    %1536 = vmatprep.subr.mxu0 0.0
    %1537 = vmatpush2.msra.mxu0 0.0
    %1538 = vmatprep.subr.mxu0 0.0
    %1539 = vmatpush2.msra.mxu0 0.0
    %1540 = vmatprep.subr.mxu0 0.0
    %1541 = vmatpush2.msra.mxu0 0.0
    %1542 = vmatprep.mubr.f32.mxu0 0.0
    %1543 = vmatmul.mubr.f32.gmra.mxu0 %v1467
    %v1544 = vpop.f32.mrf.mxu0
    %v1545 = vadd.f32 0.0, %v1544
    %v1546 = vpop.f32.mrf.mxu0
    %1547 = vmatprep.mubr.f32.mxu0 0.0
    %1548 = vmatmul.mubr.f32.gmra.mxu0 %v1470
    %v1549 = vpop.f32.mrf.mxu0
    %v1550 = vadd.f32 0.0, %v1549
    %v1551 = vpop.f32.mrf.mxu0
    %1552 = vmatprep.mubr.f32.mxu0 0.0
    %1553 = vmatmul.mubr.f32.gmra.mxu0 %v1473
    %v1554 = vpop.f32.mrf.mxu0
    %v1555 = vadd.f32 0.0, %v1554
    %v1556 = vpop.f32.mrf.mxu0
    %1557 = vmatprep.mubr.f32.mxu0 0.0
    %1558 = vmatmul.mubr.f32.gmra.mxu0 %v1476
    %v1559 = vpop.f32.mrf.mxu0
    %v1560 = vadd.f32 0.0, %v1559
    %v1561 = vpop.f32.mrf.mxu0
    %1562 = vdwg.mxu0
    %1567 = vrot.lane.b32.xlu0 %v1545, 120
    %v1568 = vpop.permute.xlu0 %1567
    %1569 = vrot.lane.b32.xlu0 %v1550, 120
    %v1570 = vpop.permute.xlu0 %1569
    %1571 = vrot.lane.b32.xlu0 %v1555, 120
    %v1572 = vpop.permute.xlu0 %1571
    %1573 = vrot.lane.b32.xlu0 %v1560, 120
    %v1574 = vpop.permute.xlu0 %1573
    %v1579 = vmax.f32 %v1545, %v1568
    %v1580 = vmax.f32 %v1550, %v1570
    %v1581 = vmax.f32 %v1555, %v1572
    %v1582 = vmax.f32 %v1560, %v1574
    %v1583 = vsub.f32 %v1545, %v1579
    %v1584 = vsub.f32 %v1550, %v1580
    %v1585 = vsub.f32 %v1555, %v1581
    %v1586 = vsub.f32 %v1560, %v1582
    %v1587 = vmul.f32 %v1583, 1.442695
    %v1588 = vpow.pop %v1587
    %v1589 = vmul.f32 %v1584, 1.442695
    %v1590 = vpow.pop %v1589
    %v1591 = vmul.f32 %v1585, 1.442695
    %v1592 = vpow.pop %v1591
    %v1593 = vmul.f32 %v1586, 1.442695
    %v1594 = vpow.pop %v1593
    %1599 = vrot.lane.b32.xlu0 %v1579, 8
    %v1600 = vpop.permute.xlu0 %1599
    %1601 = vrot.lane.b32.xlu0 %v1580, 8
    %v1602 = vpop.permute.xlu0 %1601
    %1603 = vrot.lane.b32.xlu0 %v1581, 8
    %v1604 = vpop.permute.xlu0 %1603
    %1605 = vrot.lane.b32.xlu0 %v1582, 8
    %v1606 = vpop.permute.xlu0 %1605
    %v1611 = vsub.f32 %v1545, %v1600
    %v1612 = vsub.f32 %v1550, %v1602
    %v1613 = vsub.f32 %v1555, %v1604
    %v1614 = vsub.f32 %v1560, %v1606
    %v1615 = vmul.f32 %v1611, 1.442695
    %v1616 = vpow.pop %v1615
    %v1617 = vmul.f32 %v1612, 1.442695
    %v1618 = vpow.pop %v1617
    %v1619 = vmul.f32 %v1613, 1.442695
    %v1620 = vpow.pop %v1619
    %v1621 = vmul.f32 %v1614, 1.442695
    %v1622 = vpow.pop %v1621
    %1627 = vrot.lane.b32.xlu0 %v1616, 120
    %v1628 = vpop.permute.xlu0 %1627
    %1629 = vrot.lane.b32.xlu0 %v1618, 120
    %v1630 = vpop.permute.xlu0 %1629
    %1631 = vrot.lane.b32.xlu0 %v1620, 120
    %v1632 = vpop.permute.xlu0 %1631
    %1633 = vrot.lane.b32.xlu0 %v1622, 120
    %v1634 = vpop.permute.xlu0 %1633
    %v1639 = vadd.f32 %v1588, %v1628
    %v1640 = vadd.f32 %v1590, %v1630
    %v1641 = vadd.f32 %v1592, %v1632
    %v1642 = vadd.f32 %v1594, %v1634
    %v1643 = vrcp.pop %v1639
    %v1644 = vrcp.pop %v1640
    %v1645 = vrcp.pop %v1641
    %v1646 = vrcp.pop %v1642
    %v1647 = vmul.f32 %v1588, %v1643
    %v1648 = vmul.f32 %v1590, %v1644
    %v1649 = vmul.f32 %v1592, %v1645
    %v1650 = vmul.f32 %v1594, %v1646
    %1655 = vrot.lane.b32.xlu0 %v1643, 8
    %v1656 = vpop.permute.xlu0 %1655
    %1657 = vrot.lane.b32.xlu0 %v1644, 8
    %v1658 = vpop.permute.xlu0 %1657
    %1659 = vrot.lane.b32.xlu0 %v1645, 8
    %v1660 = vpop.permute.xlu0 %1659
    %1661 = vrot.lane.b32.xlu0 %v1646, 8
    %v1662 = vpop.permute.xlu0 %1661
    %v1667 = vmul.f32 %v1616, %v1656
    %v1668 = vmul.f32 %v1618, %v1658
    %v1669 = vmul.f32 %v1620, %v1660
    %v1670 = vmul.f32 %v1622, %v1662
    %v1671 = vsel %vm604, %v1647, %v1667
    %v1672 = vsel %vm604, %v1648, %v1668
    %v1673 = vsel %vm604, %v1649, %v1669
    %v1674 = vsel %vm604, %v1650, %v1670
    %v1676 = vsel %vm609, %v1671, 0
    %v1679 = vsel %vm609, %v1672, 0
    %v1682 = vsel %vm609, %v1673, 0
    %v1685 = vsel %vm609, %v1674, 0
    %1687 = vmatprep.subr.mxu0 0.0
    %1688 = vmatpush1.msra.mxu0 0.0
    %1689 = vmatprep.subr.mxu0 0.0
    %1690 = vmatpush1.msra.mxu0 0.0
    %1691 = vmatprep.subr.mxu0 0.0
    %1692 = vmatpush1.msra.mxu0 0.0
    %1693 = vmatprep.subr.mxu0 0.0
    %1694 = vmatpush1.msra.mxu0 0.0
    %1695 = vmatprep.subr.mxu0 0.0
    %1696 = vmatpush1.msra.mxu0 0.0
    %1697 = vmatprep.subr.mxu0 0.0
    %1698 = vmatpush1.msra.mxu0 0.0
    %1699 = vmatprep.subr.mxu0 0.0
    %1700 = vmatpush1.msra.mxu0 0.0
    %1701 = vmatprep.subr.mxu0 0.0
    %1702 = vmatpush1.msra.mxu0 0.0
    %1703 = vmatprep.subr.mxu0 0.0
    %1704 = vmatpush1.msra.mxu0 0.0
    %1705 = vmatprep.subr.mxu0 0.0
    %1706 = vmatpush1.msra.mxu0 0.0
    %1707 = vmatprep.subr.mxu0 0.0
    %1708 = vmatpush1.msra.mxu0 0.0
    %1709 = vmatprep.subr.mxu0 0.0
    %1710 = vmatpush1.msra.mxu0 0.0
    %1711 = vmatprep.subr.mxu0 0.0
    %1712 = vmatpush1.msra.mxu0 0.0
    %1713 = vmatprep.subr.mxu0 0.0
    %1714 = vmatpush1.msra.mxu0 0.0
    %1715 = vmatprep.subr.mxu0 0.0
    %1716 = vmatpush1.msra.mxu0 %v89
    %1717 = vmatprep.subr.mxu0 0.0
    %1718 = vmatpush1.msra.mxu0 %v88
    %1719 = vmatprep.subr.mxu0 0.0
    %1720 = vmatpush2.msra.mxu0 0.0
    %1721 = vmatprep.subr.mxu0 0.0
    %1722 = vmatpush2.msra.mxu0 0.0
    %1723 = vmatprep.subr.mxu0 0.0
    %1724 = vmatpush2.msra.mxu0 0.0
    %1725 = vmatprep.subr.mxu0 0.0
    %1726 = vmatpush2.msra.mxu0 0.0
    %1727 = vmatprep.subr.mxu0 0.0
    %1728 = vmatpush2.msra.mxu0 0.0
    %1729 = vmatprep.subr.mxu0 0.0
    %1730 = vmatpush2.msra.mxu0 0.0
    %1731 = vmatprep.subr.mxu0 0.0
    %1732 = vmatpush2.msra.mxu0 0.0
    %1733 = vmatprep.subr.mxu0 0.0
    %1734 = vmatpush2.msra.mxu0 0.0
    %1735 = vmatprep.subr.mxu0 0.0
    %1736 = vmatpush2.msra.mxu0 0.0
    %1737 = vmatprep.subr.mxu0 0.0
    %1738 = vmatpush2.msra.mxu0 0.0
    %1739 = vmatprep.subr.mxu0 0.0
    %1740 = vmatpush2.msra.mxu0 0.0
    %1741 = vmatprep.subr.mxu0 0.0
    %1742 = vmatpush2.msra.mxu0 0.0
    %1743 = vmatprep.subr.mxu0 0.0
    %1744 = vmatpush2.msra.mxu0 0.0
    %1745 = vmatprep.subr.mxu0 0.0
    %1746 = vmatpush2.msra.mxu0 0.0
    %1747 = vmatprep.subr.mxu0 0.0
    %1748 = vmatpush2.msra.mxu0 0.0
    %1749 = vmatprep.subr.mxu0 0.0
    %1750 = vmatpush2.msra.mxu0 0.0
    %1751 = vmatprep.mubr.f32.mxu0 0.0
    %1752 = vmatmul.mubr.f32.gmra.mxu0 %v1676
    %v1753 = vpop.f32.mrf.mxu0
    %v1754 = vadd.f32 0.0, %v1753
    %v1755 = vpop.f32.mrf.mxu0
    %1756 = vmatprep.mubr.f32.mxu0 0.0
    %1757 = vmatmul.mubr.f32.gmra.mxu0 %v1679
    %v1758 = vpop.f32.mrf.mxu0
    %v1759 = vadd.f32 0.0, %v1758
    %v1760 = vpop.f32.mrf.mxu0
    %1761 = vmatprep.mubr.f32.mxu0 0.0
    %1762 = vmatmul.mubr.f32.gmra.mxu0 %v1682
    %v1763 = vpop.f32.mrf.mxu0
    %v1764 = vadd.f32 0.0, %v1763
    %v1765 = vpop.f32.mrf.mxu0
    %1766 = vmatprep.mubr.f32.mxu0 0.0
    %1767 = vmatmul.mubr.f32.gmra.mxu0 %v1685
    %v1768 = vpop.f32.mrf.mxu0
    %v1769 = vadd.f32 0.0, %v1768
    %v1770 = vpop.f32.mrf.mxu0
    %1771 = vdwg.mxu0
    %v1772 = vmul.f32 %v1754, %v1444
    %v1773 = vmul.f32 %v1759, %v1445
    %v1774 = vmul.f32 %v1764, %v1444
    %v1775 = vmul.f32 %v1769, %v1445
    %1780 = vrot.lane.b32.xlu0 %v1772, 96
    %v1781 = vpop.permute.xlu0 %1780
    %1782 = vrot.lane.b32.xlu0 %v1773, 96
    %v1783 = vpop.permute.xlu0 %1782
    %1784 = vrot.lane.b32.xlu0 %v1774, 96
    %v1785 = vpop.permute.xlu0 %1784
    %1786 = vrot.lane.b32.xlu0 %v1775, 96
    %v1787 = vpop.permute.xlu0 %1786
    %v1792 = vadd.f32 %v1772, %v1781
    %v1793 = vadd.f32 %v1773, %v1783
    %v1794 = vadd.f32 %v1774, %v1785
    %v1795 = vadd.f32 %v1775, %v1787
    %v1796 = vlaneseq
    %v1797 = vshrl.u32 %v1796, 7
    %v1798 = vsub.s32 2, %v1797
    %v1799 = vrot.slane %v1318, %v1798
    %v1801 = vsel %vm254, %v1792, 0
    %v1804 = vsel %vm254, %v1793, 0
    %v1807 = vsel %vm254, %v1794, 0
    %v1810 = vsel %vm254, %v1795, 0
    %1812 = vmatprep.subr.mxu0 0.0
    %1813 = vmatpush1.msra.mxu0 0.0
    %1814 = vmatprep.subr.mxu0 0.0
    %1815 = vmatpush1.msra.mxu0 0.0
    %1816 = vmatprep.subr.mxu0 0.0
    %1817 = vmatpush1.msra.mxu0 0.0
    %1818 = vmatprep.subr.mxu0 0.0
    %1819 = vmatpush1.msra.mxu0 0.0
    %1820 = vmatprep.subr.mxu0 0.0
    %1821 = vmatpush1.msra.mxu0 0.0
    %1822 = vmatprep.subr.mxu0 0.0
    %1823 = vmatpush1.msra.mxu0 0.0
    %1824 = vmatprep.subr.mxu0 0.0
    %1825 = vmatpush1.msra.mxu0 0.0
    %1826 = vmatprep.subr.mxu0 0.0
    %1827 = vmatpush1.msra.mxu0 0.0
    %1828 = vmatprep.subr.mxu0 0.0
    %1829 = vmatpush1.msra.mxu0 0.0
    %1830 = vmatprep.subr.mxu0 0.0
    %1831 = vmatpush1.msra.mxu0 0.0
    %1832 = vmatprep.subr.mxu0 0.0
    %1833 = vmatpush1.msra.mxu0 0.0
    %1834 = vmatprep.subr.mxu0 0.0
    %1835 = vmatpush1.msra.mxu0 0.0
    %1836 = vmatprep.subr.mxu0 0.0
    %1837 = vmatpush1.msra.mxu0 %v1316
    %1838 = vmatprep.subr.mxu0 0.0
    %1839 = vmatpush1.msra.mxu0 %v1315
    %1840 = vmatprep.subr.mxu0 0.0
    %1841 = vmatpush1.msra.mxu0 %v1314
    %1842 = vmatprep.subr.mxu0 0.0
    %1843 = vmatpush1.msra.mxu0 %v1313
    %1844 = vmatprep.subr.mxu0 0.0
    %1845 = vmatpush2.msra.mxu0 0.0
    %1846 = vmatprep.subr.mxu0 0.0
    %1847 = vmatpush2.msra.mxu0 0.0
    %1848 = vmatprep.subr.mxu0 0.0
    %1849 = vmatpush2.msra.mxu0 0.0
    %1850 = vmatprep.subr.mxu0 0.0
    %1851 = vmatpush2.msra.mxu0 0.0
    %1852 = vmatprep.subr.mxu0 0.0
    %1853 = vmatpush2.msra.mxu0 0.0
    %1854 = vmatprep.subr.mxu0 0.0
    %1855 = vmatpush2.msra.mxu0 0.0
    %1856 = vmatprep.subr.mxu0 0.0
    %1857 = vmatpush2.msra.mxu0 0.0
    %1858 = vmatprep.subr.mxu0 0.0
    %1859 = vmatpush2.msra.mxu0 0.0
    %1860 = vmatprep.subr.mxu0 0.0
    %1861 = vmatpush2.msra.mxu0 0.0
    %1862 = vmatprep.subr.mxu0 0.0
    %1863 = vmatpush2.msra.mxu0 0.0
    %1864 = vmatprep.subr.mxu0 0.0
    %1865 = vmatpush2.msra.mxu0 0.0
    %1866 = vmatprep.subr.mxu0 0.0
    %1867 = vmatpush2.msra.mxu0 0.0
    %1868 = vmatprep.subr.mxu0 0.0
    %1869 = vmatpush2.msra.mxu0 0.0
    %1870 = vmatprep.subr.mxu0 0.0
    %1871 = vmatpush2.msra.mxu0 0.0
    %1872 = vmatprep.subr.mxu0 0.0
    %1873 = vmatpush2.msra.mxu0 0.0
    %1874 = vmatprep.subr.mxu0 0.0
    %1875 = vmatpush2.msra.mxu0 0.0
    %1876 = vmatprep.mubr.f32.mxu0 0.0
    %1877 = vmatmul.mubr.f32.gmra.mxu0 %v1801
    %v1878 = vpop.f32.mrf.mxu0
    %v1879 = vadd.f32 %v1799, %v1878
    %v1880 = vpop.f32.mrf.mxu0
    %1881 = vmatprep.mubr.f32.mxu0 0.0
    %1882 = vmatmul.mubr.f32.gmra.mxu0 %v1804
    %v1883 = vpop.f32.mrf.mxu0
    %v1884 = vadd.f32 %v1799, %v1883
    %v1885 = vpop.f32.mrf.mxu0
    %1886 = vmatprep.mubr.f32.mxu0 0.0
    %1887 = vmatmul.mubr.f32.gmra.mxu0 %v1807
    %v1888 = vpop.f32.mrf.mxu0
    %v1889 = vadd.f32 %v1799, %v1888
    %v1890 = vpop.f32.mrf.mxu0
    %1891 = vmatprep.mubr.f32.mxu0 0.0
    %1892 = vmatmul.mubr.f32.gmra.mxu0 %v1810
    %v1893 = vpop.f32.mrf.mxu0
    %v1894 = vadd.f32 %v1799, %v1893
    %v1895 = vpop.f32.mrf.mxu0
    %1896 = vdwg.mxu0
    %v1897 = vadd.f32 %v1283, %v1879
    %v1898 = vadd.f32 %v1284, %v1884
    %v1899 = vadd.f32 %v1285, %v1889
    %v1900 = vadd.f32 %v1286, %v1894
    %v1901 = vsel %vm254, %v1897, 0.0
    %1902 = vadd.xlane.f32.xlu0 %v1901
    %v1903 = vpop.xlane.xlu0 %1902
    %v1904 = vsel %vm254, %v1898, 0.0
    %1905 = vadd.xlane.f32.xlu0 %v1904
    %v1906 = vpop.xlane.xlu0 %1905
    %v1907 = vsel %vm254, %v1899, 0.0
    %1908 = vadd.xlane.f32.xlu0 %v1907
    %v1909 = vpop.xlane.xlu0 %1908
    %v1910 = vsel %vm254, %v1900, 0.0
    %1911 = vadd.xlane.f32.xlu0 %v1910
    %v1912 = vpop.xlane.xlu0 %1911
    %v1913 = vmul.f32 %v1903, %v848
    %v1914 = vmul.f32 %v1906, %v848
    %v1915 = vmul.f32 %v1909, %v848
    %v1916 = vmul.f32 %v1912, %v848
    %v1917 = vsub.f32 %v1897, %v1913
    %v1918 = vsub.f32 %v1898, %v1914
    %v1919 = vsub.f32 %v1899, %v1915
    %v1920 = vsub.f32 %v1900, %v1916
    %v1921 = vmul.f32 %v1917, %v1917
    %v1922 = vmul.f32 %v1918, %v1918
    %v1923 = vmul.f32 %v1919, %v1919
    %v1924 = vmul.f32 %v1920, %v1920
    %v1925 = vsel %vm254, %v1921, 0.0
    %1926 = vadd.xlane.f32.xlu0 %v1925
    %v1927 = vpop.xlane.xlu0 %1926
    %v1928 = vsel %vm254, %v1922, 0.0
    %1929 = vadd.xlane.f32.xlu0 %v1928
    %v1930 = vpop.xlane.xlu0 %1929
    %v1931 = vsel %vm254, %v1923, 0.0
    %1932 = vadd.xlane.f32.xlu0 %v1931
    %v1933 = vpop.xlane.xlu0 %1932
    %v1934 = vsel %vm254, %v1924, 0.0
    %1935 = vadd.xlane.f32.xlu0 %v1934
    %v1936 = vpop.xlane.xlu0 %1935
    %v1937 = vmul.f32 %v1927, %v848
    %v1938 = vmul.f32 %v1930, %v848
    %v1939 = vmul.f32 %v1933, %v848
    %v1940 = vmul.f32 %v1936, %v848
    %v1941 = vadd.f32 %v1937, 1e-05
    %v1942 = vadd.f32 %v1938, 1e-05
    %v1943 = vadd.f32 %v1939, 1e-05
    %v1944 = vadd.f32 %v1940, 1e-05
    %v1945 = vrsqrt.pop %v1941
    %v1946 = vrsqrt.pop %v1942
    %v1947 = vrsqrt.pop %v1943
    %v1948 = vrsqrt.pop %v1944
    %v1949 = vmul.f32 %v1917, %v1945
    %v1950 = vmul.f32 %v1918, %v1946
    %v1951 = vmul.f32 %v1919, %v1947
    %v1952 = vmul.f32 %v1920, %v1948
    %v1953 = vlaneseq
    %v1954 = vshrl.u32 %v1953, 7
    %v1955 = vsub.s32 3, %v1954
    %v1956 = vrot.slane %v1318, %v1955
    %v1957 = vmul.f32 %v1949, %v1956
    %v1958 = vmul.f32 %v1950, %v1956
    %v1959 = vmul.f32 %v1951, %v1956
    %v1960 = vmul.f32 %v1952, %v1956
    %v1961 = vlaneseq
    %v1962 = vshrl.u32 %v1961, 7
    %v1963 = vsub.s32 4, %v1962
    %v1964 = vrot.slane %v1318, %v1963
    %v1965 = vadd.f32 %v1957, %v1964
    %v1966 = vadd.f32 %v1958, %v1964
    %v1967 = vadd.f32 %v1959, %v1964
    %v1968 = vadd.f32 %v1960, %v1964
    %v1969 = vlaneseq
    %v1970 = vshrl.u32 %v1969, 7
    %v1971 = vsub.s32 1, %v1970
    %v1972 = vrot.slane %v1318, %v1971
    %v1974 = vsel %vm254, %v1965, 0
    %v1977 = vsel %vm254, %v1966, 0
    %v1980 = vsel %vm254, %v1967, 0
    %v1983 = vsel %vm254, %v1968, 0
    %1985 = vmatprep.subr.mxu0 0.0
    %1986 = vmatpush1.msra.mxu0 0.0
    %1987 = vmatprep.subr.mxu0 0.0
    %1988 = vmatpush1.msra.mxu0 0.0
    %1989 = vmatprep.subr.mxu0 0.0
    %1990 = vmatpush1.msra.mxu0 0.0
    %1991 = vmatprep.subr.mxu0 0.0
    %1992 = vmatpush1.msra.mxu0 0.0
    %1993 = vmatprep.subr.mxu0 0.0
    %1994 = vmatpush1.msra.mxu0 0.0
    %1995 = vmatprep.subr.mxu0 0.0
    %1996 = vmatpush1.msra.mxu0 0.0
    %1997 = vmatprep.subr.mxu0 0.0
    %1998 = vmatpush1.msra.mxu0 0.0
    %1999 = vmatprep.subr.mxu0 0.0
    %2000 = vmatpush1.msra.mxu0 0.0
    %2001 = vmatprep.subr.mxu0 0.0
    %2002 = vmatpush1.msra.mxu0 0.0
    %2003 = vmatprep.subr.mxu0 0.0
    %2004 = vmatpush1.msra.mxu0 0.0
    %2005 = vmatprep.subr.mxu0 0.0
    %2006 = vmatpush1.msra.mxu0 0.0
    %2007 = vmatprep.subr.mxu0 0.0
    %2008 = vmatpush1.msra.mxu0 0.0
    %2009 = vmatprep.subr.mxu0 0.0
    %2010 = vmatpush1.msra.mxu0 %v1295
    %2011 = vmatprep.subr.mxu0 0.0
    %2012 = vmatpush1.msra.mxu0 %v1294
    %2013 = vmatprep.subr.mxu0 0.0
    %2014 = vmatpush1.msra.mxu0 %v1293
    %2015 = vmatprep.subr.mxu0 0.0
    %2016 = vmatpush1.msra.mxu0 %v1292
    %2017 = vmatprep.subr.mxu0 0.0
    %2018 = vmatpush2.msra.mxu0 0.0
    %2019 = vmatprep.subr.mxu0 0.0
    %2020 = vmatpush2.msra.mxu0 0.0
    %2021 = vmatprep.subr.mxu0 0.0
    %2022 = vmatpush2.msra.mxu0 0.0
    %2023 = vmatprep.subr.mxu0 0.0
    %2024 = vmatpush2.msra.mxu0 0.0
    %2025 = vmatprep.subr.mxu0 0.0
    %2026 = vmatpush2.msra.mxu0 0.0
    %2027 = vmatprep.subr.mxu0 0.0
    %2028 = vmatpush2.msra.mxu0 0.0
    %2029 = vmatprep.subr.mxu0 0.0
    %2030 = vmatpush2.msra.mxu0 0.0
    %2031 = vmatprep.subr.mxu0 0.0
    %2032 = vmatpush2.msra.mxu0 0.0
    %2033 = vmatprep.subr.mxu0 0.0
    %2034 = vmatpush2.msra.mxu0 0.0
    %2035 = vmatprep.subr.mxu0 0.0
    %2036 = vmatpush2.msra.mxu0 0.0
    %2037 = vmatprep.subr.mxu0 0.0
    %2038 = vmatpush2.msra.mxu0 0.0
    %2039 = vmatprep.subr.mxu0 0.0
    %2040 = vmatpush2.msra.mxu0 0.0
    %2041 = vmatprep.subr.mxu0 0.0
    %2042 = vmatpush2.msra.mxu0 0.0
    %2043 = vmatprep.subr.mxu0 0.0
    %2044 = vmatpush2.msra.mxu0 0.0
    %2045 = vmatprep.subr.mxu0 0.0
    %2046 = vmatpush2.msra.mxu0 0.0
    %2047 = vmatprep.subr.mxu0 0.0
    %2048 = vmatpush2.msra.mxu0 0.0
    %2049 = vmatprep.mubr.f32.mxu0 0.0
    %2050 = vmatmul.mubr.f32.gmra.mxu0 %v1974
    %v2051 = vpop.f32.mrf.mxu0
    %v2052 = vadd.f32 %v1972, %v2051
    %v2053 = vpop.f32.mrf.mxu0
    %2054 = vmatprep.mubr.f32.mxu0 0.0
    %2055 = vmatmul.mubr.f32.gmra.mxu0 %v1977
    %v2056 = vpop.f32.mrf.mxu0
    %v2057 = vadd.f32 %v1972, %v2056
    %v2058 = vpop.f32.mrf.mxu0
    %2059 = vmatprep.mubr.f32.mxu0 0.0
    %2060 = vmatmul.mubr.f32.gmra.mxu0 %v1980
    %v2061 = vpop.f32.mrf.mxu0
    %v2062 = vadd.f32 %v1972, %v2061
    %v2063 = vpop.f32.mrf.mxu0
    %2064 = vmatprep.mubr.f32.mxu0 0.0
    %2065 = vmatmul.mubr.f32.gmra.mxu0 %v1983
    %v2066 = vpop.f32.mrf.mxu0
    %v2067 = vadd.f32 %v1972, %v2066
    %v2068 = vpop.f32.mrf.mxu0
    %2069 = vdwg.mxu0
    %v2070 = vmul.f32 %v2052, 0.5
    %v2071 = vmul.f32 %v2057, 0.5
    %v2072 = vmul.f32 %v2062, 0.5
    %v2073 = vmul.f32 %v2067, 0.5
    %v2074 = vmul.f32 %v2052, 0.70710677
    %v2075 = vmul.f32 %v2057, 0.70710677
    %v2076 = vmul.f32 %v2062, 0.70710677
    %v2077 = vmul.f32 %v2067, 0.70710677
    %v2078 = vmax.f32 %v2074, -4.0
    %v2079 = vmax.f32 %v2075, -4.0
    %v2080 = vmax.f32 %v2076, -4.0
    %v2081 = vmax.f32 %v2077, -4.0
    %v2082 = vmin.f32 %v2078, 4.0
    %v2083 = vmin.f32 %v2079, 4.0
    %v2084 = vmin.f32 %v2080, 4.0
    %v2085 = vmin.f32 %v2081, 4.0
    %v2086 = vmul.f32 %v2082, %v2082
    %v2087 = vmul.f32 %v2083, %v2083
    %v2088 = vmul.f32 %v2084, %v2084
    %v2089 = vmul.f32 %v2085, %v2085
    %v2090 = vmul.f32 %v2086, -2.7261424e-10
    %v2091 = vmul.f32 %v2087, -2.7261424e-10
    %v2092 = vmul.f32 %v2088, -2.7261424e-10
    %v2093 = vmul.f32 %v2089, -2.7261424e-10
    %v2094 = vadd.f32 %v2090, 2.7706815e-08
    %v2095 = vadd.f32 %v2091, 2.7706815e-08
    %v2096 = vadd.f32 %v2092, 2.7706815e-08
    %v2097 = vadd.f32 %v2093, 2.7706815e-08
    %v2098 = vmul.f32 %v2086, %v2094
    %v2099 = vmul.f32 %v2087, %v2095
    %v2100 = vmul.f32 %v2088, %v2096
    %v2101 = vmul.f32 %v2089, %v2097
    %v2102 = vadd.f32 %v2098, -2.101024e-06
    %v2103 = vadd.f32 %v2099, -2.101024e-06
    %v2104 = vadd.f32 %v2100, -2.101024e-06
    %v2105 = vadd.f32 %v2101, -2.101024e-06
    %v2106 = vmul.f32 %v2086, %v2102
    %v2107 = vmul.f32 %v2087, %v2103
    %v2108 = vmul.f32 %v2088, %v2104
    %v2109 = vmul.f32 %v2089, %v2105
    %v2110 = vadd.f32 %v2106, -5.6925062e-05
    %v2111 = vadd.f32 %v2107, -5.6925062e-05
    %v2112 = vadd.f32 %v2108, -5.6925062e-05
    %v2113 = vadd.f32 %v2109, -5.6925062e-05
    %v2114 = vmul.f32 %v2086, %v2110
    %v2115 = vmul.f32 %v2087, %v2111
    %v2116 = vmul.f32 %v2088, %v2112
    %v2117 = vmul.f32 %v2089, %v2113
    %v2118 = vadd.f32 %v2114, -0.00073499064
    %v2119 = vadd.f32 %v2115, -0.00073499064
    %v2120 = vadd.f32 %v2116, -0.00073499064
    %v2121 = vadd.f32 %v2117, -0.00073499064
    %v2122 = vmul.f32 %v2086, %v2118
    %v2123 = vmul.f32 %v2087, %v2119
    %v2124 = vmul.f32 %v2088, %v2120
    %v2125 = vmul.f32 %v2089, %v2121
    %v2126 = vadd.f32 %v2122, -0.0029546
    %v2127 = vadd.f32 %v2123, -0.0029546
    %v2128 = vadd.f32 %v2124, -0.0029546
    %v2129 = vadd.f32 %v2125, -0.0029546
    %v2130 = vmul.f32 %v2086, %v2126
    %v2131 = vmul.f32 %v2087, %v2127
    %v2132 = vmul.f32 %v2088, %v2128
    %v2133 = vmul.f32 %v2089, %v2129
    %v2134 = vadd.f32 %v2130, -0.016096033
    %v2135 = vadd.f32 %v2131, -0.016096033
    %v2136 = vadd.f32 %v2132, -0.016096033
    %v2137 = vadd.f32 %v2133, -0.016096033
    %v2138 = vmul.f32 %v2082, %v2134
    %v2139 = vmul.f32 %v2083, %v2135
    %v2140 = vmul.f32 %v2084, %v2136
    %v2141 = vmul.f32 %v2085, %v2137
    %v2142 = vmul.f32 %v2086, -1.45660715e-05
    %v2143 = vmul.f32 %v2087, -1.45660715e-05
    %v2144 = vmul.f32 %v2088, -1.45660715e-05
    %v2145 = vmul.f32 %v2089, -1.45660715e-05
    %v2146 = vadd.f32 %v2142, -0.00021337405
    %v2147 = vadd.f32 %v2143, -0.00021337405
    %v2148 = vadd.f32 %v2144, -0.00021337405
    %v2149 = vadd.f32 %v2145, -0.00021337405
    %v2150 = vmul.f32 %v2086, %v2146
    %v2151 = vmul.f32 %v2087, %v2147
    %v2152 = vmul.f32 %v2088, %v2148
    %v2153 = vmul.f32 %v2089, %v2149
    %v2154 = vadd.f32 %v2150, -0.001682827
    %v2155 = vadd.f32 %v2151, -0.001682827
    %v2156 = vadd.f32 %v2152, -0.001682827
    %v2157 = vadd.f32 %v2153, -0.001682827
    %v2158 = vmul.f32 %v2086, %v2154
    %v2159 = vmul.f32 %v2087, %v2155
    %v2160 = vmul.f32 %v2088, %v2156
    %v2161 = vmul.f32 %v2089, %v2157
    %v2162 = vadd.f32 %v2158, -0.0073733293
    %v2163 = vadd.f32 %v2159, -0.0073733293
    %v2164 = vadd.f32 %v2160, -0.0073733293
    %v2165 = vadd.f32 %v2161, -0.0073733293
    %v2166 = vmul.f32 %v2086, %v2162
    %v2167 = vmul.f32 %v2087, %v2163
    %v2168 = vmul.f32 %v2088, %v2164
    %v2169 = vmul.f32 %v2089, %v2165
    %v2170 = vadd.f32 %v2166, -0.014264739
    %v2171 = vadd.f32 %v2167, -0.014264739
    %v2172 = vadd.f32 %v2168, -0.014264739
    %v2173 = vadd.f32 %v2169, -0.014264739
    %v2174 = vrcp.pop %v2170
    %v2175 = vmul.f32 %v2138, %v2174
    %v2176 = vrcp.pop %v2171
    %v2177 = vmul.f32 %v2139, %v2176
    %v2178 = vrcp.pop %v2172
    %v2179 = vmul.f32 %v2140, %v2178
    %v2180 = vrcp.pop %v2173
    %v2181 = vmul.f32 %v2141, %v2180
    %v2182 = vadd.f32 %v2175, 1.0
    %v2183 = vadd.f32 %v2177, 1.0
    %v2184 = vadd.f32 %v2179, 1.0
    %v2185 = vadd.f32 %v2181, 1.0
    %v2186 = vmul.f32 %v2070, %v2182
    %v2187 = vmul.f32 %v2071, %v2183
    %v2188 = vmul.f32 %v2072, %v2184
    %v2189 = vmul.f32 %v2073, %v2185
    %v2190 = vlaneseq
    %v2191 = vshrl.u32 %v2190, 7
    %v2192 = vsub.s32 7, %v2191
    %v2193 = vrot.slane %v1318, %v2192
    %2194 = vmatprep.subr.mxu0 0.0
    %2195 = vmatpush1.msra.mxu0 %v1312
    %2196 = vmatprep.subr.mxu0 0.0
    %2197 = vmatpush1.msra.mxu0 %v1311
    %2198 = vmatprep.subr.mxu0 0.0
    %2199 = vmatpush1.msra.mxu0 %v1310
    %2200 = vmatprep.subr.mxu0 0.0
    %2201 = vmatpush1.msra.mxu0 %v1309
    %2202 = vmatprep.subr.mxu0 0.0
    %2203 = vmatpush1.msra.mxu0 %v1308
    %2204 = vmatprep.subr.mxu0 0.0
    %2205 = vmatpush1.msra.mxu0 %v1307
    %2206 = vmatprep.subr.mxu0 0.0
    %2207 = vmatpush1.msra.mxu0 %v1306
    %2208 = vmatprep.subr.mxu0 0.0
    %2209 = vmatpush1.msra.mxu0 %v1305
    %2210 = vmatprep.subr.mxu0 0.0
    %2211 = vmatpush1.msra.mxu0 %v1304
    %2212 = vmatprep.subr.mxu0 0.0
    %2213 = vmatpush1.msra.mxu0 %v1303
    %2214 = vmatprep.subr.mxu0 0.0
    %2215 = vmatpush1.msra.mxu0 %v1302
    %2216 = vmatprep.subr.mxu0 0.0
    %2217 = vmatpush1.msra.mxu0 %v1301
    %2218 = vmatprep.subr.mxu0 0.0
    %2219 = vmatpush1.msra.mxu0 %v1300
    %2220 = vmatprep.subr.mxu0 0.0
    %2221 = vmatpush1.msra.mxu0 %v1299
    %2222 = vmatprep.subr.mxu0 0.0
    %2223 = vmatpush1.msra.mxu0 %v1298
    %2224 = vmatprep.subr.mxu0 0.0
    %2225 = vmatpush1.msra.mxu0 %v1297
    %2226 = vmatprep.subr.mxu0 0.0
    %2227 = vmatpush2.msra.mxu0 0.0
    %2228 = vmatprep.subr.mxu0 0.0
    %2229 = vmatpush2.msra.mxu0 0.0
    %2230 = vmatprep.subr.mxu0 0.0
    %2231 = vmatpush2.msra.mxu0 0.0
    %2232 = vmatprep.subr.mxu0 0.0
    %2233 = vmatpush2.msra.mxu0 0.0
    %2234 = vmatprep.subr.mxu0 0.0
    %2235 = vmatpush2.msra.mxu0 0.0
    %2236 = vmatprep.subr.mxu0 0.0
    %2237 = vmatpush2.msra.mxu0 0.0
    %2238 = vmatprep.subr.mxu0 0.0
    %2239 = vmatpush2.msra.mxu0 0.0
    %2240 = vmatprep.subr.mxu0 0.0
    %2241 = vmatpush2.msra.mxu0 0.0
    %2242 = vmatprep.subr.mxu0 0.0
    %2243 = vmatpush2.msra.mxu0 0.0
    %2244 = vmatprep.subr.mxu0 0.0
    %2245 = vmatpush2.msra.mxu0 0.0
    %2246 = vmatprep.subr.mxu0 0.0
    %2247 = vmatpush2.msra.mxu0 0.0
    %2248 = vmatprep.subr.mxu0 0.0
    %2249 = vmatpush2.msra.mxu0 0.0
    %2250 = vmatprep.subr.mxu0 0.0
    %2251 = vmatpush2.msra.mxu0 0.0
    %2252 = vmatprep.subr.mxu0 0.0
    %2253 = vmatpush2.msra.mxu0 0.0
    %2254 = vmatprep.subr.mxu0 0.0
    %2255 = vmatpush2.msra.mxu0 0.0
    %2256 = vmatprep.subr.mxu0 0.0
    %2257 = vmatpush2.msra.mxu0 0.0
    %2258 = vmatprep.mubr.f32.mxu0 0.0
    %2259 = vmatmul.mubr.f32.gmra.mxu0 %v2186
    %v2260 = vpop.f32.mrf.mxu0
    %v2261 = vadd.f32 %v2193, %v2260
    %v2262 = vpop.f32.mrf.mxu0
    %2263 = vmatprep.mubr.f32.mxu0 0.0
    %2264 = vmatmul.mubr.f32.gmra.mxu0 %v2187
    %v2265 = vpop.f32.mrf.mxu0
    %v2266 = vadd.f32 %v2193, %v2265
    %v2267 = vpop.f32.mrf.mxu0
    %2268 = vmatprep.mubr.f32.mxu0 0.0
    %2269 = vmatmul.mubr.f32.gmra.mxu0 %v2188
    %v2270 = vpop.f32.mrf.mxu0
    %v2271 = vadd.f32 %v2193, %v2270
    %v2272 = vpop.f32.mrf.mxu0
    %2273 = vmatprep.mubr.f32.mxu0 0.0
    %2274 = vmatmul.mubr.f32.gmra.mxu0 %v2189
    %v2275 = vpop.f32.mrf.mxu0
    %v2276 = vadd.f32 %v2193, %v2275
    %v2277 = vpop.f32.mrf.mxu0
    %2278 = vdwg.mxu0
    %v2279 = vadd.f32 %v1965, %v2261
    %v2280 = vadd.f32 %v1966, %v2266
    %v2281 = vadd.f32 %v1967, %v2271
    %v2282 = vadd.f32 %v1968, %v2276
    %v2283 = vsel %vm254, %v2279, 0.0
    %2284 = vadd.xlane.f32.xlu0 %v2283
    %v2285 = vpop.xlane.xlu0 %2284
    %v2286 = vsel %vm254, %v2280, 0.0
    %2287 = vadd.xlane.f32.xlu0 %v2286
    %v2288 = vpop.xlane.xlu0 %2287
    %v2289 = vsel %vm254, %v2281, 0.0
    %2290 = vadd.xlane.f32.xlu0 %v2289
    %v2291 = vpop.xlane.xlu0 %2290
    %v2292 = vsel %vm254, %v2282, 0.0
    %2293 = vadd.xlane.f32.xlu0 %v2292
    %v2294 = vpop.xlane.xlu0 %2293
    %v2295 = vmul.f32 %v2285, %v848
    %v2296 = vmul.f32 %v2288, %v848
    %v2297 = vmul.f32 %v2291, %v848
    %v2298 = vmul.f32 %v2294, %v848
    %v2299 = vsub.f32 %v2279, %v2295
    %v2300 = vsub.f32 %v2280, %v2296
    %v2301 = vsub.f32 %v2281, %v2297
    %v2302 = vsub.f32 %v2282, %v2298
    %v2303 = vmul.f32 %v2299, %v2299
    %v2304 = vmul.f32 %v2300, %v2300
    %v2305 = vmul.f32 %v2301, %v2301
    %v2306 = vmul.f32 %v2302, %v2302
    %v2307 = vsel %vm254, %v2303, 0.0
    %2308 = vadd.xlane.f32.xlu0 %v2307
    %v2309 = vpop.xlane.xlu0 %2308
    %v2310 = vsel %vm254, %v2304, 0.0
    %2311 = vadd.xlane.f32.xlu0 %v2310
    %v2312 = vpop.xlane.xlu0 %2311
    %v2313 = vsel %vm254, %v2305, 0.0
    %2314 = vadd.xlane.f32.xlu0 %v2313
    %v2315 = vpop.xlane.xlu0 %2314
    %v2316 = vsel %vm254, %v2306, 0.0
    %2317 = vadd.xlane.f32.xlu0 %v2316
    %v2318 = vpop.xlane.xlu0 %2317
    %v2319 = vmul.f32 %v2309, %v848
    %v2320 = vmul.f32 %v2312, %v848
    %v2321 = vmul.f32 %v2315, %v848
    %v2322 = vmul.f32 %v2318, %v848
    %v2323 = vadd.f32 %v2319, 1e-05
    %v2324 = vadd.f32 %v2320, 1e-05
    %v2325 = vadd.f32 %v2321, 1e-05
    %v2326 = vadd.f32 %v2322, 1e-05
    %v2327 = vrsqrt.pop %v2323
    %v2328 = vrsqrt.pop %v2324
    %v2329 = vrsqrt.pop %v2325
    %v2330 = vrsqrt.pop %v2326
    %v2331 = vmul.f32 %v2299, %v2327
    %v2332 = vmul.f32 %v2300, %v2328
    %v2333 = vmul.f32 %v2301, %v2329
    %v2334 = vmul.f32 %v2302, %v2330
    %v2335 = vlaneseq
    %v2336 = vshrl.u32 %v2335, 7
    %v2337 = vsub.s32 5, %v2336
    %v2338 = vrot.slane %v1318, %v2337
    %v2339 = vmul.f32 %v2331, %v2338
    %v2340 = vmul.f32 %v2332, %v2338
    %v2341 = vmul.f32 %v2333, %v2338
    %v2342 = vmul.f32 %v2334, %v2338
    %v2343 = vlaneseq
    %v2344 = vshrl.u32 %v2343, 7
    %v2345 = vsub.s32 6, %v2344
    %v2346 = vrot.slane %v1318, %v2345
    %v2347 = vadd.f32 %v2339, %v2346
    %v2348 = vadd.f32 %v2340, %v2346
    %v2349 = vadd.f32 %v2341, %v2346
    %v2350 = vadd.f32 %v2342, %v2346
    %s2351 = scalar_lea.vmem %s2, 128
    %v2352 = vld [vmem:[%s2351] sm:$0xff]
    %v2353 = vld [vmem:[%s2351 + $0x8] sm:$0xff]
    %v2354 = vld [vmem:[%s2351 + $0x10] sm:$0xff]
    %v2355 = vld [vmem:[%s2351 + $0x18] sm:$0xff]
    %v2356 = vld [vmem:[%s2351 + $0x20] sm:$0xff]
    %v2357 = vld [vmem:[%s2351 + $0x28] sm:$0xff]
    %v2358 = vld [vmem:[%s2351 + $0x30] sm:$0xff]
    %v2359 = vld [vmem:[%s2351 + $0x38] sm:$0xff]
    %s2360 = scalar_lea.vmem %s3, 320
    %v2361 = vld [vmem:[%s2360] sm:$0xff]
    %v2362 = vld [vmem:[%s2360 + $0x8] sm:$0xff]
    %v2363 = vld [vmem:[%s2360 + $0x10] sm:$0xff]
    %v2364 = vld [vmem:[%s2360 + $0x18] sm:$0xff]
    %v2365 = vld [vmem:[%s2360 + $0x20] sm:$0xff]
    %v2366 = vld [vmem:[%s2360 + $0x28] sm:$0xff]
    %v2367 = vld [vmem:[%s2360 + $0x30] sm:$0xff]
    %v2368 = vld [vmem:[%s2360 + $0x38] sm:$0xff]
    %v2369 = vld [vmem:[%s2360 + $0x40] sm:$0xff]
    %v2370 = vld [vmem:[%s2360 + $0x48] sm:$0xff]
    %v2371 = vld [vmem:[%s2360 + $0x50] sm:$0xff]
    %v2372 = vld [vmem:[%s2360 + $0x58] sm:$0xff]
    %v2373 = vld [vmem:[%s2360 + $0x60] sm:$0xff]
    %v2374 = vld [vmem:[%s2360 + $0x68] sm:$0xff]
    %v2375 = vld [vmem:[%s2360 + $0x70] sm:$0xff]
    %v2376 = vld [vmem:[%s2360 + $0x78] sm:$0xff]
    %v2377 = vld [vmem:[%s2360 + $0x80] sm:$0xff]
    %v2378 = vld [vmem:[%s2360 + $0x88] sm:$0xff]
    %v2379 = vld [vmem:[%s2360 + $0x90] sm:$0xff]
    %v2380 = vld [vmem:[%s2360 + $0x98] sm:$0xff]
    %s2381 = scalar_lea.vmem %s4, 16
    %v2382 = vld [vmem:[%s2381] sm:$0xff]
    %v2383 = vlaneseq
    %v2384 = vshrl.u32 %v2383, 7
    %v2385 = vsub.s32 0, %v2384
    %v2386 = vrot.slane %v2382, %v2385
    %v2388 = vsel %vm254, %v2347, 0
    %v2391 = vsel %vm254, %v2348, 0
    %v2394 = vsel %vm254, %v2349, 0
    %v2397 = vsel %vm254, %v2350, 0
    %2399 = vmatprep.subr.mxu0 0.0
    %2400 = vmatpush1.msra.mxu0 0.0
    %2401 = vmatprep.subr.mxu0 0.0
    %2402 = vmatpush1.msra.mxu0 0.0
    %2403 = vmatprep.subr.mxu0 0.0
    %2404 = vmatpush1.msra.mxu0 0.0
    %2405 = vmatprep.subr.mxu0 0.0
    %2406 = vmatpush1.msra.mxu0 0.0
    %2407 = vmatprep.subr.mxu0 0.0
    %2408 = vmatpush1.msra.mxu0 0.0
    %2409 = vmatprep.subr.mxu0 0.0
    %2410 = vmatpush1.msra.mxu0 0.0
    %2411 = vmatprep.subr.mxu0 0.0
    %2412 = vmatpush1.msra.mxu0 0.0
    %2413 = vmatprep.subr.mxu0 0.0
    %2414 = vmatpush1.msra.mxu0 0.0
    %2415 = vmatprep.subr.mxu0 0.0
    %2416 = vmatpush1.msra.mxu0 0.0
    %2417 = vmatprep.subr.mxu0 0.0
    %2418 = vmatpush1.msra.mxu0 0.0
    %2419 = vmatprep.subr.mxu0 0.0
    %2420 = vmatpush1.msra.mxu0 0.0
    %2421 = vmatprep.subr.mxu0 0.0
    %2422 = vmatpush1.msra.mxu0 0.0
    %2423 = vmatprep.subr.mxu0 0.0
    %2424 = vmatpush1.msra.mxu0 %v2355
    %2425 = vmatprep.subr.mxu0 0.0
    %2426 = vmatpush1.msra.mxu0 %v2354
    %2427 = vmatprep.subr.mxu0 0.0
    %2428 = vmatpush1.msra.mxu0 %v2353
    %2429 = vmatprep.subr.mxu0 0.0
    %2430 = vmatpush1.msra.mxu0 %v2352
    %2431 = vmatprep.subr.mxu0 0.0
    %2432 = vmatpush2.msra.mxu0 0.0
    %2433 = vmatprep.subr.mxu0 0.0
    %2434 = vmatpush2.msra.mxu0 0.0
    %2435 = vmatprep.subr.mxu0 0.0
    %2436 = vmatpush2.msra.mxu0 0.0
    %2437 = vmatprep.subr.mxu0 0.0
    %2438 = vmatpush2.msra.mxu0 0.0
    %2439 = vmatprep.subr.mxu0 0.0
    %2440 = vmatpush2.msra.mxu0 0.0
    %2441 = vmatprep.subr.mxu0 0.0
    %2442 = vmatpush2.msra.mxu0 0.0
    %2443 = vmatprep.subr.mxu0 0.0
    %2444 = vmatpush2.msra.mxu0 0.0
    %2445 = vmatprep.subr.mxu0 0.0
    %2446 = vmatpush2.msra.mxu0 0.0
    %2447 = vmatprep.subr.mxu0 0.0
    %2448 = vmatpush2.msra.mxu0 0.0
    %2449 = vmatprep.subr.mxu0 0.0
    %2450 = vmatpush2.msra.mxu0 0.0
    %2451 = vmatprep.subr.mxu0 0.0
    %2452 = vmatpush2.msra.mxu0 0.0
    %2453 = vmatprep.subr.mxu0 0.0
    %2454 = vmatpush2.msra.mxu0 0.0
    %2455 = vmatprep.subr.mxu0 0.0
    %2456 = vmatpush2.msra.mxu0 0.0
    %2457 = vmatprep.subr.mxu0 0.0
    %2458 = vmatpush2.msra.mxu0 0.0
    %2459 = vmatprep.subr.mxu0 0.0
    %2460 = vmatpush2.msra.mxu0 0.0
    %2461 = vmatprep.subr.mxu0 0.0
    %2462 = vmatpush2.msra.mxu0 0.0
    %2463 = vmatprep.mubr.f32.mxu0 0.0
    %2464 = vmatmul.mubr.f32.gmra.mxu0 %v2388
    %v2465 = vpop.f32.mrf.mxu0
    %v2466 = vadd.f32 %v2386, %v2465
    %v2467 = vpop.f32.mrf.mxu0
    %2468 = vmatprep.mubr.f32.mxu0 0.0
    %2469 = vmatmul.mubr.f32.gmra.mxu0 %v2391
    %v2470 = vpop.f32.mrf.mxu0
    %v2471 = vadd.f32 %v2386, %v2470
    %v2472 = vpop.f32.mrf.mxu0
    %2473 = vmatprep.mubr.f32.mxu0 0.0
    %2474 = vmatmul.mubr.f32.gmra.mxu0 %v2394
    %v2475 = vpop.f32.mrf.mxu0
    %v2476 = vadd.f32 %v2386, %v2475
    %v2477 = vpop.f32.mrf.mxu0
    %2478 = vmatprep.mubr.f32.mxu0 0.0
    %2479 = vmatmul.mubr.f32.gmra.mxu0 %v2397
    %v2480 = vpop.f32.mrf.mxu0
    %v2481 = vadd.f32 %v2386, %v2480
    %v2482 = vpop.f32.mrf.mxu0
    %2483 = vdwg.mxu0
    %2486 = vrot.lane.b32.xlu0 %v2466, 96
    %v2487 = vpop.permute.xlu0 %2486
    %2488 = vrot.lane.b32.xlu0 %v2471, 96
    %v2489 = vpop.permute.xlu0 %2488
    %v2492 = vsel %vm254, %v2487, %v2476
    %v2493 = vsel %vm254, %v2489, %v2481
    %2494 = vrot.lane.b32.xlu0 %v2466, 64
    %v2495 = vpop.permute.xlu0 %2494
    %2496 = vrot.lane.b32.xlu0 %v2471, 64
    %v2497 = vpop.permute.xlu0 %2496
    %2502 = vrot.lane.b32.xlu0 %v2476, 96
    %v2503 = vpop.permute.xlu0 %2502
    %2504 = vrot.lane.b32.xlu0 %v2481, 96
    %v2505 = vpop.permute.xlu0 %2504
    %v2508 = vsel %vm254, %v2495, %v2503
    %v2509 = vsel %vm254, %v2497, %v2505
    %2510 = vrot.lane.b32.xlu0 %v2466, 32
    %v2511 = vpop.permute.xlu0 %2510
    %2512 = vrot.lane.b32.xlu0 %v2471, 32
    %v2513 = vpop.permute.xlu0 %2512
    %2514 = vrot.lane.b32.xlu0 %v2476, 32
    %v2515 = vpop.permute.xlu0 %2514
    %2516 = vrot.lane.b32.xlu0 %v2481, 32
    %v2517 = vpop.permute.xlu0 %2516
    %v2522 = vsel %vm254, %v2466, %v2511
    %v2523 = vsel %vm254, %v2471, %v2513
    %v2524 = vsel %vm254, %v2476, %v2515
    %v2525 = vsel %vm254, %v2481, %v2517
    %v2526 = vmul.f32 %v2522, %v2492
    %v2527 = vmul.f32 %v2523, %v2493
    %v2528 = vmul.f32 %v2524, %v2492
    %v2529 = vmul.f32 %v2525, %v2493
    %v2531 = vsel %vm398, %v2526, 0
    %v2534 = vsel %vm398, %v2527, 0
    %v2537 = vsel %vm398, %v2528, 0
    %v2540 = vsel %vm398, %v2529, 0
    %2542 = vmatprep.subr.mxu0 0.0
    %2543 = vmatpush1.msra.mxu0 0.0
    %2544 = vmatprep.subr.mxu0 0.0
    %2545 = vmatpush1.msra.mxu0 0.0
    %2546 = vmatprep.subr.mxu0 0.0
    %2547 = vmatpush1.msra.mxu0 0.0
    %2548 = vmatprep.subr.mxu0 0.0
    %2549 = vmatpush1.msra.mxu0 0.0
    %2550 = vmatprep.subr.mxu0 0.0
    %2551 = vmatpush1.msra.mxu0 0.0
    %2552 = vmatprep.subr.mxu0 0.0
    %2553 = vmatpush1.msra.mxu0 0.0
    %2554 = vmatprep.subr.mxu0 0.0
    %2555 = vmatpush1.msra.mxu0 0.0
    %2556 = vmatprep.subr.mxu0 0.0
    %2557 = vmatpush1.msra.mxu0 0.0
    %2558 = vmatprep.subr.mxu0 0.0
    %2559 = vmatpush1.msra.mxu0 %v77
    %2560 = vmatprep.subr.mxu0 0.0
    %2561 = vmatpush1.msra.mxu0 %v76
    %2562 = vmatprep.subr.mxu0 0.0
    %2563 = vmatpush1.msra.mxu0 %v75
    %2564 = vmatprep.subr.mxu0 0.0
    %2565 = vmatpush1.msra.mxu0 %v74
    %2566 = vmatprep.subr.mxu0 0.0
    %2567 = vmatpush1.msra.mxu0 %v73
    %2568 = vmatprep.subr.mxu0 0.0
    %2569 = vmatpush1.msra.mxu0 %v72
    %2570 = vmatprep.subr.mxu0 0.0
    %2571 = vmatpush1.msra.mxu0 %v71
    %2572 = vmatprep.subr.mxu0 0.0
    %2573 = vmatpush1.msra.mxu0 %v70
    %2574 = vmatprep.subr.mxu0 0.0
    %2575 = vmatpush2.msra.mxu0 0.0
    %2576 = vmatprep.subr.mxu0 0.0
    %2577 = vmatpush2.msra.mxu0 0.0
    %2578 = vmatprep.subr.mxu0 0.0
    %2579 = vmatpush2.msra.mxu0 0.0
    %2580 = vmatprep.subr.mxu0 0.0
    %2581 = vmatpush2.msra.mxu0 0.0
    %2582 = vmatprep.subr.mxu0 0.0
    %2583 = vmatpush2.msra.mxu0 0.0
    %2584 = vmatprep.subr.mxu0 0.0
    %2585 = vmatpush2.msra.mxu0 0.0
    %2586 = vmatprep.subr.mxu0 0.0
    %2587 = vmatpush2.msra.mxu0 0.0
    %2588 = vmatprep.subr.mxu0 0.0
    %2589 = vmatpush2.msra.mxu0 0.0
    %2590 = vmatprep.subr.mxu0 0.0
    %2591 = vmatpush2.msra.mxu0 0.0
    %2592 = vmatprep.subr.mxu0 0.0
    %2593 = vmatpush2.msra.mxu0 0.0
    %2594 = vmatprep.subr.mxu0 0.0
    %2595 = vmatpush2.msra.mxu0 0.0
    %2596 = vmatprep.subr.mxu0 0.0
    %2597 = vmatpush2.msra.mxu0 0.0
    %2598 = vmatprep.subr.mxu0 0.0
    %2599 = vmatpush2.msra.mxu0 0.0
    %2600 = vmatprep.subr.mxu0 0.0
    %2601 = vmatpush2.msra.mxu0 0.0
    %2602 = vmatprep.subr.mxu0 0.0
    %2603 = vmatpush2.msra.mxu0 0.0
    %2604 = vmatprep.subr.mxu0 0.0
    %2605 = vmatpush2.msra.mxu0 0.0
    %2606 = vmatprep.mubr.f32.mxu0 0.0
    %2607 = vmatmul.mubr.f32.gmra.mxu0 %v2531
    %v2608 = vpop.f32.mrf.mxu0
    %v2609 = vadd.f32 0.0, %v2608
    %v2610 = vpop.f32.mrf.mxu0
    %2611 = vmatprep.mubr.f32.mxu0 0.0
    %2612 = vmatmul.mubr.f32.gmra.mxu0 %v2534
    %v2613 = vpop.f32.mrf.mxu0
    %v2614 = vadd.f32 0.0, %v2613
    %v2615 = vpop.f32.mrf.mxu0
    %2616 = vmatprep.mubr.f32.mxu0 0.0
    %2617 = vmatmul.mubr.f32.gmra.mxu0 %v2537
    %v2618 = vpop.f32.mrf.mxu0
    %v2619 = vadd.f32 0.0, %v2618
    %v2620 = vpop.f32.mrf.mxu0
    %2621 = vmatprep.mubr.f32.mxu0 0.0
    %2622 = vmatmul.mubr.f32.gmra.mxu0 %v2540
    %v2623 = vpop.f32.mrf.mxu0
    %v2624 = vadd.f32 0.0, %v2623
    %v2625 = vpop.f32.mrf.mxu0
    %2626 = vdwg.mxu0
    %2631 = vrot.lane.b32.xlu0 %v2609, 120
    %v2632 = vpop.permute.xlu0 %2631
    %2633 = vrot.lane.b32.xlu0 %v2614, 120
    %v2634 = vpop.permute.xlu0 %2633
    %2635 = vrot.lane.b32.xlu0 %v2619, 120
    %v2636 = vpop.permute.xlu0 %2635
    %2637 = vrot.lane.b32.xlu0 %v2624, 120
    %v2638 = vpop.permute.xlu0 %2637
    %v2643 = vmax.f32 %v2609, %v2632
    %v2644 = vmax.f32 %v2614, %v2634
    %v2645 = vmax.f32 %v2619, %v2636
    %v2646 = vmax.f32 %v2624, %v2638
    %v2647 = vsub.f32 %v2609, %v2643
    %v2648 = vsub.f32 %v2614, %v2644
    %v2649 = vsub.f32 %v2619, %v2645
    %v2650 = vsub.f32 %v2624, %v2646
    %v2651 = vmul.f32 %v2647, 1.442695
    %v2652 = vpow.pop %v2651
    %v2653 = vmul.f32 %v2648, 1.442695
    %v2654 = vpow.pop %v2653
    %v2655 = vmul.f32 %v2649, 1.442695
    %v2656 = vpow.pop %v2655
    %v2657 = vmul.f32 %v2650, 1.442695
    %v2658 = vpow.pop %v2657
    %2663 = vrot.lane.b32.xlu0 %v2643, 8
    %v2664 = vpop.permute.xlu0 %2663
    %2665 = vrot.lane.b32.xlu0 %v2644, 8
    %v2666 = vpop.permute.xlu0 %2665
    %2667 = vrot.lane.b32.xlu0 %v2645, 8
    %v2668 = vpop.permute.xlu0 %2667
    %2669 = vrot.lane.b32.xlu0 %v2646, 8
    %v2670 = vpop.permute.xlu0 %2669
    %v2675 = vsub.f32 %v2609, %v2664
    %v2676 = vsub.f32 %v2614, %v2666
    %v2677 = vsub.f32 %v2619, %v2668
    %v2678 = vsub.f32 %v2624, %v2670
    %v2679 = vmul.f32 %v2675, 1.442695
    %v2680 = vpow.pop %v2679
    %v2681 = vmul.f32 %v2676, 1.442695
    %v2682 = vpow.pop %v2681
    %v2683 = vmul.f32 %v2677, 1.442695
    %v2684 = vpow.pop %v2683
    %v2685 = vmul.f32 %v2678, 1.442695
    %v2686 = vpow.pop %v2685
    %2691 = vrot.lane.b32.xlu0 %v2680, 120
    %v2692 = vpop.permute.xlu0 %2691
    %2693 = vrot.lane.b32.xlu0 %v2682, 120
    %v2694 = vpop.permute.xlu0 %2693
    %2695 = vrot.lane.b32.xlu0 %v2684, 120
    %v2696 = vpop.permute.xlu0 %2695
    %2697 = vrot.lane.b32.xlu0 %v2686, 120
    %v2698 = vpop.permute.xlu0 %2697
    %v2703 = vadd.f32 %v2652, %v2692
    %v2704 = vadd.f32 %v2654, %v2694
    %v2705 = vadd.f32 %v2656, %v2696
    %v2706 = vadd.f32 %v2658, %v2698
    %v2707 = vrcp.pop %v2703
    %v2708 = vrcp.pop %v2704
    %v2709 = vrcp.pop %v2705
    %v2710 = vrcp.pop %v2706
    %v2711 = vmul.f32 %v2652, %v2707
    %v2712 = vmul.f32 %v2654, %v2708
    %v2713 = vmul.f32 %v2656, %v2709
    %v2714 = vmul.f32 %v2658, %v2710
    %2719 = vrot.lane.b32.xlu0 %v2707, 8
    %v2720 = vpop.permute.xlu0 %2719
    %2721 = vrot.lane.b32.xlu0 %v2708, 8
    %v2722 = vpop.permute.xlu0 %2721
    %2723 = vrot.lane.b32.xlu0 %v2709, 8
    %v2724 = vpop.permute.xlu0 %2723
    %2725 = vrot.lane.b32.xlu0 %v2710, 8
    %v2726 = vpop.permute.xlu0 %2725
    %v2731 = vmul.f32 %v2680, %v2720
    %v2732 = vmul.f32 %v2682, %v2722
    %v2733 = vmul.f32 %v2684, %v2724
    %v2734 = vmul.f32 %v2686, %v2726
    %v2735 = vsel %vm604, %v2711, %v2731
    %v2736 = vsel %vm604, %v2712, %v2732
    %v2737 = vsel %vm604, %v2713, %v2733
    %v2738 = vsel %vm604, %v2714, %v2734
    %v2740 = vsel %vm609, %v2735, 0
    %v2743 = vsel %vm609, %v2736, 0
    %v2746 = vsel %vm609, %v2737, 0
    %v2749 = vsel %vm609, %v2738, 0
    %2751 = vmatprep.subr.mxu0 0.0
    %2752 = vmatpush1.msra.mxu0 0.0
    %2753 = vmatprep.subr.mxu0 0.0
    %2754 = vmatpush1.msra.mxu0 0.0
    %2755 = vmatprep.subr.mxu0 0.0
    %2756 = vmatpush1.msra.mxu0 0.0
    %2757 = vmatprep.subr.mxu0 0.0
    %2758 = vmatpush1.msra.mxu0 0.0
    %2759 = vmatprep.subr.mxu0 0.0
    %2760 = vmatpush1.msra.mxu0 0.0
    %2761 = vmatprep.subr.mxu0 0.0
    %2762 = vmatpush1.msra.mxu0 0.0
    %2763 = vmatprep.subr.mxu0 0.0
    %2764 = vmatpush1.msra.mxu0 0.0
    %2765 = vmatprep.subr.mxu0 0.0
    %2766 = vmatpush1.msra.mxu0 0.0
    %2767 = vmatprep.subr.mxu0 0.0
    %2768 = vmatpush1.msra.mxu0 0.0
    %2769 = vmatprep.subr.mxu0 0.0
    %2770 = vmatpush1.msra.mxu0 0.0
    %2771 = vmatprep.subr.mxu0 0.0
    %2772 = vmatpush1.msra.mxu0 0.0
    %2773 = vmatprep.subr.mxu0 0.0
    %2774 = vmatpush1.msra.mxu0 0.0
    %2775 = vmatprep.subr.mxu0 0.0
    %2776 = vmatpush1.msra.mxu0 0.0
    %2777 = vmatprep.subr.mxu0 0.0
    %2778 = vmatpush1.msra.mxu0 0.0
    %2779 = vmatprep.subr.mxu0 0.0
    %2780 = vmatpush1.msra.mxu0 %v89
    %2781 = vmatprep.subr.mxu0 0.0
    %2782 = vmatpush1.msra.mxu0 %v88
    %2783 = vmatprep.subr.mxu0 0.0
    %2784 = vmatpush2.msra.mxu0 0.0
    %2785 = vmatprep.subr.mxu0 0.0
    %2786 = vmatpush2.msra.mxu0 0.0
    %2787 = vmatprep.subr.mxu0 0.0
    %2788 = vmatpush2.msra.mxu0 0.0
    %2789 = vmatprep.subr.mxu0 0.0
    %2790 = vmatpush2.msra.mxu0 0.0
    %2791 = vmatprep.subr.mxu0 0.0
    %2792 = vmatpush2.msra.mxu0 0.0
    %2793 = vmatprep.subr.mxu0 0.0
    %2794 = vmatpush2.msra.mxu0 0.0
    %2795 = vmatprep.subr.mxu0 0.0
    %2796 = vmatpush2.msra.mxu0 0.0
    %2797 = vmatprep.subr.mxu0 0.0
    %2798 = vmatpush2.msra.mxu0 0.0
    %2799 = vmatprep.subr.mxu0 0.0
    %2800 = vmatpush2.msra.mxu0 0.0
    %2801 = vmatprep.subr.mxu0 0.0
    %2802 = vmatpush2.msra.mxu0 0.0
    %2803 = vmatprep.subr.mxu0 0.0
    %2804 = vmatpush2.msra.mxu0 0.0
    %2805 = vmatprep.subr.mxu0 0.0
    %2806 = vmatpush2.msra.mxu0 0.0
    %2807 = vmatprep.subr.mxu0 0.0
    %2808 = vmatpush2.msra.mxu0 0.0
    %2809 = vmatprep.subr.mxu0 0.0
    %2810 = vmatpush2.msra.mxu0 0.0
    %2811 = vmatprep.subr.mxu0 0.0
    %2812 = vmatpush2.msra.mxu0 0.0
    %2813 = vmatprep.subr.mxu0 0.0
    %2814 = vmatpush2.msra.mxu0 0.0
    %2815 = vmatprep.mubr.f32.mxu0 0.0
    %2816 = vmatmul.mubr.f32.gmra.mxu0 %v2740
    %v2817 = vpop.f32.mrf.mxu0
    %v2818 = vadd.f32 0.0, %v2817
    %v2819 = vpop.f32.mrf.mxu0
    %2820 = vmatprep.mubr.f32.mxu0 0.0
    %2821 = vmatmul.mubr.f32.gmra.mxu0 %v2743
    %v2822 = vpop.f32.mrf.mxu0
    %v2823 = vadd.f32 0.0, %v2822
    %v2824 = vpop.f32.mrf.mxu0
    %2825 = vmatprep.mubr.f32.mxu0 0.0
    %2826 = vmatmul.mubr.f32.gmra.mxu0 %v2746
    %v2827 = vpop.f32.mrf.mxu0
    %v2828 = vadd.f32 0.0, %v2827
    %v2829 = vpop.f32.mrf.mxu0
    %2830 = vmatprep.mubr.f32.mxu0 0.0
    %2831 = vmatmul.mubr.f32.gmra.mxu0 %v2749
    %v2832 = vpop.f32.mrf.mxu0
    %v2833 = vadd.f32 0.0, %v2832
    %v2834 = vpop.f32.mrf.mxu0
    %2835 = vdwg.mxu0
    %v2836 = vmul.f32 %v2818, %v2508
    %v2837 = vmul.f32 %v2823, %v2509
    %v2838 = vmul.f32 %v2828, %v2508
    %v2839 = vmul.f32 %v2833, %v2509
    %2844 = vrot.lane.b32.xlu0 %v2836, 96
    %v2845 = vpop.permute.xlu0 %2844
    %2846 = vrot.lane.b32.xlu0 %v2837, 96
    %v2847 = vpop.permute.xlu0 %2846
    %2848 = vrot.lane.b32.xlu0 %v2838, 96
    %v2849 = vpop.permute.xlu0 %2848
    %2850 = vrot.lane.b32.xlu0 %v2839, 96
    %v2851 = vpop.permute.xlu0 %2850
    %v2856 = vadd.f32 %v2836, %v2845
    %v2857 = vadd.f32 %v2837, %v2847
    %v2858 = vadd.f32 %v2838, %v2849
    %v2859 = vadd.f32 %v2839, %v2851
    %v2860 = vlaneseq
    %v2861 = vshrl.u32 %v2860, 7
    %v2862 = vsub.s32 2, %v2861
    %v2863 = vrot.slane %v2382, %v2862
    %v2865 = vsel %vm254, %v2856, 0
    %v2868 = vsel %vm254, %v2857, 0
    %v2871 = vsel %vm254, %v2858, 0
    %v2874 = vsel %vm254, %v2859, 0
    %2876 = vmatprep.subr.mxu0 0.0
    %2877 = vmatpush1.msra.mxu0 0.0
    %2878 = vmatprep.subr.mxu0 0.0
    %2879 = vmatpush1.msra.mxu0 0.0
    %2880 = vmatprep.subr.mxu0 0.0
    %2881 = vmatpush1.msra.mxu0 0.0
    %2882 = vmatprep.subr.mxu0 0.0
    %2883 = vmatpush1.msra.mxu0 0.0
    %2884 = vmatprep.subr.mxu0 0.0
    %2885 = vmatpush1.msra.mxu0 0.0
    %2886 = vmatprep.subr.mxu0 0.0
    %2887 = vmatpush1.msra.mxu0 0.0
    %2888 = vmatprep.subr.mxu0 0.0
    %2889 = vmatpush1.msra.mxu0 0.0
    %2890 = vmatprep.subr.mxu0 0.0
    %2891 = vmatpush1.msra.mxu0 0.0
    %2892 = vmatprep.subr.mxu0 0.0
    %2893 = vmatpush1.msra.mxu0 0.0
    %2894 = vmatprep.subr.mxu0 0.0
    %2895 = vmatpush1.msra.mxu0 0.0
    %2896 = vmatprep.subr.mxu0 0.0
    %2897 = vmatpush1.msra.mxu0 0.0
    %2898 = vmatprep.subr.mxu0 0.0
    %2899 = vmatpush1.msra.mxu0 0.0
    %2900 = vmatprep.subr.mxu0 0.0
    %2901 = vmatpush1.msra.mxu0 %v2380
    %2902 = vmatprep.subr.mxu0 0.0
    %2903 = vmatpush1.msra.mxu0 %v2379
    %2904 = vmatprep.subr.mxu0 0.0
    %2905 = vmatpush1.msra.mxu0 %v2378
    %2906 = vmatprep.subr.mxu0 0.0
    %2907 = vmatpush1.msra.mxu0 %v2377
    %2908 = vmatprep.subr.mxu0 0.0
    %2909 = vmatpush2.msra.mxu0 0.0
    %2910 = vmatprep.subr.mxu0 0.0
    %2911 = vmatpush2.msra.mxu0 0.0
    %2912 = vmatprep.subr.mxu0 0.0
    %2913 = vmatpush2.msra.mxu0 0.0
    %2914 = vmatprep.subr.mxu0 0.0
    %2915 = vmatpush2.msra.mxu0 0.0
    %2916 = vmatprep.subr.mxu0 0.0
    %2917 = vmatpush2.msra.mxu0 0.0
    %2918 = vmatprep.subr.mxu0 0.0
    %2919 = vmatpush2.msra.mxu0 0.0
    %2920 = vmatprep.subr.mxu0 0.0
    %2921 = vmatpush2.msra.mxu0 0.0
    %2922 = vmatprep.subr.mxu0 0.0
    %2923 = vmatpush2.msra.mxu0 0.0
    %2924 = vmatprep.subr.mxu0 0.0
    %2925 = vmatpush2.msra.mxu0 0.0
    %2926 = vmatprep.subr.mxu0 0.0
    %2927 = vmatpush2.msra.mxu0 0.0
    %2928 = vmatprep.subr.mxu0 0.0
    %2929 = vmatpush2.msra.mxu0 0.0
    %2930 = vmatprep.subr.mxu0 0.0
    %2931 = vmatpush2.msra.mxu0 0.0
    %2932 = vmatprep.subr.mxu0 0.0
    %2933 = vmatpush2.msra.mxu0 0.0
    %2934 = vmatprep.subr.mxu0 0.0
    %2935 = vmatpush2.msra.mxu0 0.0
    %2936 = vmatprep.subr.mxu0 0.0
    %2937 = vmatpush2.msra.mxu0 0.0
    %2938 = vmatprep.subr.mxu0 0.0
    %2939 = vmatpush2.msra.mxu0 0.0
    %2940 = vmatprep.mubr.f32.mxu0 0.0
    %2941 = vmatmul.mubr.f32.gmra.mxu0 %v2865
    %v2942 = vpop.f32.mrf.mxu0
    %v2943 = vadd.f32 %v2863, %v2942
    %v2944 = vpop.f32.mrf.mxu0
    %2945 = vmatprep.mubr.f32.mxu0 0.0
    %2946 = vmatmul.mubr.f32.gmra.mxu0 %v2868
    %v2947 = vpop.f32.mrf.mxu0
    %v2948 = vadd.f32 %v2863, %v2947
    %v2949 = vpop.f32.mrf.mxu0
    %2950 = vmatprep.mubr.f32.mxu0 0.0
    %2951 = vmatmul.mubr.f32.gmra.mxu0 %v2871
    %v2952 = vpop.f32.mrf.mxu0
    %v2953 = vadd.f32 %v2863, %v2952
    %v2954 = vpop.f32.mrf.mxu0
    %2955 = vmatprep.mubr.f32.mxu0 0.0
    %2956 = vmatmul.mubr.f32.gmra.mxu0 %v2874
    %v2957 = vpop.f32.mrf.mxu0
    %v2958 = vadd.f32 %v2863, %v2957
    %v2959 = vpop.f32.mrf.mxu0
    %2960 = vdwg.mxu0
    %v2961 = vadd.f32 %v2347, %v2943
    %v2962 = vadd.f32 %v2348, %v2948
    %v2963 = vadd.f32 %v2349, %v2953
    %v2964 = vadd.f32 %v2350, %v2958
    %v2965 = vsel %vm254, %v2961, 0.0
    %2966 = vadd.xlane.f32.xlu0 %v2965
    %v2967 = vpop.xlane.xlu0 %2966
    %v2968 = vsel %vm254, %v2962, 0.0
    %2969 = vadd.xlane.f32.xlu0 %v2968
    %v2970 = vpop.xlane.xlu0 %2969
    %v2971 = vsel %vm254, %v2963, 0.0
    %2972 = vadd.xlane.f32.xlu0 %v2971
    %v2973 = vpop.xlane.xlu0 %2972
    %v2974 = vsel %vm254, %v2964, 0.0
    %2975 = vadd.xlane.f32.xlu0 %v2974
    %v2976 = vpop.xlane.xlu0 %2975
    %v2977 = vmul.f32 %v2967, %v848
    %v2978 = vmul.f32 %v2970, %v848
    %v2979 = vmul.f32 %v2973, %v848
    %v2980 = vmul.f32 %v2976, %v848
    %v2981 = vsub.f32 %v2961, %v2977
    %v2982 = vsub.f32 %v2962, %v2978
    %v2983 = vsub.f32 %v2963, %v2979
    %v2984 = vsub.f32 %v2964, %v2980
    %v2985 = vmul.f32 %v2981, %v2981
    %v2986 = vmul.f32 %v2982, %v2982
    %v2987 = vmul.f32 %v2983, %v2983
    %v2988 = vmul.f32 %v2984, %v2984
    %v2989 = vsel %vm254, %v2985, 0.0
    %2990 = vadd.xlane.f32.xlu0 %v2989
    %v2991 = vpop.xlane.xlu0 %2990
    %v2992 = vsel %vm254, %v2986, 0.0
    %2993 = vadd.xlane.f32.xlu0 %v2992
    %v2994 = vpop.xlane.xlu0 %2993
    %v2995 = vsel %vm254, %v2987, 0.0
    %2996 = vadd.xlane.f32.xlu0 %v2995
    %v2997 = vpop.xlane.xlu0 %2996
    %v2998 = vsel %vm254, %v2988, 0.0
    %2999 = vadd.xlane.f32.xlu0 %v2998
    %v3000 = vpop.xlane.xlu0 %2999
    %v3001 = vmul.f32 %v2991, %v848
    %v3002 = vmul.f32 %v2994, %v848
    %v3003 = vmul.f32 %v2997, %v848
    %v3004 = vmul.f32 %v3000, %v848
    %v3005 = vadd.f32 %v3001, 1e-05
    %v3006 = vadd.f32 %v3002, 1e-05
    %v3007 = vadd.f32 %v3003, 1e-05
    %v3008 = vadd.f32 %v3004, 1e-05
    %v3009 = vrsqrt.pop %v3005
    %v3010 = vrsqrt.pop %v3006
    %v3011 = vrsqrt.pop %v3007
    %v3012 = vrsqrt.pop %v3008
    %v3013 = vmul.f32 %v2981, %v3009
    %v3014 = vmul.f32 %v2982, %v3010
    %v3015 = vmul.f32 %v2983, %v3011
    %v3016 = vmul.f32 %v2984, %v3012
    %v3017 = vlaneseq
    %v3018 = vshrl.u32 %v3017, 7
    %v3019 = vsub.s32 3, %v3018
    %v3020 = vrot.slane %v2382, %v3019
    %v3021 = vmul.f32 %v3013, %v3020
    %v3022 = vmul.f32 %v3014, %v3020
    %v3023 = vmul.f32 %v3015, %v3020
    %v3024 = vmul.f32 %v3016, %v3020
    %v3025 = vlaneseq
    %v3026 = vshrl.u32 %v3025, 7
    %v3027 = vsub.s32 4, %v3026
    %v3028 = vrot.slane %v2382, %v3027
    %v3029 = vadd.f32 %v3021, %v3028
    %v3030 = vadd.f32 %v3022, %v3028
    %v3031 = vadd.f32 %v3023, %v3028
    %v3032 = vadd.f32 %v3024, %v3028
    %v3033 = vlaneseq
    %v3034 = vshrl.u32 %v3033, 7
    %v3035 = vsub.s32 1, %v3034
    %v3036 = vrot.slane %v2382, %v3035
    %v3038 = vsel %vm254, %v3029, 0
    %v3041 = vsel %vm254, %v3030, 0
    %v3044 = vsel %vm254, %v3031, 0
    %v3047 = vsel %vm254, %v3032, 0
    %3049 = vmatprep.subr.mxu0 0.0
    %3050 = vmatpush1.msra.mxu0 0.0
    %3051 = vmatprep.subr.mxu0 0.0
    %3052 = vmatpush1.msra.mxu0 0.0
    %3053 = vmatprep.subr.mxu0 0.0
    %3054 = vmatpush1.msra.mxu0 0.0
    %3055 = vmatprep.subr.mxu0 0.0
    %3056 = vmatpush1.msra.mxu0 0.0
    %3057 = vmatprep.subr.mxu0 0.0
    %3058 = vmatpush1.msra.mxu0 0.0
    %3059 = vmatprep.subr.mxu0 0.0
    %3060 = vmatpush1.msra.mxu0 0.0
    %3061 = vmatprep.subr.mxu0 0.0
    %3062 = vmatpush1.msra.mxu0 0.0
    %3063 = vmatprep.subr.mxu0 0.0
    %3064 = vmatpush1.msra.mxu0 0.0
    %3065 = vmatprep.subr.mxu0 0.0
    %3066 = vmatpush1.msra.mxu0 0.0
    %3067 = vmatprep.subr.mxu0 0.0
    %3068 = vmatpush1.msra.mxu0 0.0
    %3069 = vmatprep.subr.mxu0 0.0
    %3070 = vmatpush1.msra.mxu0 0.0
    %3071 = vmatprep.subr.mxu0 0.0
    %3072 = vmatpush1.msra.mxu0 0.0
    %3073 = vmatprep.subr.mxu0 0.0
    %3074 = vmatpush1.msra.mxu0 %v2359
    %3075 = vmatprep.subr.mxu0 0.0
    %3076 = vmatpush1.msra.mxu0 %v2358
    %3077 = vmatprep.subr.mxu0 0.0
    %3078 = vmatpush1.msra.mxu0 %v2357
    %3079 = vmatprep.subr.mxu0 0.0
    %3080 = vmatpush1.msra.mxu0 %v2356
    %3081 = vmatprep.subr.mxu0 0.0
    %3082 = vmatpush2.msra.mxu0 0.0
    %3083 = vmatprep.subr.mxu0 0.0
    %3084 = vmatpush2.msra.mxu0 0.0
    %3085 = vmatprep.subr.mxu0 0.0
    %3086 = vmatpush2.msra.mxu0 0.0
    %3087 = vmatprep.subr.mxu0 0.0
    %3088 = vmatpush2.msra.mxu0 0.0
    %3089 = vmatprep.subr.mxu0 0.0
    %3090 = vmatpush2.msra.mxu0 0.0
    %3091 = vmatprep.subr.mxu0 0.0
    %3092 = vmatpush2.msra.mxu0 0.0
    %3093 = vmatprep.subr.mxu0 0.0
    %3094 = vmatpush2.msra.mxu0 0.0
    %3095 = vmatprep.subr.mxu0 0.0
    %3096 = vmatpush2.msra.mxu0 0.0
    %3097 = vmatprep.subr.mxu0 0.0
    %3098 = vmatpush2.msra.mxu0 0.0
    %3099 = vmatprep.subr.mxu0 0.0
    %3100 = vmatpush2.msra.mxu0 0.0
    %3101 = vmatprep.subr.mxu0 0.0
    %3102 = vmatpush2.msra.mxu0 0.0
    %3103 = vmatprep.subr.mxu0 0.0
    %3104 = vmatpush2.msra.mxu0 0.0
    %3105 = vmatprep.subr.mxu0 0.0
    %3106 = vmatpush2.msra.mxu0 0.0
    %3107 = vmatprep.subr.mxu0 0.0
    %3108 = vmatpush2.msra.mxu0 0.0
    %3109 = vmatprep.subr.mxu0 0.0
    %3110 = vmatpush2.msra.mxu0 0.0
    %3111 = vmatprep.subr.mxu0 0.0
    %3112 = vmatpush2.msra.mxu0 0.0
    %3113 = vmatprep.mubr.f32.mxu0 0.0
    %3114 = vmatmul.mubr.f32.gmra.mxu0 %v3038
    %v3115 = vpop.f32.mrf.mxu0
    %v3116 = vadd.f32 %v3036, %v3115
    %v3117 = vpop.f32.mrf.mxu0
    %3118 = vmatprep.mubr.f32.mxu0 0.0
    %3119 = vmatmul.mubr.f32.gmra.mxu0 %v3041
    %v3120 = vpop.f32.mrf.mxu0
    %v3121 = vadd.f32 %v3036, %v3120
    %v3122 = vpop.f32.mrf.mxu0
    %3123 = vmatprep.mubr.f32.mxu0 0.0
    %3124 = vmatmul.mubr.f32.gmra.mxu0 %v3044
    %v3125 = vpop.f32.mrf.mxu0
    %v3126 = vadd.f32 %v3036, %v3125
    %v3127 = vpop.f32.mrf.mxu0
    %3128 = vmatprep.mubr.f32.mxu0 0.0
    %3129 = vmatmul.mubr.f32.gmra.mxu0 %v3047
    %v3130 = vpop.f32.mrf.mxu0
    %v3131 = vadd.f32 %v3036, %v3130
    %v3132 = vpop.f32.mrf.mxu0
    %3133 = vdwg.mxu0
    %v3134 = vmul.f32 %v3116, 0.5
    %v3135 = vmul.f32 %v3121, 0.5
    %v3136 = vmul.f32 %v3126, 0.5
    %v3137 = vmul.f32 %v3131, 0.5
    %v3138 = vmul.f32 %v3116, 0.70710677
    %v3139 = vmul.f32 %v3121, 0.70710677
    %v3140 = vmul.f32 %v3126, 0.70710677
    %v3141 = vmul.f32 %v3131, 0.70710677
    %v3142 = vmax.f32 %v3138, -4.0
    %v3143 = vmax.f32 %v3139, -4.0
    %v3144 = vmax.f32 %v3140, -4.0
    %v3145 = vmax.f32 %v3141, -4.0
    %v3146 = vmin.f32 %v3142, 4.0
    %v3147 = vmin.f32 %v3143, 4.0
    %v3148 = vmin.f32 %v3144, 4.0
    %v3149 = vmin.f32 %v3145, 4.0
    %v3150 = vmul.f32 %v3146, %v3146
    %v3151 = vmul.f32 %v3147, %v3147
    %v3152 = vmul.f32 %v3148, %v3148
    %v3153 = vmul.f32 %v3149, %v3149
    %v3154 = vmul.f32 %v3150, -2.7261424e-10
    %v3155 = vmul.f32 %v3151, -2.7261424e-10
    %v3156 = vmul.f32 %v3152, -2.7261424e-10
    %v3157 = vmul.f32 %v3153, -2.7261424e-10
    %v3158 = vadd.f32 %v3154, 2.7706815e-08
    %v3159 = vadd.f32 %v3155, 2.7706815e-08
    %v3160 = vadd.f32 %v3156, 2.7706815e-08
    %v3161 = vadd.f32 %v3157, 2.7706815e-08
    %v3162 = vmul.f32 %v3150, %v3158
    %v3163 = vmul.f32 %v3151, %v3159
    %v3164 = vmul.f32 %v3152, %v3160
    %v3165 = vmul.f32 %v3153, %v3161
    %v3166 = vadd.f32 %v3162, -2.101024e-06
    %v3167 = vadd.f32 %v3163, -2.101024e-06
    %v3168 = vadd.f32 %v3164, -2.101024e-06
    %v3169 = vadd.f32 %v3165, -2.101024e-06
    %v3170 = vmul.f32 %v3150, %v3166
    %v3171 = vmul.f32 %v3151, %v3167
    %v3172 = vmul.f32 %v3152, %v3168
    %v3173 = vmul.f32 %v3153, %v3169
    %v3174 = vadd.f32 %v3170, -5.6925062e-05
    %v3175 = vadd.f32 %v3171, -5.6925062e-05
    %v3176 = vadd.f32 %v3172, -5.6925062e-05
    %v3177 = vadd.f32 %v3173, -5.6925062e-05
    %v3178 = vmul.f32 %v3150, %v3174
    %v3179 = vmul.f32 %v3151, %v3175
    %v3180 = vmul.f32 %v3152, %v3176
    %v3181 = vmul.f32 %v3153, %v3177
    %v3182 = vadd.f32 %v3178, -0.00073499064
    %v3183 = vadd.f32 %v3179, -0.00073499064
    %v3184 = vadd.f32 %v3180, -0.00073499064
    %v3185 = vadd.f32 %v3181, -0.00073499064
    %v3186 = vmul.f32 %v3150, %v3182
    %v3187 = vmul.f32 %v3151, %v3183
    %v3188 = vmul.f32 %v3152, %v3184
    %v3189 = vmul.f32 %v3153, %v3185
    %v3190 = vadd.f32 %v3186, -0.0029546
    %v3191 = vadd.f32 %v3187, -0.0029546
    %v3192 = vadd.f32 %v3188, -0.0029546
    %v3193 = vadd.f32 %v3189, -0.0029546
    %v3194 = vmul.f32 %v3150, %v3190
    %v3195 = vmul.f32 %v3151, %v3191
    %v3196 = vmul.f32 %v3152, %v3192
    %v3197 = vmul.f32 %v3153, %v3193
    %v3198 = vadd.f32 %v3194, -0.016096033
    %v3199 = vadd.f32 %v3195, -0.016096033
    %v3200 = vadd.f32 %v3196, -0.016096033
    %v3201 = vadd.f32 %v3197, -0.016096033
    %v3202 = vmul.f32 %v3146, %v3198
    %v3203 = vmul.f32 %v3147, %v3199
    %v3204 = vmul.f32 %v3148, %v3200
    %v3205 = vmul.f32 %v3149, %v3201
    %v3206 = vmul.f32 %v3150, -1.45660715e-05
    %v3207 = vmul.f32 %v3151, -1.45660715e-05
    %v3208 = vmul.f32 %v3152, -1.45660715e-05
    %v3209 = vmul.f32 %v3153, -1.45660715e-05
    %v3210 = vadd.f32 %v3206, -0.00021337405
    %v3211 = vadd.f32 %v3207, -0.00021337405
    %v3212 = vadd.f32 %v3208, -0.00021337405
    %v3213 = vadd.f32 %v3209, -0.00021337405
    %v3214 = vmul.f32 %v3150, %v3210
    %v3215 = vmul.f32 %v3151, %v3211
    %v3216 = vmul.f32 %v3152, %v3212
    %v3217 = vmul.f32 %v3153, %v3213
    %v3218 = vadd.f32 %v3214, -0.001682827
    %v3219 = vadd.f32 %v3215, -0.001682827
    %v3220 = vadd.f32 %v3216, -0.001682827
    %v3221 = vadd.f32 %v3217, -0.001682827
    %v3222 = vmul.f32 %v3150, %v3218
    %v3223 = vmul.f32 %v3151, %v3219
    %v3224 = vmul.f32 %v3152, %v3220
    %v3225 = vmul.f32 %v3153, %v3221
    %v3226 = vadd.f32 %v3222, -0.0073733293
    %v3227 = vadd.f32 %v3223, -0.0073733293
    %v3228 = vadd.f32 %v3224, -0.0073733293
    %v3229 = vadd.f32 %v3225, -0.0073733293
    %v3230 = vmul.f32 %v3150, %v3226
    %v3231 = vmul.f32 %v3151, %v3227
    %v3232 = vmul.f32 %v3152, %v3228
    %v3233 = vmul.f32 %v3153, %v3229
    %v3234 = vadd.f32 %v3230, -0.014264739
    %v3235 = vadd.f32 %v3231, -0.014264739
    %v3236 = vadd.f32 %v3232, -0.014264739
    %v3237 = vadd.f32 %v3233, -0.014264739
    %v3238 = vrcp.pop %v3234
    %v3239 = vmul.f32 %v3202, %v3238
    %v3240 = vrcp.pop %v3235
    %v3241 = vmul.f32 %v3203, %v3240
    %v3242 = vrcp.pop %v3236
    %v3243 = vmul.f32 %v3204, %v3242
    %v3244 = vrcp.pop %v3237
    %v3245 = vmul.f32 %v3205, %v3244
    %v3246 = vadd.f32 %v3239, 1.0
    %v3247 = vadd.f32 %v3241, 1.0
    %v3248 = vadd.f32 %v3243, 1.0
    %v3249 = vadd.f32 %v3245, 1.0
    %v3250 = vmul.f32 %v3134, %v3246
    %v3251 = vmul.f32 %v3135, %v3247
    %v3252 = vmul.f32 %v3136, %v3248
    %v3253 = vmul.f32 %v3137, %v3249
    %v3254 = vlaneseq
    %v3255 = vshrl.u32 %v3254, 7
    %v3256 = vsub.s32 7, %v3255
    %v3257 = vrot.slane %v2382, %v3256
    %3258 = vmatprep.subr.mxu0 0.0
    %3259 = vmatpush1.msra.mxu0 %v2376
    %3260 = vmatprep.subr.mxu0 0.0
    %3261 = vmatpush1.msra.mxu0 %v2375
    %3262 = vmatprep.subr.mxu0 0.0
    %3263 = vmatpush1.msra.mxu0 %v2374
    %3264 = vmatprep.subr.mxu0 0.0
    %3265 = vmatpush1.msra.mxu0 %v2373
    %3266 = vmatprep.subr.mxu0 0.0
    %3267 = vmatpush1.msra.mxu0 %v2372
    %3268 = vmatprep.subr.mxu0 0.0
    %3269 = vmatpush1.msra.mxu0 %v2371
    %3270 = vmatprep.subr.mxu0 0.0
    %3271 = vmatpush1.msra.mxu0 %v2370
    %3272 = vmatprep.subr.mxu0 0.0
    %3273 = vmatpush1.msra.mxu0 %v2369
    %3274 = vmatprep.subr.mxu0 0.0
    %3275 = vmatpush1.msra.mxu0 %v2368
    %3276 = vmatprep.subr.mxu0 0.0
    %3277 = vmatpush1.msra.mxu0 %v2367
    %3278 = vmatprep.subr.mxu0 0.0
    %3279 = vmatpush1.msra.mxu0 %v2366
    %3280 = vmatprep.subr.mxu0 0.0
    %3281 = vmatpush1.msra.mxu0 %v2365
    %3282 = vmatprep.subr.mxu0 0.0
    %3283 = vmatpush1.msra.mxu0 %v2364
    %3284 = vmatprep.subr.mxu0 0.0
    %3285 = vmatpush1.msra.mxu0 %v2363
    %3286 = vmatprep.subr.mxu0 0.0
    %3287 = vmatpush1.msra.mxu0 %v2362
    %3288 = vmatprep.subr.mxu0 0.0
    %3289 = vmatpush1.msra.mxu0 %v2361
    %3290 = vmatprep.subr.mxu0 0.0
    %3291 = vmatpush2.msra.mxu0 0.0
    %3292 = vmatprep.subr.mxu0 0.0
    %3293 = vmatpush2.msra.mxu0 0.0
    %3294 = vmatprep.subr.mxu0 0.0
    %3295 = vmatpush2.msra.mxu0 0.0
    %3296 = vmatprep.subr.mxu0 0.0
    %3297 = vmatpush2.msra.mxu0 0.0
    %3298 = vmatprep.subr.mxu0 0.0
    %3299 = vmatpush2.msra.mxu0 0.0
    %3300 = vmatprep.subr.mxu0 0.0
    %3301 = vmatpush2.msra.mxu0 0.0
    %3302 = vmatprep.subr.mxu0 0.0
    %3303 = vmatpush2.msra.mxu0 0.0
    %3304 = vmatprep.subr.mxu0 0.0
    %3305 = vmatpush2.msra.mxu0 0.0
    %3306 = vmatprep.subr.mxu0 0.0
    %3307 = vmatpush2.msra.mxu0 0.0
    %3308 = vmatprep.subr.mxu0 0.0
    %3309 = vmatpush2.msra.mxu0 0.0
    %3310 = vmatprep.subr.mxu0 0.0
    %3311 = vmatpush2.msra.mxu0 0.0
    %3312 = vmatprep.subr.mxu0 0.0
    %3313 = vmatpush2.msra.mxu0 0.0
    %3314 = vmatprep.subr.mxu0 0.0
    %3315 = vmatpush2.msra.mxu0 0.0
    %3316 = vmatprep.subr.mxu0 0.0
    %3317 = vmatpush2.msra.mxu0 0.0
    %3318 = vmatprep.subr.mxu0 0.0
    %3319 = vmatpush2.msra.mxu0 0.0
    %3320 = vmatprep.subr.mxu0 0.0
    %3321 = vmatpush2.msra.mxu0 0.0
    %3322 = vmatprep.mubr.f32.mxu0 0.0
    %3323 = vmatmul.mubr.f32.gmra.mxu0 %v3250
    %v3324 = vpop.f32.mrf.mxu0
    %v3325 = vadd.f32 %v3257, %v3324
    %v3326 = vpop.f32.mrf.mxu0
    %3327 = vmatprep.mubr.f32.mxu0 0.0
    %3328 = vmatmul.mubr.f32.gmra.mxu0 %v3251
    %v3329 = vpop.f32.mrf.mxu0
    %v3330 = vadd.f32 %v3257, %v3329
    %v3331 = vpop.f32.mrf.mxu0
    %3332 = vmatprep.mubr.f32.mxu0 0.0
    %3333 = vmatmul.mubr.f32.gmra.mxu0 %v3252
    %v3334 = vpop.f32.mrf.mxu0
    %v3335 = vadd.f32 %v3257, %v3334
    %v3336 = vpop.f32.mrf.mxu0
    %3337 = vmatprep.mubr.f32.mxu0 0.0
    %3338 = vmatmul.mubr.f32.gmra.mxu0 %v3253
    %v3339 = vpop.f32.mrf.mxu0
    %v3340 = vadd.f32 %v3257, %v3339
    %v3341 = vpop.f32.mrf.mxu0
    %3342 = vdwg.mxu0
    %v3343 = vadd.f32 %v3029, %v3325
    %v3344 = vadd.f32 %v3030, %v3330
    %v3345 = vadd.f32 %v3031, %v3335
    %v3346 = vadd.f32 %v3032, %v3340
    %v3347 = vsel %vm254, %v3343, 0.0
    %3348 = vadd.xlane.f32.xlu0 %v3347
    %v3349 = vpop.xlane.xlu0 %3348
    %v3350 = vsel %vm254, %v3344, 0.0
    %3351 = vadd.xlane.f32.xlu0 %v3350
    %v3352 = vpop.xlane.xlu0 %3351
    %v3353 = vsel %vm254, %v3345, 0.0
    %3354 = vadd.xlane.f32.xlu0 %v3353
    %v3355 = vpop.xlane.xlu0 %3354
    %v3356 = vsel %vm254, %v3346, 0.0
    %3357 = vadd.xlane.f32.xlu0 %v3356
    %v3358 = vpop.xlane.xlu0 %3357
    %v3359 = vmul.f32 %v3349, %v848
    %v3360 = vmul.f32 %v3352, %v848
    %v3361 = vmul.f32 %v3355, %v848
    %v3362 = vmul.f32 %v3358, %v848
    %v3363 = vsub.f32 %v3343, %v3359
    %v3364 = vsub.f32 %v3344, %v3360
    %v3365 = vsub.f32 %v3345, %v3361
    %v3366 = vsub.f32 %v3346, %v3362
    %v3367 = vmul.f32 %v3363, %v3363
    %v3368 = vmul.f32 %v3364, %v3364
    %v3369 = vmul.f32 %v3365, %v3365
    %v3370 = vmul.f32 %v3366, %v3366
    %v3371 = vsel %vm254, %v3367, 0.0
    %3372 = vadd.xlane.f32.xlu0 %v3371
    %v3373 = vpop.xlane.xlu0 %3372
    %v3374 = vsel %vm254, %v3368, 0.0
    %3375 = vadd.xlane.f32.xlu0 %v3374
    %v3376 = vpop.xlane.xlu0 %3375
    %v3377 = vsel %vm254, %v3369, 0.0
    %3378 = vadd.xlane.f32.xlu0 %v3377
    %v3379 = vpop.xlane.xlu0 %3378
    %v3380 = vsel %vm254, %v3370, 0.0
    %3381 = vadd.xlane.f32.xlu0 %v3380
    %v3382 = vpop.xlane.xlu0 %3381
    %v3383 = vmul.f32 %v3373, %v848
    %v3384 = vmul.f32 %v3376, %v848
    %v3385 = vmul.f32 %v3379, %v848
    %v3386 = vmul.f32 %v3382, %v848
    %v3387 = vadd.f32 %v3383, 1e-05
    %v3388 = vadd.f32 %v3384, 1e-05
    %v3389 = vadd.f32 %v3385, 1e-05
    %v3390 = vadd.f32 %v3386, 1e-05
    %v3391 = vrsqrt.pop %v3387
    %v3392 = vrsqrt.pop %v3388
    %v3393 = vrsqrt.pop %v3389
    %v3394 = vrsqrt.pop %v3390
    %v3395 = vmul.f32 %v3363, %v3391
    %v3396 = vmul.f32 %v3364, %v3392
    %v3397 = vmul.f32 %v3365, %v3393
    %v3398 = vmul.f32 %v3366, %v3394
    %v3399 = vlaneseq
    %v3400 = vshrl.u32 %v3399, 7
    %v3401 = vsub.s32 5, %v3400
    %v3402 = vrot.slane %v2382, %v3401
    %v3403 = vmul.f32 %v3395, %v3402
    %v3404 = vmul.f32 %v3396, %v3402
    %v3405 = vmul.f32 %v3397, %v3402
    %v3406 = vmul.f32 %v3398, %v3402
    %v3407 = vlaneseq
    %v3408 = vshrl.u32 %v3407, 7
    %v3409 = vsub.s32 6, %v3408
    %v3410 = vrot.slane %v2382, %v3409
    %v3411 = vadd.f32 %v3403, %v3410
    %v3412 = vadd.f32 %v3404, %v3410
    %v3413 = vadd.f32 %v3405, %v3410
    %v3414 = vadd.f32 %v3406, %v3410
    %s3415 = scalar_lea.vmem %s2, 192
    %v3416 = vld [vmem:[%s3415] sm:$0xff]
    %v3417 = vld [vmem:[%s3415 + $0x8] sm:$0xff]
    %v3418 = vld [vmem:[%s3415 + $0x10] sm:$0xff]
    %v3419 = vld [vmem:[%s3415 + $0x18] sm:$0xff]
    %v3420 = vld [vmem:[%s3415 + $0x20] sm:$0xff]
    %v3421 = vld [vmem:[%s3415 + $0x28] sm:$0xff]
    %v3422 = vld [vmem:[%s3415 + $0x30] sm:$0xff]
    %v3423 = vld [vmem:[%s3415 + $0x38] sm:$0xff]
    %s3424 = scalar_lea.vmem %s3, 480
    %v3425 = vld [vmem:[%s3424] sm:$0xff]
    %v3426 = vld [vmem:[%s3424 + $0x8] sm:$0xff]
    %v3427 = vld [vmem:[%s3424 + $0x10] sm:$0xff]
    %v3428 = vld [vmem:[%s3424 + $0x18] sm:$0xff]
    %v3429 = vld [vmem:[%s3424 + $0x20] sm:$0xff]
    %v3430 = vld [vmem:[%s3424 + $0x28] sm:$0xff]
    %v3431 = vld [vmem:[%s3424 + $0x30] sm:$0xff]
    %v3432 = vld [vmem:[%s3424 + $0x38] sm:$0xff]
    %v3433 = vld [vmem:[%s3424 + $0x40] sm:$0xff]
    %v3434 = vld [vmem:[%s3424 + $0x48] sm:$0xff]
    %v3435 = vld [vmem:[%s3424 + $0x50] sm:$0xff]
    %v3436 = vld [vmem:[%s3424 + $0x58] sm:$0xff]
    %v3437 = vld [vmem:[%s3424 + $0x60] sm:$0xff]
    %v3438 = vld [vmem:[%s3424 + $0x68] sm:$0xff]
    %v3439 = vld [vmem:[%s3424 + $0x70] sm:$0xff]
    %v3440 = vld [vmem:[%s3424 + $0x78] sm:$0xff]
    %v3441 = vld [vmem:[%s3424 + $0x80] sm:$0xff]
    %v3442 = vld [vmem:[%s3424 + $0x88] sm:$0xff]
    %v3443 = vld [vmem:[%s3424 + $0x90] sm:$0xff]
    %v3444 = vld [vmem:[%s3424 + $0x98] sm:$0xff]
    %s3445 = scalar_lea.vmem %s4, 24
    %v3446 = vld [vmem:[%s3445] sm:$0xff]
    %v3447 = vlaneseq
    %v3448 = vshrl.u32 %v3447, 7
    %v3449 = vsub.s32 0, %v3448
    %v3450 = vrot.slane %v3446, %v3449
    %v3452 = vsel %vm254, %v3411, 0
    %v3455 = vsel %vm254, %v3412, 0
    %v3458 = vsel %vm254, %v3413, 0
    %v3461 = vsel %vm254, %v3414, 0
    %3463 = vmatprep.subr.mxu0 0.0
    %3464 = vmatpush1.msra.mxu0 0.0
    %3465 = vmatprep.subr.mxu0 0.0
    %3466 = vmatpush1.msra.mxu0 0.0
    %3467 = vmatprep.subr.mxu0 0.0
    %3468 = vmatpush1.msra.mxu0 0.0
    %3469 = vmatprep.subr.mxu0 0.0
    %3470 = vmatpush1.msra.mxu0 0.0
    %3471 = vmatprep.subr.mxu0 0.0
    %3472 = vmatpush1.msra.mxu0 0.0
    %3473 = vmatprep.subr.mxu0 0.0
    %3474 = vmatpush1.msra.mxu0 0.0
    %3475 = vmatprep.subr.mxu0 0.0
    %3476 = vmatpush1.msra.mxu0 0.0
    %3477 = vmatprep.subr.mxu0 0.0
    %3478 = vmatpush1.msra.mxu0 0.0
    %3479 = vmatprep.subr.mxu0 0.0
    %3480 = vmatpush1.msra.mxu0 0.0
    %3481 = vmatprep.subr.mxu0 0.0
    %3482 = vmatpush1.msra.mxu0 0.0
    %3483 = vmatprep.subr.mxu0 0.0
    %3484 = vmatpush1.msra.mxu0 0.0
    %3485 = vmatprep.subr.mxu0 0.0
    %3486 = vmatpush1.msra.mxu0 0.0
    %3487 = vmatprep.subr.mxu0 0.0
    %3488 = vmatpush1.msra.mxu0 %v3419
    %3489 = vmatprep.subr.mxu0 0.0
    %3490 = vmatpush1.msra.mxu0 %v3418
    %3491 = vmatprep.subr.mxu0 0.0
    %3492 = vmatpush1.msra.mxu0 %v3417
    %3493 = vmatprep.subr.mxu0 0.0
    %3494 = vmatpush1.msra.mxu0 %v3416
    %3495 = vmatprep.subr.mxu0 0.0
    %3496 = vmatpush2.msra.mxu0 0.0
    %3497 = vmatprep.subr.mxu0 0.0
    %3498 = vmatpush2.msra.mxu0 0.0
    %3499 = vmatprep.subr.mxu0 0.0
    %3500 = vmatpush2.msra.mxu0 0.0
    %3501 = vmatprep.subr.mxu0 0.0
    %3502 = vmatpush2.msra.mxu0 0.0
    %3503 = vmatprep.subr.mxu0 0.0
    %3504 = vmatpush2.msra.mxu0 0.0
    %3505 = vmatprep.subr.mxu0 0.0
    %3506 = vmatpush2.msra.mxu0 0.0
    %3507 = vmatprep.subr.mxu0 0.0
    %3508 = vmatpush2.msra.mxu0 0.0
    %3509 = vmatprep.subr.mxu0 0.0
    %3510 = vmatpush2.msra.mxu0 0.0
    %3511 = vmatprep.subr.mxu0 0.0
    %3512 = vmatpush2.msra.mxu0 0.0
    %3513 = vmatprep.subr.mxu0 0.0
    %3514 = vmatpush2.msra.mxu0 0.0
    %3515 = vmatprep.subr.mxu0 0.0
    %3516 = vmatpush2.msra.mxu0 0.0
    %3517 = vmatprep.subr.mxu0 0.0
    %3518 = vmatpush2.msra.mxu0 0.0
    %3519 = vmatprep.subr.mxu0 0.0
    %3520 = vmatpush2.msra.mxu0 0.0
    %3521 = vmatprep.subr.mxu0 0.0
    %3522 = vmatpush2.msra.mxu0 0.0
    %3523 = vmatprep.subr.mxu0 0.0
    %3524 = vmatpush2.msra.mxu0 0.0
    %3525 = vmatprep.subr.mxu0 0.0
    %3526 = vmatpush2.msra.mxu0 0.0
    %3527 = vmatprep.mubr.f32.mxu0 0.0
    %3528 = vmatmul.mubr.f32.gmra.mxu0 %v3452
    %v3529 = vpop.f32.mrf.mxu0
    %v3530 = vadd.f32 %v3450, %v3529
    %v3531 = vpop.f32.mrf.mxu0
    %3532 = vmatprep.mubr.f32.mxu0 0.0
    %3533 = vmatmul.mubr.f32.gmra.mxu0 %v3455
    %v3534 = vpop.f32.mrf.mxu0
    %v3535 = vadd.f32 %v3450, %v3534
    %v3536 = vpop.f32.mrf.mxu0
    %3537 = vmatprep.mubr.f32.mxu0 0.0
    %3538 = vmatmul.mubr.f32.gmra.mxu0 %v3458
    %v3539 = vpop.f32.mrf.mxu0
    %v3540 = vadd.f32 %v3450, %v3539
    %v3541 = vpop.f32.mrf.mxu0
    %3542 = vmatprep.mubr.f32.mxu0 0.0
    %3543 = vmatmul.mubr.f32.gmra.mxu0 %v3461
    %v3544 = vpop.f32.mrf.mxu0
    %v3545 = vadd.f32 %v3450, %v3544
    %v3546 = vpop.f32.mrf.mxu0
    %3547 = vdwg.mxu0
    %3550 = vrot.lane.b32.xlu0 %v3530, 96
    %v3551 = vpop.permute.xlu0 %3550
    %3552 = vrot.lane.b32.xlu0 %v3535, 96
    %v3553 = vpop.permute.xlu0 %3552
    %v3556 = vsel %vm254, %v3551, %v3540
    %v3557 = vsel %vm254, %v3553, %v3545
    %3558 = vrot.lane.b32.xlu0 %v3530, 64
    %v3559 = vpop.permute.xlu0 %3558
    %3560 = vrot.lane.b32.xlu0 %v3535, 64
    %v3561 = vpop.permute.xlu0 %3560
    %3566 = vrot.lane.b32.xlu0 %v3540, 96
    %v3567 = vpop.permute.xlu0 %3566
    %3568 = vrot.lane.b32.xlu0 %v3545, 96
    %v3569 = vpop.permute.xlu0 %3568
    %v3572 = vsel %vm254, %v3559, %v3567
    %v3573 = vsel %vm254, %v3561, %v3569
    %3574 = vrot.lane.b32.xlu0 %v3530, 32
    %v3575 = vpop.permute.xlu0 %3574
    %3576 = vrot.lane.b32.xlu0 %v3535, 32
    %v3577 = vpop.permute.xlu0 %3576
    %3578 = vrot.lane.b32.xlu0 %v3540, 32
    %v3579 = vpop.permute.xlu0 %3578
    %3580 = vrot.lane.b32.xlu0 %v3545, 32
    %v3581 = vpop.permute.xlu0 %3580
    %v3586 = vsel %vm254, %v3530, %v3575
    %v3587 = vsel %vm254, %v3535, %v3577
    %v3588 = vsel %vm254, %v3540, %v3579
    %v3589 = vsel %vm254, %v3545, %v3581
    %v3590 = vmul.f32 %v3586, %v3556
    %v3591 = vmul.f32 %v3587, %v3557
    %v3592 = vmul.f32 %v3588, %v3556
    %v3593 = vmul.f32 %v3589, %v3557
    %v3595 = vsel %vm398, %v3590, 0
    %v3598 = vsel %vm398, %v3591, 0
    %v3601 = vsel %vm398, %v3592, 0
    %v3604 = vsel %vm398, %v3593, 0
    %3606 = vmatprep.subr.mxu0 0.0
    %3607 = vmatpush1.msra.mxu0 0.0
    %3608 = vmatprep.subr.mxu0 0.0
    %3609 = vmatpush1.msra.mxu0 0.0
    %3610 = vmatprep.subr.mxu0 0.0
    %3611 = vmatpush1.msra.mxu0 0.0
    %3612 = vmatprep.subr.mxu0 0.0
    %3613 = vmatpush1.msra.mxu0 0.0
    %3614 = vmatprep.subr.mxu0 0.0
    %3615 = vmatpush1.msra.mxu0 0.0
    %3616 = vmatprep.subr.mxu0 0.0
    %3617 = vmatpush1.msra.mxu0 0.0
    %3618 = vmatprep.subr.mxu0 0.0
    %3619 = vmatpush1.msra.mxu0 0.0
    %3620 = vmatprep.subr.mxu0 0.0
    %3621 = vmatpush1.msra.mxu0 0.0
    %3622 = vmatprep.subr.mxu0 0.0
    %3623 = vmatpush1.msra.mxu0 %v77
    %3624 = vmatprep.subr.mxu0 0.0
    %3625 = vmatpush1.msra.mxu0 %v76
    %3626 = vmatprep.subr.mxu0 0.0
    %3627 = vmatpush1.msra.mxu0 %v75
    %3628 = vmatprep.subr.mxu0 0.0
    %3629 = vmatpush1.msra.mxu0 %v74
    %3630 = vmatprep.subr.mxu0 0.0
    %3631 = vmatpush1.msra.mxu0 %v73
    %3632 = vmatprep.subr.mxu0 0.0
    %3633 = vmatpush1.msra.mxu0 %v72
    %3634 = vmatprep.subr.mxu0 0.0
    %3635 = vmatpush1.msra.mxu0 %v71
    %3636 = vmatprep.subr.mxu0 0.0
    %3637 = vmatpush1.msra.mxu0 %v70
    %3638 = vmatprep.subr.mxu0 0.0
    %3639 = vmatpush2.msra.mxu0 0.0
    %3640 = vmatprep.subr.mxu0 0.0
    %3641 = vmatpush2.msra.mxu0 0.0
    %3642 = vmatprep.subr.mxu0 0.0
    %3643 = vmatpush2.msra.mxu0 0.0
    %3644 = vmatprep.subr.mxu0 0.0
    %3645 = vmatpush2.msra.mxu0 0.0
    %3646 = vmatprep.subr.mxu0 0.0
    %3647 = vmatpush2.msra.mxu0 0.0
    %3648 = vmatprep.subr.mxu0 0.0
    %3649 = vmatpush2.msra.mxu0 0.0
    %3650 = vmatprep.subr.mxu0 0.0
    %3651 = vmatpush2.msra.mxu0 0.0
    %3652 = vmatprep.subr.mxu0 0.0
    %3653 = vmatpush2.msra.mxu0 0.0
    %3654 = vmatprep.subr.mxu0 0.0
    %3655 = vmatpush2.msra.mxu0 0.0
    %3656 = vmatprep.subr.mxu0 0.0
    %3657 = vmatpush2.msra.mxu0 0.0
    %3658 = vmatprep.subr.mxu0 0.0
    %3659 = vmatpush2.msra.mxu0 0.0
    %3660 = vmatprep.subr.mxu0 0.0
    %3661 = vmatpush2.msra.mxu0 0.0
    %3662 = vmatprep.subr.mxu0 0.0
    %3663 = vmatpush2.msra.mxu0 0.0
    %3664 = vmatprep.subr.mxu0 0.0
    %3665 = vmatpush2.msra.mxu0 0.0
    %3666 = vmatprep.subr.mxu0 0.0
    %3667 = vmatpush2.msra.mxu0 0.0
    %3668 = vmatprep.subr.mxu0 0.0
    %3669 = vmatpush2.msra.mxu0 0.0
    %3670 = vmatprep.mubr.f32.mxu0 0.0
    %3671 = vmatmul.mubr.f32.gmra.mxu0 %v3595
    %v3672 = vpop.f32.mrf.mxu0
    %v3673 = vadd.f32 0.0, %v3672
    %v3674 = vpop.f32.mrf.mxu0
    %3675 = vmatprep.mubr.f32.mxu0 0.0
    %3676 = vmatmul.mubr.f32.gmra.mxu0 %v3598
    %v3677 = vpop.f32.mrf.mxu0
    %v3678 = vadd.f32 0.0, %v3677
    %v3679 = vpop.f32.mrf.mxu0
    %3680 = vmatprep.mubr.f32.mxu0 0.0
    %3681 = vmatmul.mubr.f32.gmra.mxu0 %v3601
    %v3682 = vpop.f32.mrf.mxu0
    %v3683 = vadd.f32 0.0, %v3682
    %v3684 = vpop.f32.mrf.mxu0
    %3685 = vmatprep.mubr.f32.mxu0 0.0
    %3686 = vmatmul.mubr.f32.gmra.mxu0 %v3604
    %v3687 = vpop.f32.mrf.mxu0
    %v3688 = vadd.f32 0.0, %v3687
    %v3689 = vpop.f32.mrf.mxu0
    %3690 = vdwg.mxu0
    %3695 = vrot.lane.b32.xlu0 %v3673, 120
    %v3696 = vpop.permute.xlu0 %3695
    %3697 = vrot.lane.b32.xlu0 %v3678, 120
    %v3698 = vpop.permute.xlu0 %3697
    %3699 = vrot.lane.b32.xlu0 %v3683, 120
    %v3700 = vpop.permute.xlu0 %3699
    %3701 = vrot.lane.b32.xlu0 %v3688, 120
    %v3702 = vpop.permute.xlu0 %3701
    %v3707 = vmax.f32 %v3673, %v3696
    %v3708 = vmax.f32 %v3678, %v3698
    %v3709 = vmax.f32 %v3683, %v3700
    %v3710 = vmax.f32 %v3688, %v3702
    %v3711 = vsub.f32 %v3673, %v3707
    %v3712 = vsub.f32 %v3678, %v3708
    %v3713 = vsub.f32 %v3683, %v3709
    %v3714 = vsub.f32 %v3688, %v3710
    %v3715 = vmul.f32 %v3711, 1.442695
    %v3716 = vpow.pop %v3715
    %v3717 = vmul.f32 %v3712, 1.442695
    %v3718 = vpow.pop %v3717
    %v3719 = vmul.f32 %v3713, 1.442695
    %v3720 = vpow.pop %v3719
    %v3721 = vmul.f32 %v3714, 1.442695
    %v3722 = vpow.pop %v3721
    %3727 = vrot.lane.b32.xlu0 %v3707, 8
    %v3728 = vpop.permute.xlu0 %3727
    %3729 = vrot.lane.b32.xlu0 %v3708, 8
    %v3730 = vpop.permute.xlu0 %3729
    %3731 = vrot.lane.b32.xlu0 %v3709, 8
    %v3732 = vpop.permute.xlu0 %3731
    %3733 = vrot.lane.b32.xlu0 %v3710, 8
    %v3734 = vpop.permute.xlu0 %3733
    %v3739 = vsub.f32 %v3673, %v3728
    %v3740 = vsub.f32 %v3678, %v3730
    %v3741 = vsub.f32 %v3683, %v3732
    %v3742 = vsub.f32 %v3688, %v3734
    %v3743 = vmul.f32 %v3739, 1.442695
    %v3744 = vpow.pop %v3743
    %v3745 = vmul.f32 %v3740, 1.442695
    %v3746 = vpow.pop %v3745
    %v3747 = vmul.f32 %v3741, 1.442695
    %v3748 = vpow.pop %v3747
    %v3749 = vmul.f32 %v3742, 1.442695
    %v3750 = vpow.pop %v3749
    %3755 = vrot.lane.b32.xlu0 %v3744, 120
    %v3756 = vpop.permute.xlu0 %3755
    %3757 = vrot.lane.b32.xlu0 %v3746, 120
    %v3758 = vpop.permute.xlu0 %3757
    %3759 = vrot.lane.b32.xlu0 %v3748, 120
    %v3760 = vpop.permute.xlu0 %3759
    %3761 = vrot.lane.b32.xlu0 %v3750, 120
    %v3762 = vpop.permute.xlu0 %3761
    %v3767 = vadd.f32 %v3716, %v3756
    %v3768 = vadd.f32 %v3718, %v3758
    %v3769 = vadd.f32 %v3720, %v3760
    %v3770 = vadd.f32 %v3722, %v3762
    %v3771 = vrcp.pop %v3767
    %v3772 = vrcp.pop %v3768
    %v3773 = vrcp.pop %v3769
    %v3774 = vrcp.pop %v3770
    %v3775 = vmul.f32 %v3716, %v3771
    %v3776 = vmul.f32 %v3718, %v3772
    %v3777 = vmul.f32 %v3720, %v3773
    %v3778 = vmul.f32 %v3722, %v3774
    %3783 = vrot.lane.b32.xlu0 %v3771, 8
    %v3784 = vpop.permute.xlu0 %3783
    %3785 = vrot.lane.b32.xlu0 %v3772, 8
    %v3786 = vpop.permute.xlu0 %3785
    %3787 = vrot.lane.b32.xlu0 %v3773, 8
    %v3788 = vpop.permute.xlu0 %3787
    %3789 = vrot.lane.b32.xlu0 %v3774, 8
    %v3790 = vpop.permute.xlu0 %3789
    %v3795 = vmul.f32 %v3744, %v3784
    %v3796 = vmul.f32 %v3746, %v3786
    %v3797 = vmul.f32 %v3748, %v3788
    %v3798 = vmul.f32 %v3750, %v3790
    %v3799 = vsel %vm604, %v3775, %v3795
    %v3800 = vsel %vm604, %v3776, %v3796
    %v3801 = vsel %vm604, %v3777, %v3797
    %v3802 = vsel %vm604, %v3778, %v3798
    %v3804 = vsel %vm609, %v3799, 0
    %v3807 = vsel %vm609, %v3800, 0
    %v3810 = vsel %vm609, %v3801, 0
    %v3813 = vsel %vm609, %v3802, 0
    %3815 = vmatprep.subr.mxu0 0.0
    %3816 = vmatpush1.msra.mxu0 0.0
    %3817 = vmatprep.subr.mxu0 0.0
    %3818 = vmatpush1.msra.mxu0 0.0
    %3819 = vmatprep.subr.mxu0 0.0
    %3820 = vmatpush1.msra.mxu0 0.0
    %3821 = vmatprep.subr.mxu0 0.0
    %3822 = vmatpush1.msra.mxu0 0.0
    %3823 = vmatprep.subr.mxu0 0.0
    %3824 = vmatpush1.msra.mxu0 0.0
    %3825 = vmatprep.subr.mxu0 0.0
    %3826 = vmatpush1.msra.mxu0 0.0
    %3827 = vmatprep.subr.mxu0 0.0
    %3828 = vmatpush1.msra.mxu0 0.0
    %3829 = vmatprep.subr.mxu0 0.0
    %3830 = vmatpush1.msra.mxu0 0.0
    %3831 = vmatprep.subr.mxu0 0.0
    %3832 = vmatpush1.msra.mxu0 0.0
    %3833 = vmatprep.subr.mxu0 0.0
    %3834 = vmatpush1.msra.mxu0 0.0
    %3835 = vmatprep.subr.mxu0 0.0
    %3836 = vmatpush1.msra.mxu0 0.0
    %3837 = vmatprep.subr.mxu0 0.0
    %3838 = vmatpush1.msra.mxu0 0.0
    %3839 = vmatprep.subr.mxu0 0.0
    %3840 = vmatpush1.msra.mxu0 0.0
    %3841 = vmatprep.subr.mxu0 0.0
    %3842 = vmatpush1.msra.mxu0 0.0
    %3843 = vmatprep.subr.mxu0 0.0
    %3844 = vmatpush1.msra.mxu0 %v89
    %3845 = vmatprep.subr.mxu0 0.0
    %3846 = vmatpush1.msra.mxu0 %v88
    %3847 = vmatprep.subr.mxu0 0.0
    %3848 = vmatpush2.msra.mxu0 0.0
    %3849 = vmatprep.subr.mxu0 0.0
    %3850 = vmatpush2.msra.mxu0 0.0
    %3851 = vmatprep.subr.mxu0 0.0
    %3852 = vmatpush2.msra.mxu0 0.0
    %3853 = vmatprep.subr.mxu0 0.0
    %3854 = vmatpush2.msra.mxu0 0.0
    %3855 = vmatprep.subr.mxu0 0.0
    %3856 = vmatpush2.msra.mxu0 0.0
    %3857 = vmatprep.subr.mxu0 0.0
    %3858 = vmatpush2.msra.mxu0 0.0
    %3859 = vmatprep.subr.mxu0 0.0
    %3860 = vmatpush2.msra.mxu0 0.0
    %3861 = vmatprep.subr.mxu0 0.0
    %3862 = vmatpush2.msra.mxu0 0.0
    %3863 = vmatprep.subr.mxu0 0.0
    %3864 = vmatpush2.msra.mxu0 0.0
    %3865 = vmatprep.subr.mxu0 0.0
    %3866 = vmatpush2.msra.mxu0 0.0
    %3867 = vmatprep.subr.mxu0 0.0
    %3868 = vmatpush2.msra.mxu0 0.0
    %3869 = vmatprep.subr.mxu0 0.0
    %3870 = vmatpush2.msra.mxu0 0.0
    %3871 = vmatprep.subr.mxu0 0.0
    %3872 = vmatpush2.msra.mxu0 0.0
    %3873 = vmatprep.subr.mxu0 0.0
    %3874 = vmatpush2.msra.mxu0 0.0
    %3875 = vmatprep.subr.mxu0 0.0
    %3876 = vmatpush2.msra.mxu0 0.0
    %3877 = vmatprep.subr.mxu0 0.0
    %3878 = vmatpush2.msra.mxu0 0.0
    %3879 = vmatprep.mubr.f32.mxu0 0.0
    %3880 = vmatmul.mubr.f32.gmra.mxu0 %v3804
    %v3881 = vpop.f32.mrf.mxu0
    %v3882 = vadd.f32 0.0, %v3881
    %v3883 = vpop.f32.mrf.mxu0
    %3884 = vmatprep.mubr.f32.mxu0 0.0
    %3885 = vmatmul.mubr.f32.gmra.mxu0 %v3807
    %v3886 = vpop.f32.mrf.mxu0
    %v3887 = vadd.f32 0.0, %v3886
    %v3888 = vpop.f32.mrf.mxu0
    %3889 = vmatprep.mubr.f32.mxu0 0.0
    %3890 = vmatmul.mubr.f32.gmra.mxu0 %v3810
    %v3891 = vpop.f32.mrf.mxu0
    %v3892 = vadd.f32 0.0, %v3891
    %v3893 = vpop.f32.mrf.mxu0
    %3894 = vmatprep.mubr.f32.mxu0 0.0
    %3895 = vmatmul.mubr.f32.gmra.mxu0 %v3813
    %v3896 = vpop.f32.mrf.mxu0
    %v3897 = vadd.f32 0.0, %v3896
    %v3898 = vpop.f32.mrf.mxu0
    %3899 = vdwg.mxu0
    %v3900 = vmul.f32 %v3882, %v3572
    %v3901 = vmul.f32 %v3887, %v3573
    %v3902 = vmul.f32 %v3892, %v3572
    %v3903 = vmul.f32 %v3897, %v3573
    %3908 = vrot.lane.b32.xlu0 %v3900, 96
    %v3909 = vpop.permute.xlu0 %3908
    %3910 = vrot.lane.b32.xlu0 %v3901, 96
    %v3911 = vpop.permute.xlu0 %3910
    %3912 = vrot.lane.b32.xlu0 %v3902, 96
    %v3913 = vpop.permute.xlu0 %3912
    %3914 = vrot.lane.b32.xlu0 %v3903, 96
    %v3915 = vpop.permute.xlu0 %3914
    %v3920 = vadd.f32 %v3900, %v3909
    %v3921 = vadd.f32 %v3901, %v3911
    %v3922 = vadd.f32 %v3902, %v3913
    %v3923 = vadd.f32 %v3903, %v3915
    %v3924 = vlaneseq
    %v3925 = vshrl.u32 %v3924, 7
    %v3926 = vsub.s32 2, %v3925
    %v3927 = vrot.slane %v3446, %v3926
    %v3929 = vsel %vm254, %v3920, 0
    %v3932 = vsel %vm254, %v3921, 0
    %v3935 = vsel %vm254, %v3922, 0
    %v3938 = vsel %vm254, %v3923, 0
    %3940 = vmatprep.subr.mxu0 0.0
    %3941 = vmatpush1.msra.mxu0 0.0
    %3942 = vmatprep.subr.mxu0 0.0
    %3943 = vmatpush1.msra.mxu0 0.0
    %3944 = vmatprep.subr.mxu0 0.0
    %3945 = vmatpush1.msra.mxu0 0.0
    %3946 = vmatprep.subr.mxu0 0.0
    %3947 = vmatpush1.msra.mxu0 0.0
    %3948 = vmatprep.subr.mxu0 0.0
    %3949 = vmatpush1.msra.mxu0 0.0
    %3950 = vmatprep.subr.mxu0 0.0
    %3951 = vmatpush1.msra.mxu0 0.0
    %3952 = vmatprep.subr.mxu0 0.0
    %3953 = vmatpush1.msra.mxu0 0.0
    %3954 = vmatprep.subr.mxu0 0.0
    %3955 = vmatpush1.msra.mxu0 0.0
    %3956 = vmatprep.subr.mxu0 0.0
    %3957 = vmatpush1.msra.mxu0 0.0
    %3958 = vmatprep.subr.mxu0 0.0
    %3959 = vmatpush1.msra.mxu0 0.0
    %3960 = vmatprep.subr.mxu0 0.0
    %3961 = vmatpush1.msra.mxu0 0.0
    %3962 = vmatprep.subr.mxu0 0.0
    %3963 = vmatpush1.msra.mxu0 0.0
    %3964 = vmatprep.subr.mxu0 0.0
    %3965 = vmatpush1.msra.mxu0 %v3444
    %3966 = vmatprep.subr.mxu0 0.0
    %3967 = vmatpush1.msra.mxu0 %v3443
    %3968 = vmatprep.subr.mxu0 0.0
    %3969 = vmatpush1.msra.mxu0 %v3442
    %3970 = vmatprep.subr.mxu0 0.0
    %3971 = vmatpush1.msra.mxu0 %v3441
    %3972 = vmatprep.subr.mxu0 0.0
    %3973 = vmatpush2.msra.mxu0 0.0
    %3974 = vmatprep.subr.mxu0 0.0
    %3975 = vmatpush2.msra.mxu0 0.0
    %3976 = vmatprep.subr.mxu0 0.0
    %3977 = vmatpush2.msra.mxu0 0.0
    %3978 = vmatprep.subr.mxu0 0.0
    %3979 = vmatpush2.msra.mxu0 0.0
    %3980 = vmatprep.subr.mxu0 0.0
    %3981 = vmatpush2.msra.mxu0 0.0
    %3982 = vmatprep.subr.mxu0 0.0
    %3983 = vmatpush2.msra.mxu0 0.0
    %3984 = vmatprep.subr.mxu0 0.0
    %3985 = vmatpush2.msra.mxu0 0.0
    %3986 = vmatprep.subr.mxu0 0.0
    %3987 = vmatpush2.msra.mxu0 0.0
    %3988 = vmatprep.subr.mxu0 0.0
    %3989 = vmatpush2.msra.mxu0 0.0
    %3990 = vmatprep.subr.mxu0 0.0
    %3991 = vmatpush2.msra.mxu0 0.0
    %3992 = vmatprep.subr.mxu0 0.0
    %3993 = vmatpush2.msra.mxu0 0.0
    %3994 = vmatprep.subr.mxu0 0.0
    %3995 = vmatpush2.msra.mxu0 0.0
    %3996 = vmatprep.subr.mxu0 0.0
    %3997 = vmatpush2.msra.mxu0 0.0
    %3998 = vmatprep.subr.mxu0 0.0
    %3999 = vmatpush2.msra.mxu0 0.0
    %4000 = vmatprep.subr.mxu0 0.0
    %4001 = vmatpush2.msra.mxu0 0.0
    %4002 = vmatprep.subr.mxu0 0.0
    %4003 = vmatpush2.msra.mxu0 0.0
    %4004 = vmatprep.mubr.f32.mxu0 0.0
    %4005 = vmatmul.mubr.f32.gmra.mxu0 %v3929
    %v4006 = vpop.f32.mrf.mxu0
    %v4007 = vadd.f32 %v3927, %v4006
    %v4008 = vpop.f32.mrf.mxu0
    %4009 = vmatprep.mubr.f32.mxu0 0.0
    %4010 = vmatmul.mubr.f32.gmra.mxu0 %v3932
    %v4011 = vpop.f32.mrf.mxu0
    %v4012 = vadd.f32 %v3927, %v4011
    %v4013 = vpop.f32.mrf.mxu0
    %4014 = vmatprep.mubr.f32.mxu0 0.0
    %4015 = vmatmul.mubr.f32.gmra.mxu0 %v3935
    %v4016 = vpop.f32.mrf.mxu0
    %v4017 = vadd.f32 %v3927, %v4016
    %v4018 = vpop.f32.mrf.mxu0
    %4019 = vmatprep.mubr.f32.mxu0 0.0
    %4020 = vmatmul.mubr.f32.gmra.mxu0 %v3938
    %v4021 = vpop.f32.mrf.mxu0
    %v4022 = vadd.f32 %v3927, %v4021
    %v4023 = vpop.f32.mrf.mxu0
    %4024 = vdwg.mxu0
    %v4025 = vadd.f32 %v3411, %v4007
    %v4026 = vadd.f32 %v3412, %v4012
    %v4027 = vadd.f32 %v3413, %v4017
    %v4028 = vadd.f32 %v3414, %v4022
    %v4029 = vsel %vm254, %v4025, 0.0
    %4030 = vadd.xlane.f32.xlu0 %v4029
    %v4031 = vpop.xlane.xlu0 %4030
    %v4032 = vsel %vm254, %v4026, 0.0
    %4033 = vadd.xlane.f32.xlu0 %v4032
    %v4034 = vpop.xlane.xlu0 %4033
    %v4035 = vsel %vm254, %v4027, 0.0
    %4036 = vadd.xlane.f32.xlu0 %v4035
    %v4037 = vpop.xlane.xlu0 %4036
    %v4038 = vsel %vm254, %v4028, 0.0
    %4039 = vadd.xlane.f32.xlu0 %v4038
    %v4040 = vpop.xlane.xlu0 %4039
    %v4041 = vmul.f32 %v4031, %v848
    %v4042 = vmul.f32 %v4034, %v848
    %v4043 = vmul.f32 %v4037, %v848
    %v4044 = vmul.f32 %v4040, %v848
    %v4045 = vsub.f32 %v4025, %v4041
    %v4046 = vsub.f32 %v4026, %v4042
    %v4047 = vsub.f32 %v4027, %v4043
    %v4048 = vsub.f32 %v4028, %v4044
    %v4049 = vmul.f32 %v4045, %v4045
    %v4050 = vmul.f32 %v4046, %v4046
    %v4051 = vmul.f32 %v4047, %v4047
    %v4052 = vmul.f32 %v4048, %v4048
    %v4053 = vsel %vm254, %v4049, 0.0
    %4054 = vadd.xlane.f32.xlu0 %v4053
    %v4055 = vpop.xlane.xlu0 %4054
    %v4056 = vsel %vm254, %v4050, 0.0
    %4057 = vadd.xlane.f32.xlu0 %v4056
    %v4058 = vpop.xlane.xlu0 %4057
    %v4059 = vsel %vm254, %v4051, 0.0
    %4060 = vadd.xlane.f32.xlu0 %v4059
    %v4061 = vpop.xlane.xlu0 %4060
    %v4062 = vsel %vm254, %v4052, 0.0
    %4063 = vadd.xlane.f32.xlu0 %v4062
    %v4064 = vpop.xlane.xlu0 %4063
    %v4065 = vmul.f32 %v4055, %v848
    %v4066 = vmul.f32 %v4058, %v848
    %v4067 = vmul.f32 %v4061, %v848
    %v4068 = vmul.f32 %v4064, %v848
    %v4069 = vadd.f32 %v4065, 1e-05
    %v4070 = vadd.f32 %v4066, 1e-05
    %v4071 = vadd.f32 %v4067, 1e-05
    %v4072 = vadd.f32 %v4068, 1e-05
    %v4073 = vrsqrt.pop %v4069
    %v4074 = vrsqrt.pop %v4070
    %v4075 = vrsqrt.pop %v4071
    %v4076 = vrsqrt.pop %v4072
    %v4077 = vmul.f32 %v4045, %v4073
    %v4078 = vmul.f32 %v4046, %v4074
    %v4079 = vmul.f32 %v4047, %v4075
    %v4080 = vmul.f32 %v4048, %v4076
    %v4081 = vlaneseq
    %v4082 = vshrl.u32 %v4081, 7
    %v4083 = vsub.s32 3, %v4082
    %v4084 = vrot.slane %v3446, %v4083
    %v4085 = vmul.f32 %v4077, %v4084
    %v4086 = vmul.f32 %v4078, %v4084
    %v4087 = vmul.f32 %v4079, %v4084
    %v4088 = vmul.f32 %v4080, %v4084
    %v4089 = vlaneseq
    %v4090 = vshrl.u32 %v4089, 7
    %v4091 = vsub.s32 4, %v4090
    %v4092 = vrot.slane %v3446, %v4091
    %v4093 = vadd.f32 %v4085, %v4092
    %v4094 = vadd.f32 %v4086, %v4092
    %v4095 = vadd.f32 %v4087, %v4092
    %v4096 = vadd.f32 %v4088, %v4092
    %v4097 = vlaneseq
    %v4098 = vshrl.u32 %v4097, 7
    %v4099 = vsub.s32 1, %v4098
    %v4100 = vrot.slane %v3446, %v4099
    %v4102 = vsel %vm254, %v4093, 0
    %v4105 = vsel %vm254, %v4094, 0
    %v4108 = vsel %vm254, %v4095, 0
    %v4111 = vsel %vm254, %v4096, 0
    %4113 = vmatprep.subr.mxu0 0.0
    %4114 = vmatpush1.msra.mxu0 0.0
    %4115 = vmatprep.subr.mxu0 0.0
    %4116 = vmatpush1.msra.mxu0 0.0
    %4117 = vmatprep.subr.mxu0 0.0
    %4118 = vmatpush1.msra.mxu0 0.0
    %4119 = vmatprep.subr.mxu0 0.0
    %4120 = vmatpush1.msra.mxu0 0.0
    %4121 = vmatprep.subr.mxu0 0.0
    %4122 = vmatpush1.msra.mxu0 0.0
    %4123 = vmatprep.subr.mxu0 0.0
    %4124 = vmatpush1.msra.mxu0 0.0
    %4125 = vmatprep.subr.mxu0 0.0
    %4126 = vmatpush1.msra.mxu0 0.0
    %4127 = vmatprep.subr.mxu0 0.0
    %4128 = vmatpush1.msra.mxu0 0.0
    %4129 = vmatprep.subr.mxu0 0.0
    %4130 = vmatpush1.msra.mxu0 0.0
    %4131 = vmatprep.subr.mxu0 0.0
    %4132 = vmatpush1.msra.mxu0 0.0
    %4133 = vmatprep.subr.mxu0 0.0
    %4134 = vmatpush1.msra.mxu0 0.0
    %4135 = vmatprep.subr.mxu0 0.0
    %4136 = vmatpush1.msra.mxu0 0.0
    %4137 = vmatprep.subr.mxu0 0.0
    %4138 = vmatpush1.msra.mxu0 %v3423
    %4139 = vmatprep.subr.mxu0 0.0
    %4140 = vmatpush1.msra.mxu0 %v3422
    %4141 = vmatprep.subr.mxu0 0.0
    %4142 = vmatpush1.msra.mxu0 %v3421
    %4143 = vmatprep.subr.mxu0 0.0
    %4144 = vmatpush1.msra.mxu0 %v3420
    %4145 = vmatprep.subr.mxu0 0.0
    %4146 = vmatpush2.msra.mxu0 0.0
    %4147 = vmatprep.subr.mxu0 0.0
    %4148 = vmatpush2.msra.mxu0 0.0
    %4149 = vmatprep.subr.mxu0 0.0
    %4150 = vmatpush2.msra.mxu0 0.0
    %4151 = vmatprep.subr.mxu0 0.0
    %4152 = vmatpush2.msra.mxu0 0.0
    %4153 = vmatprep.subr.mxu0 0.0
    %4154 = vmatpush2.msra.mxu0 0.0
    %4155 = vmatprep.subr.mxu0 0.0
    %4156 = vmatpush2.msra.mxu0 0.0
    %4157 = vmatprep.subr.mxu0 0.0
    %4158 = vmatpush2.msra.mxu0 0.0
    %4159 = vmatprep.subr.mxu0 0.0
    %4160 = vmatpush2.msra.mxu0 0.0
    %4161 = vmatprep.subr.mxu0 0.0
    %4162 = vmatpush2.msra.mxu0 0.0
    %4163 = vmatprep.subr.mxu0 0.0
    %4164 = vmatpush2.msra.mxu0 0.0
    %4165 = vmatprep.subr.mxu0 0.0
    %4166 = vmatpush2.msra.mxu0 0.0
    %4167 = vmatprep.subr.mxu0 0.0
    %4168 = vmatpush2.msra.mxu0 0.0
    %4169 = vmatprep.subr.mxu0 0.0
    %4170 = vmatpush2.msra.mxu0 0.0
    %4171 = vmatprep.subr.mxu0 0.0
    %4172 = vmatpush2.msra.mxu0 0.0
    %4173 = vmatprep.subr.mxu0 0.0
    %4174 = vmatpush2.msra.mxu0 0.0
    %4175 = vmatprep.subr.mxu0 0.0
    %4176 = vmatpush2.msra.mxu0 0.0
    %4177 = vmatprep.mubr.f32.mxu0 0.0
    %4178 = vmatmul.mubr.f32.gmra.mxu0 %v4102
    %v4179 = vpop.f32.mrf.mxu0
    %v4180 = vadd.f32 %v4100, %v4179
    %v4181 = vpop.f32.mrf.mxu0
    %4182 = vmatprep.mubr.f32.mxu0 0.0
    %4183 = vmatmul.mubr.f32.gmra.mxu0 %v4105
    %v4184 = vpop.f32.mrf.mxu0
    %v4185 = vadd.f32 %v4100, %v4184
    %v4186 = vpop.f32.mrf.mxu0
    %4187 = vmatprep.mubr.f32.mxu0 0.0
    %4188 = vmatmul.mubr.f32.gmra.mxu0 %v4108
    %v4189 = vpop.f32.mrf.mxu0
    %v4190 = vadd.f32 %v4100, %v4189
    %v4191 = vpop.f32.mrf.mxu0
    %4192 = vmatprep.mubr.f32.mxu0 0.0
    %4193 = vmatmul.mubr.f32.gmra.mxu0 %v4111
    %v4194 = vpop.f32.mrf.mxu0
    %v4195 = vadd.f32 %v4100, %v4194
    %v4196 = vpop.f32.mrf.mxu0
    %4197 = vdwg.mxu0
    %v4198 = vmul.f32 %v4180, 0.5
    %v4199 = vmul.f32 %v4185, 0.5
    %v4200 = vmul.f32 %v4190, 0.5
    %v4201 = vmul.f32 %v4195, 0.5
    %v4202 = vmul.f32 %v4180, 0.70710677
    %v4203 = vmul.f32 %v4185, 0.70710677
    %v4204 = vmul.f32 %v4190, 0.70710677
    %v4205 = vmul.f32 %v4195, 0.70710677
    %v4206 = vmax.f32 %v4202, -4.0
    %v4207 = vmax.f32 %v4203, -4.0
    %v4208 = vmax.f32 %v4204, -4.0
    %v4209 = vmax.f32 %v4205, -4.0
    %v4210 = vmin.f32 %v4206, 4.0
    %v4211 = vmin.f32 %v4207, 4.0
    %v4212 = vmin.f32 %v4208, 4.0
    %v4213 = vmin.f32 %v4209, 4.0
    %v4214 = vmul.f32 %v4210, %v4210
    %v4215 = vmul.f32 %v4211, %v4211
    %v4216 = vmul.f32 %v4212, %v4212
    %v4217 = vmul.f32 %v4213, %v4213
    %v4218 = vmul.f32 %v4214, -2.7261424e-10
    %v4219 = vmul.f32 %v4215, -2.7261424e-10
    %v4220 = vmul.f32 %v4216, -2.7261424e-10
    %v4221 = vmul.f32 %v4217, -2.7261424e-10
    %v4222 = vadd.f32 %v4218, 2.7706815e-08
    %v4223 = vadd.f32 %v4219, 2.7706815e-08
    %v4224 = vadd.f32 %v4220, 2.7706815e-08
    %v4225 = vadd.f32 %v4221, 2.7706815e-08
    %v4226 = vmul.f32 %v4214, %v4222
    %v4227 = vmul.f32 %v4215, %v4223
    %v4228 = vmul.f32 %v4216, %v4224
    %v4229 = vmul.f32 %v4217, %v4225
    %v4230 = vadd.f32 %v4226, -2.101024e-06
    %v4231 = vadd.f32 %v4227, -2.101024e-06
    %v4232 = vadd.f32 %v4228, -2.101024e-06
    %v4233 = vadd.f32 %v4229, -2.101024e-06
    %v4234 = vmul.f32 %v4214, %v4230
    %v4235 = vmul.f32 %v4215, %v4231
    %v4236 = vmul.f32 %v4216, %v4232
    %v4237 = vmul.f32 %v4217, %v4233
    %v4238 = vadd.f32 %v4234, -5.6925062e-05
    %v4239 = vadd.f32 %v4235, -5.6925062e-05
    %v4240 = vadd.f32 %v4236, -5.6925062e-05
    %v4241 = vadd.f32 %v4237, -5.6925062e-05
    %v4242 = vmul.f32 %v4214, %v4238
    %v4243 = vmul.f32 %v4215, %v4239
    %v4244 = vmul.f32 %v4216, %v4240
    %v4245 = vmul.f32 %v4217, %v4241
    %v4246 = vadd.f32 %v4242, -0.00073499064
    %v4247 = vadd.f32 %v4243, -0.00073499064
    %v4248 = vadd.f32 %v4244, -0.00073499064
    %v4249 = vadd.f32 %v4245, -0.00073499064
    %v4250 = vmul.f32 %v4214, %v4246
    %v4251 = vmul.f32 %v4215, %v4247
    %v4252 = vmul.f32 %v4216, %v4248
    %v4253 = vmul.f32 %v4217, %v4249
    %v4254 = vadd.f32 %v4250, -0.0029546
    %v4255 = vadd.f32 %v4251, -0.0029546
    %v4256 = vadd.f32 %v4252, -0.0029546
    %v4257 = vadd.f32 %v4253, -0.0029546
    %v4258 = vmul.f32 %v4214, %v4254
    %v4259 = vmul.f32 %v4215, %v4255
    %v4260 = vmul.f32 %v4216, %v4256
    %v4261 = vmul.f32 %v4217, %v4257
    %v4262 = vadd.f32 %v4258, -0.016096033
    %v4263 = vadd.f32 %v4259, -0.016096033
    %v4264 = vadd.f32 %v4260, -0.016096033
    %v4265 = vadd.f32 %v4261, -0.016096033
    %v4266 = vmul.f32 %v4210, %v4262
    %v4267 = vmul.f32 %v4211, %v4263
    %v4268 = vmul.f32 %v4212, %v4264
    %v4269 = vmul.f32 %v4213, %v4265
    %v4270 = vmul.f32 %v4214, -1.45660715e-05
    %v4271 = vmul.f32 %v4215, -1.45660715e-05
    %v4272 = vmul.f32 %v4216, -1.45660715e-05
    %v4273 = vmul.f32 %v4217, -1.45660715e-05
    %v4274 = vadd.f32 %v4270, -0.00021337405
    %v4275 = vadd.f32 %v4271, -0.00021337405
    %v4276 = vadd.f32 %v4272, -0.00021337405
    %v4277 = vadd.f32 %v4273, -0.00021337405
    %v4278 = vmul.f32 %v4214, %v4274
    %v4279 = vmul.f32 %v4215, %v4275
    %v4280 = vmul.f32 %v4216, %v4276
    %v4281 = vmul.f32 %v4217, %v4277
    %v4282 = vadd.f32 %v4278, -0.001682827
    %v4283 = vadd.f32 %v4279, -0.001682827
    %v4284 = vadd.f32 %v4280, -0.001682827
    %v4285 = vadd.f32 %v4281, -0.001682827
    %v4286 = vmul.f32 %v4214, %v4282
    %v4287 = vmul.f32 %v4215, %v4283
    %v4288 = vmul.f32 %v4216, %v4284
    %v4289 = vmul.f32 %v4217, %v4285
    %v4290 = vadd.f32 %v4286, -0.0073733293
    %v4291 = vadd.f32 %v4287, -0.0073733293
    %v4292 = vadd.f32 %v4288, -0.0073733293
    %v4293 = vadd.f32 %v4289, -0.0073733293
    %v4294 = vmul.f32 %v4214, %v4290
    %v4295 = vmul.f32 %v4215, %v4291
    %v4296 = vmul.f32 %v4216, %v4292
    %v4297 = vmul.f32 %v4217, %v4293
    %v4298 = vadd.f32 %v4294, -0.014264739
    %v4299 = vadd.f32 %v4295, -0.014264739
    %v4300 = vadd.f32 %v4296, -0.014264739
    %v4301 = vadd.f32 %v4297, -0.014264739
    %v4302 = vrcp.pop %v4298
    %v4303 = vmul.f32 %v4266, %v4302
    %v4304 = vrcp.pop %v4299
    %v4305 = vmul.f32 %v4267, %v4304
    %v4306 = vrcp.pop %v4300
    %v4307 = vmul.f32 %v4268, %v4306
    %v4308 = vrcp.pop %v4301
    %v4309 = vmul.f32 %v4269, %v4308
    %v4310 = vadd.f32 %v4303, 1.0
    %v4311 = vadd.f32 %v4305, 1.0
    %v4312 = vadd.f32 %v4307, 1.0
    %v4313 = vadd.f32 %v4309, 1.0
    %v4314 = vmul.f32 %v4198, %v4310
    %v4315 = vmul.f32 %v4199, %v4311
    %v4316 = vmul.f32 %v4200, %v4312
    %v4317 = vmul.f32 %v4201, %v4313
    %v4318 = vlaneseq
    %v4319 = vshrl.u32 %v4318, 7
    %v4320 = vsub.s32 7, %v4319
    %v4321 = vrot.slane %v3446, %v4320
    %4322 = vmatprep.subr.mxu0 0.0
    %4323 = vmatpush1.msra.mxu0 %v3440
    %4324 = vmatprep.subr.mxu0 0.0
    %4325 = vmatpush1.msra.mxu0 %v3439
    %4326 = vmatprep.subr.mxu0 0.0
    %4327 = vmatpush1.msra.mxu0 %v3438
    %4328 = vmatprep.subr.mxu0 0.0
    %4329 = vmatpush1.msra.mxu0 %v3437
    %4330 = vmatprep.subr.mxu0 0.0
    %4331 = vmatpush1.msra.mxu0 %v3436
    %4332 = vmatprep.subr.mxu0 0.0
    %4333 = vmatpush1.msra.mxu0 %v3435
    %4334 = vmatprep.subr.mxu0 0.0
    %4335 = vmatpush1.msra.mxu0 %v3434
    %4336 = vmatprep.subr.mxu0 0.0
    %4337 = vmatpush1.msra.mxu0 %v3433
    %4338 = vmatprep.subr.mxu0 0.0
    %4339 = vmatpush1.msra.mxu0 %v3432
    %4340 = vmatprep.subr.mxu0 0.0
    %4341 = vmatpush1.msra.mxu0 %v3431
    %4342 = vmatprep.subr.mxu0 0.0
    %4343 = vmatpush1.msra.mxu0 %v3430
    %4344 = vmatprep.subr.mxu0 0.0
    %4345 = vmatpush1.msra.mxu0 %v3429
    %4346 = vmatprep.subr.mxu0 0.0
    %4347 = vmatpush1.msra.mxu0 %v3428
    %4348 = vmatprep.subr.mxu0 0.0
    %4349 = vmatpush1.msra.mxu0 %v3427
    %4350 = vmatprep.subr.mxu0 0.0
    %4351 = vmatpush1.msra.mxu0 %v3426
    %4352 = vmatprep.subr.mxu0 0.0
    %4353 = vmatpush1.msra.mxu0 %v3425
    %4354 = vmatprep.subr.mxu0 0.0
    %4355 = vmatpush2.msra.mxu0 0.0
    %4356 = vmatprep.subr.mxu0 0.0
    %4357 = vmatpush2.msra.mxu0 0.0
    %4358 = vmatprep.subr.mxu0 0.0
    %4359 = vmatpush2.msra.mxu0 0.0
    %4360 = vmatprep.subr.mxu0 0.0
    %4361 = vmatpush2.msra.mxu0 0.0
    %4362 = vmatprep.subr.mxu0 0.0
    %4363 = vmatpush2.msra.mxu0 0.0
    %4364 = vmatprep.subr.mxu0 0.0
    %4365 = vmatpush2.msra.mxu0 0.0
    %4366 = vmatprep.subr.mxu0 0.0
    %4367 = vmatpush2.msra.mxu0 0.0
    %4368 = vmatprep.subr.mxu0 0.0
    %4369 = vmatpush2.msra.mxu0 0.0
    %4370 = vmatprep.subr.mxu0 0.0
    %4371 = vmatpush2.msra.mxu0 0.0
    %4372 = vmatprep.subr.mxu0 0.0
    %4373 = vmatpush2.msra.mxu0 0.0
    %4374 = vmatprep.subr.mxu0 0.0
    %4375 = vmatpush2.msra.mxu0 0.0
    %4376 = vmatprep.subr.mxu0 0.0
    %4377 = vmatpush2.msra.mxu0 0.0
    %4378 = vmatprep.subr.mxu0 0.0
    %4379 = vmatpush2.msra.mxu0 0.0
    %4380 = vmatprep.subr.mxu0 0.0
    %4381 = vmatpush2.msra.mxu0 0.0
    %4382 = vmatprep.subr.mxu0 0.0
    %4383 = vmatpush2.msra.mxu0 0.0
    %4384 = vmatprep.subr.mxu0 0.0
    %4385 = vmatpush2.msra.mxu0 0.0
    %4386 = vmatprep.mubr.f32.mxu0 0.0
    %4387 = vmatmul.mubr.f32.gmra.mxu0 %v4314
    %v4388 = vpop.f32.mrf.mxu0
    %v4389 = vadd.f32 %v4321, %v4388
    %v4390 = vpop.f32.mrf.mxu0
    %4391 = vmatprep.mubr.f32.mxu0 0.0
    %4392 = vmatmul.mubr.f32.gmra.mxu0 %v4315
    %v4393 = vpop.f32.mrf.mxu0
    %v4394 = vadd.f32 %v4321, %v4393
    %v4395 = vpop.f32.mrf.mxu0
    %4396 = vmatprep.mubr.f32.mxu0 0.0
    %4397 = vmatmul.mubr.f32.gmra.mxu0 %v4316
    %v4398 = vpop.f32.mrf.mxu0
    %v4399 = vadd.f32 %v4321, %v4398
    %v4400 = vpop.f32.mrf.mxu0
    %4401 = vmatprep.mubr.f32.mxu0 0.0
    %4402 = vmatmul.mubr.f32.gmra.mxu0 %v4317
    %v4403 = vpop.f32.mrf.mxu0
    %v4404 = vadd.f32 %v4321, %v4403
    %v4405 = vpop.f32.mrf.mxu0
    %4406 = vdwg.mxu0
    %v4407 = vadd.f32 %v4093, %v4389
    %v4408 = vadd.f32 %v4094, %v4394
    %v4409 = vadd.f32 %v4095, %v4399
    %v4410 = vadd.f32 %v4096, %v4404
    %v4411 = vsel %vm254, %v4407, 0.0
    %4412 = vadd.xlane.f32.xlu0 %v4411
    %v4413 = vpop.xlane.xlu0 %4412
    %v4414 = vsel %vm254, %v4408, 0.0
    %4415 = vadd.xlane.f32.xlu0 %v4414
    %v4416 = vpop.xlane.xlu0 %4415
    %v4417 = vsel %vm254, %v4409, 0.0
    %4418 = vadd.xlane.f32.xlu0 %v4417
    %v4419 = vpop.xlane.xlu0 %4418
    %v4420 = vsel %vm254, %v4410, 0.0
    %4421 = vadd.xlane.f32.xlu0 %v4420
    %v4422 = vpop.xlane.xlu0 %4421
    %v4423 = vmul.f32 %v4413, %v848
    %v4424 = vmul.f32 %v4416, %v848
    %v4425 = vmul.f32 %v4419, %v848
    %v4426 = vmul.f32 %v4422, %v848
    %v4427 = vsub.f32 %v4407, %v4423
    %v4428 = vsub.f32 %v4408, %v4424
    %v4429 = vsub.f32 %v4409, %v4425
    %v4430 = vsub.f32 %v4410, %v4426
    %v4431 = vmul.f32 %v4427, %v4427
    %v4432 = vmul.f32 %v4428, %v4428
    %v4433 = vmul.f32 %v4429, %v4429
    %v4434 = vmul.f32 %v4430, %v4430
    %v4435 = vsel %vm254, %v4431, 0.0
    %4436 = vadd.xlane.f32.xlu0 %v4435
    %v4437 = vpop.xlane.xlu0 %4436
    %v4438 = vsel %vm254, %v4432, 0.0
    %4439 = vadd.xlane.f32.xlu0 %v4438
    %v4440 = vpop.xlane.xlu0 %4439
    %v4441 = vsel %vm254, %v4433, 0.0
    %4442 = vadd.xlane.f32.xlu0 %v4441
    %v4443 = vpop.xlane.xlu0 %4442
    %v4444 = vsel %vm254, %v4434, 0.0
    %4445 = vadd.xlane.f32.xlu0 %v4444
    %v4446 = vpop.xlane.xlu0 %4445
    %v4447 = vmul.f32 %v4437, %v848
    %v4448 = vmul.f32 %v4440, %v848
    %v4449 = vmul.f32 %v4443, %v848
    %v4450 = vmul.f32 %v4446, %v848
    %v4451 = vadd.f32 %v4447, 1e-05
    %v4452 = vadd.f32 %v4448, 1e-05
    %v4453 = vadd.f32 %v4449, 1e-05
    %v4454 = vadd.f32 %v4450, 1e-05
    %v4455 = vrsqrt.pop %v4451
    %v4456 = vrsqrt.pop %v4452
    %v4457 = vrsqrt.pop %v4453
    %v4458 = vrsqrt.pop %v4454
    %v4459 = vmul.f32 %v4427, %v4455
    %v4460 = vmul.f32 %v4428, %v4456
    %v4461 = vmul.f32 %v4429, %v4457
    %v4462 = vmul.f32 %v4430, %v4458
    %v4463 = vlaneseq
    %v4464 = vshrl.u32 %v4463, 7
    %v4465 = vsub.s32 5, %v4464
    %v4466 = vrot.slane %v3446, %v4465
    %v4467 = vmul.f32 %v4459, %v4466
    %v4468 = vmul.f32 %v4460, %v4466
    %v4469 = vmul.f32 %v4461, %v4466
    %v4470 = vmul.f32 %v4462, %v4466
    %v4471 = vlaneseq
    %v4472 = vshrl.u32 %v4471, 7
    %v4473 = vsub.s32 6, %v4472
    %v4474 = vrot.slane %v3446, %v4473
    %v4475 = vadd.f32 %v4467, %v4474
    %v4476 = vadd.f32 %v4468, %v4474
    %v4477 = vadd.f32 %v4469, %v4474
    %v4478 = vadd.f32 %v4470, %v4474
    %v4479 = vld [vmem:[%s5] sm:$0xff]
    %v4480 = vld [vmem:[%s5 + $0x8] sm:$0xff]
    %v4481 = vld [vmem:[%s5 + $0x10] sm:$0xff]
    %v4482 = vld [vmem:[%s5 + $0x18] sm:$0xff]
    %v4483 = vld [vmem:[%s5 + $0x20] sm:$0xff]
    %v4485 = vsel %vm254, %v95, 0
    %4487 = vmatprep.subr.mxu0 0.0
    %4488 = vmatpush1.msra.mxu0 0.0
    %4489 = vmatprep.subr.mxu0 0.0
    %4490 = vmatpush1.msra.mxu0 0.0
    %4491 = vmatprep.subr.mxu0 0.0
    %4492 = vmatpush1.msra.mxu0 0.0
    %4493 = vmatprep.subr.mxu0 0.0
    %4494 = vmatpush1.msra.mxu0 0.0
    %4495 = vmatprep.subr.mxu0 0.0
    %4496 = vmatpush1.msra.mxu0 0.0
    %4497 = vmatprep.subr.mxu0 0.0
    %4498 = vmatpush1.msra.mxu0 0.0
    %4499 = vmatprep.subr.mxu0 0.0
    %4500 = vmatpush1.msra.mxu0 0.0
    %4501 = vmatprep.subr.mxu0 0.0
    %4502 = vmatpush1.msra.mxu0 0.0
    %4503 = vmatprep.subr.mxu0 0.0
    %4504 = vmatpush1.msra.mxu0 0.0
    %4505 = vmatprep.subr.mxu0 0.0
    %4506 = vmatpush1.msra.mxu0 0.0
    %4507 = vmatprep.subr.mxu0 0.0
    %4508 = vmatpush1.msra.mxu0 0.0
    %4509 = vmatprep.subr.mxu0 0.0
    %4510 = vmatpush1.msra.mxu0 0.0
    %4511 = vmatprep.subr.mxu0 0.0
    %4512 = vmatpush1.msra.mxu0 %v4478
    %4513 = vmatprep.subr.mxu0 0.0
    %4514 = vmatpush1.msra.mxu0 %v4477
    %4515 = vmatprep.subr.mxu0 0.0
    %4516 = vmatpush1.msra.mxu0 %v4476
    %4517 = vmatprep.subr.mxu0 0.0
    %4518 = vmatpush1.msra.mxu0 %v4475
    %4519 = vmatprep.subr.mxu0 0.0
    %4520 = vmatpush2.msra.mxu0 0.0
    %4521 = vmatprep.subr.mxu0 0.0
    %4522 = vmatpush2.msra.mxu0 0.0
    %4523 = vmatprep.subr.mxu0 0.0
    %4524 = vmatpush2.msra.mxu0 0.0
    %4525 = vmatprep.subr.mxu0 0.0
    %4526 = vmatpush2.msra.mxu0 0.0
    %4527 = vmatprep.subr.mxu0 0.0
    %4528 = vmatpush2.msra.mxu0 0.0
    %4529 = vmatprep.subr.mxu0 0.0
    %4530 = vmatpush2.msra.mxu0 0.0
    %4531 = vmatprep.subr.mxu0 0.0
    %4532 = vmatpush2.msra.mxu0 0.0
    %4533 = vmatprep.subr.mxu0 0.0
    %4534 = vmatpush2.msra.mxu0 0.0
    %4535 = vmatprep.subr.mxu0 0.0
    %4536 = vmatpush2.msra.mxu0 0.0
    %4537 = vmatprep.subr.mxu0 0.0
    %4538 = vmatpush2.msra.mxu0 0.0
    %4539 = vmatprep.subr.mxu0 0.0
    %4540 = vmatpush2.msra.mxu0 0.0
    %4541 = vmatprep.subr.mxu0 0.0
    %4542 = vmatpush2.msra.mxu0 0.0
    %4543 = vmatprep.subr.mxu0 0.0
    %4544 = vmatpush2.msra.mxu0 0.0
    %4545 = vmatprep.subr.mxu0 0.0
    %4546 = vmatpush2.msra.mxu0 0.0
    %4547 = vmatprep.subr.mxu0 0.0
    %4548 = vmatpush2.msra.mxu0 0.0
    %4549 = vmatprep.subr.mxu0 0.0
    %4550 = vmatpush2.msra.mxu0 0.0
    %4551 = vmatprep.mubr.f32.mxu0 0.0
    %4552 = vmatmul.mubr.f32.gmra.mxu0 %v4485
    %v4553 = vpop.f32.mrf.mxu0
    %v4554 = vadd.f32 0.0, %v4553
    %v4555 = vpop.f32.mrf.mxu0
    %4556 = vdwg.mxu0
    %vm4557 = vcmask 254976
    %v4558 = vsel %vm4557, %v4554, 0.0
    %4559 = vadd.xlane.f32.xlu0 %v4558
    %v4560 = vpop.xlane.xlu0 %4559
    %v4561 = vmul.f32 %v4560, %v848
    %v4562 = vsub.f32 %v4554, %v4561
    %v4563 = vmul.f32 %v4562, %v4562
    %v4564 = vsel %vm4557, %v4563, 0.0
    %4565 = vadd.xlane.f32.xlu0 %v4564
    %v4566 = vpop.xlane.xlu0 %4565
    %v4567 = vmul.f32 %v4566, %v848
    %v4568 = vadd.f32 %v4567, 1e-05
    %v4569 = vrsqrt.pop %v4568
    %v4570 = vmul.f32 %v4562, %v4569
    %v4571 = vlaneseq
    %v4572 = vshrl.u32 %v4571, 7
    %v4573 = vsub.s32 1, %v4572
    %v4574 = vrot.slane %v4483, %v4573
    %v4575 = vmul.f32 %v4570, %v4574
    %v4576 = vlaneseq
    %v4577 = vshrl.u32 %v4576, 7
    %v4578 = vsub.s32 2, %v4577
    %v4579 = vrot.slane %v4483, %v4578
    %v4580 = vadd.f32 %v4575, %v4579
    %v4581 = vlaneseq
    %v4582 = vshrl.u32 %v4581, 7
    %v4583 = vsub.s32 0, %v4582
    %v4584 = vrot.slane %v4483, %v4583
    %v4586 = vsel %vm254, %v4580, 0
    %4588 = vmatprep.subr.mxu0 0.0
    %4589 = vmatpush1.msra.mxu0 0.0
    %4590 = vmatprep.subr.mxu0 0.0
    %4591 = vmatpush1.msra.mxu0 0.0
    %4592 = vmatprep.subr.mxu0 0.0
    %4593 = vmatpush1.msra.mxu0 0.0
    %4594 = vmatprep.subr.mxu0 0.0
    %4595 = vmatpush1.msra.mxu0 0.0
    %4596 = vmatprep.subr.mxu0 0.0
    %4597 = vmatpush1.msra.mxu0 0.0
    %4598 = vmatprep.subr.mxu0 0.0
    %4599 = vmatpush1.msra.mxu0 0.0
    %4600 = vmatprep.subr.mxu0 0.0
    %4601 = vmatpush1.msra.mxu0 0.0
    %4602 = vmatprep.subr.mxu0 0.0
    %4603 = vmatpush1.msra.mxu0 0.0
    %4604 = vmatprep.subr.mxu0 0.0
    %4605 = vmatpush1.msra.mxu0 0.0
    %4606 = vmatprep.subr.mxu0 0.0
    %4607 = vmatpush1.msra.mxu0 0.0
    %4608 = vmatprep.subr.mxu0 0.0
    %4609 = vmatpush1.msra.mxu0 0.0
    %4610 = vmatprep.subr.mxu0 0.0
    %4611 = vmatpush1.msra.mxu0 0.0
    %4612 = vmatprep.subr.mxu0 0.0
    %4613 = vmatpush1.msra.mxu0 %v4482
    %4614 = vmatprep.subr.mxu0 0.0
    %4615 = vmatpush1.msra.mxu0 %v4481
    %4616 = vmatprep.subr.mxu0 0.0
    %4617 = vmatpush1.msra.mxu0 %v4480
    %4618 = vmatprep.subr.mxu0 0.0
    %4619 = vmatpush1.msra.mxu0 %v4479
    %4620 = vmatprep.subr.mxu0 0.0
    %4621 = vmatpush2.msra.mxu0 0.0
    %4622 = vmatprep.subr.mxu0 0.0
    %4623 = vmatpush2.msra.mxu0 0.0
    %4624 = vmatprep.subr.mxu0 0.0
    %4625 = vmatpush2.msra.mxu0 0.0
    %4626 = vmatprep.subr.mxu0 0.0
    %4627 = vmatpush2.msra.mxu0 0.0
    %4628 = vmatprep.subr.mxu0 0.0
    %4629 = vmatpush2.msra.mxu0 0.0
    %4630 = vmatprep.subr.mxu0 0.0
    %4631 = vmatpush2.msra.mxu0 0.0
    %4632 = vmatprep.subr.mxu0 0.0
    %4633 = vmatpush2.msra.mxu0 0.0
    %4634 = vmatprep.subr.mxu0 0.0
    %4635 = vmatpush2.msra.mxu0 0.0
    %4636 = vmatprep.subr.mxu0 0.0
    %4637 = vmatpush2.msra.mxu0 0.0
    %4638 = vmatprep.subr.mxu0 0.0
    %4639 = vmatpush2.msra.mxu0 0.0
    %4640 = vmatprep.subr.mxu0 0.0
    %4641 = vmatpush2.msra.mxu0 0.0
    %4642 = vmatprep.subr.mxu0 0.0
    %4643 = vmatpush2.msra.mxu0 0.0
    %4644 = vmatprep.subr.mxu0 0.0
    %4645 = vmatpush2.msra.mxu0 0.0
    %4646 = vmatprep.subr.mxu0 0.0
    %4647 = vmatpush2.msra.mxu0 0.0
    %4648 = vmatprep.subr.mxu0 0.0
    %4649 = vmatpush2.msra.mxu0 0.0
    %4650 = vmatprep.subr.mxu0 0.0
    %4651 = vmatpush2.msra.mxu0 0.0
    %4652 = vmatprep.mubr.f32.mxu0 0.0
    %4653 = vmatmul.mubr.f32.gmra.mxu0 %v4586
    %v4654 = vpop.f32.mrf.mxu0
    %v4655 = vadd.f32 %v4584, %v4654
    %v4656 = vpop.f32.mrf.mxu0
    %4657 = vdwg.mxu0
    %vm4658 = vcmask 9216
    %4659 = vst.msk [vmem:[#allocation2] sm:$0x3] %vm4658, %v4655
    // Predicated region
    $region26: #{cvt_forward.1} parent=1 // pred_check
      _
    $region27: #{cvt_forward.1} parent=1 // pred_check_branch
      %4661 = sbr.rel (0) target = $region29
    $region28: #{cvt_forward.1} parent=1 // pred_region
      %s4663 = ssub.s32 32, 32
      %4664 = vsyncadd [#allocation3], %s4663
      %s4666 = sshll.u32 [#allocation2], 4
      %s4667 = int_to_ptr.vmem [resolvable:$true] %s4666
      %4669 = dma.vmem_to_hbm [thread:$0]  %s4667, 32, %s6, [#allocation3]
    $region29: #{cvt_forward.1} parent=1 // pred_fallthru
      _
    // Predicated region
    $region30: #{cvt_forward.1} parent=1 // pred_check
      _
    $region31: #{cvt_forward.1} parent=1 // pred_check_branch
      %4671 = sbr.rel (0) target = $region33
    $region32: #{cvt_forward.1} parent=1 // pred_region
      %4672 = dma.done [#allocation3], 32
    $region33: #{cvt_forward.1} parent=1 // pred_fallthru
      _
    %4673 = vsyncpa [#allocation3], 1

</llo_original>
